<compile_context>
chip_gen: v6e
topology: v6e:2x2x1
jax: 0.10.0
libtpu: 0.0.40
codegen_flags: <defaults>
</compile_context>

<pallas_src>
import functools

import jax
import jax.numpy as jnp
from jax.experimental import pallas as pl
from jax.experimental.pallas import tpu as pltpu


def _round_up(x, m):
    return ((x + m - 1) // m) * m


def _num_batch_tiles(batch):
    """1 tile on single-TensorCore chips (v5e/v6e); 2 parallel tiles on v7x (2 TCs)."""
    try:
        kind = jax.devices()[0].device_kind.lower()
    except Exception:
        kind = ""
    if batch > 8 and ("v7" in kind or "7x" in kind):
        return 2
    return 1


def lstm_model_kernel(x_ref, w1_ref, b1_ref,
                      wih0_ref, whh0_ref, bg0_ref,
                      wih1_ref, whh1_ref, bg1_ref,
                      w2_ref, b2_ref,
                      out_ref):
    # x_ref: (1, I, T*BB) -- batch on lanes, lane index = t*BB + b within this batch tile.
    x = x_ref[0]                                   # (I, T*BB) f32
    I, TB = x.shape
    H = whh0_ref.shape[1]
    BB = out_ref.shape[-1]
    T = TB // BB

    # ---------- hoisted, non-recurrent work (off the serial chain) ----------
    if I == 1:
        # linear_1 with input_size==1 is a rank-1 outer product -> VPU broadcast multiply.
        x1 = jnp.maximum(w1_ref[...] * x + b1_ref[...], 0.0)                  # (H, T*BB)
    else:
        x1 = jnp.maximum(
            jnp.dot(w1_ref[...].astype(jnp.bfloat16), x.astype(jnp.bfloat16),
                    preferred_element_type=jnp.float32) + b1_ref[...], 0.0)

    # layer-0 input projection for ALL timesteps: one lane-dense MXU GEMM.
    xg0 = jnp.dot(wih0_ref[...], x1.astype(jnp.bfloat16),
                  preferred_element_type=jnp.float32) + bg0_ref[...]          # (4H, T*BB)

    whh0 = whh0_ref[...]          # (4H, H) bf16
    wih1 = wih1_ref[...]          # (4H, H) bf16
    whh1 = whh1_ref[...]          # (4H, H) bf16
    bg1 = bg1_ref[...]            # (4H, 1) f32

    def gate_combine(g, c):
        # Gates live on sublanes: rows [i | f | g | o], each H rows (multiple of 8).
        # sigmoid only on i/f/o, tanh on g -- no EUP work wasted on the g quarter.
        s_if = jax.nn.sigmoid(g[0:2 * H, :])
        i = s_if[0:H, :]
        f = s_if[H:2 * H, :]
        gg = jnp.tanh(g[2 * H:3 * H, :])
        o = jax.nn.sigmoid(g[3 * H:4 * H, :])
        c_new = f * c + i * gg
        h_new = o * jnp.tanh(c_new)
        return h_new, c_new

    z = jnp.zeros((H, BB), jnp.float32)
    h0, c0, h1, c1 = z, z, z, z

    # ---------- serial recurrence: fully unrolled (T static & small) --------
    # TODO(synk): for T >~ 32 switch to lax.fori_loop(..., unroll=4..8) over a VMEM
    # scratch holding xg0 (sliced with pl.ds(pl.multiple_of(t*BB, BB), BB)) to bound
    # code size / register pressure; also keep xg0 in bf16 or tile T when T*BB grows.
    for t in range(T):
        # layer 0: only the hidden-state matmul remains on the critical path.
        g0 = xg0[:, t * BB:(t + 1) * BB] + jnp.dot(
            whh0, h0.astype(jnp.bfloat16), preferred_element_type=jnp.float32)
        h0, c0 = gate_combine(g0, c0)

        # layer 1: two back-to-back MXU matmuls (no per-step concat on the chain).
        g1 = (jnp.dot(wih1, h0.astype(jnp.bfloat16), preferred_element_type=jnp.float32)
              + jnp.dot(whh1, h1.astype(jnp.bfloat16), preferred_element_type=jnp.float32)
              + bg1)
        h1, c1 = gate_combine(g1, c1)

    # h_n.permute(1,0,2).reshape(B,-1) == concat([h_layer0, h_layer1]) along features;
    # dropout is identity in eval; linear_2 then [:, -1] only needs the last row of w2.
    hcat = jnp.concatenate([h0, h1], axis=0)                                  # (2H, BB)
    pred = jnp.sum(hcat * w2_ref[...], axis=0, keepdims=True) + b2_ref[...]   # (1, BB)
    out_ref[...] = pred.reshape(1, 1, BB)


def prepare_params(p):
    """One-time weight reshapes / casts (gates-on-sublanes orientation). Do NOT redo per call."""
    H = p["b1"].shape[0]
    return {
        "w1": jnp.asarray(p["w1"], jnp.float32),                              # (H, I)
        "b1": jnp.asarray(p["b1"], jnp.float32).reshape(H, 1),
        "wih0": jnp.asarray(p["wih0"], jnp.bfloat16),                         # (4H, H)
        "whh0": jnp.asarray(p["whh0"], jnp.bfloat16),                         # (4H, H)
        "bg0": jnp.asarray(p["bih0"] + p["bhh0"], jnp.float32).reshape(4 * H, 1),
        "wih1": jnp.asarray(p["wih1"], jnp.bfloat16),                         # (4H, H)
        "whh1": jnp.asarray(p["whh1"], jnp.bfloat16),                         # (4H, H)
        "bg1": jnp.asarray(p["bih1"] + p["bhh1"], jnp.float32).reshape(4 * H, 1),
        # forward() returns predictions[:, -1]: only the last linear_2 output unit matters.
        "w2_last": jnp.asarray(p["w2"][-1], jnp.float32).reshape(2 * H, 1),
        "b2_last": jnp.asarray(p["b2"][-1], jnp.float32).reshape(1, 1),
    }


@functools.partial(jax.jit, static_argnames=("num_tiles",))
def _lstm_forward_impl(x, prep, num_tiles):
    B, T, I = x.shape
    nt = num_tiles
    BB = _round_up(pl.cdiv(B, nt), 8)          # batch tile, sublane-rounded
    Bp = nt * BB

    # (B,T,I) -> (nt, I, T*BB) with lane index t*BB + b (batch on lanes). Glue outside kernel.
    xp = jnp.pad(x.astype(jnp.float32), ((0, Bp - B), (0, 0), (0, 0)))        # (Bp, T, I)
    x_lanes = xp.reshape(nt, BB, T, I).transpose(0, 3, 2, 1).reshape(nt, I, T * BB)

    full = lambda a: pl.BlockSpec(a.shape, lambda b, n=a.ndim: (0,) * n)
    weights = (prep["w1"], prep["b1"], prep["wih0"], prep["whh0"], prep["bg0"],
               prep["wih1"], prep["whh1"], prep["bg1"], prep["w2_last"], prep["b2_last"])
    in_specs = ([pl.BlockSpec((1, I, T * BB), lambda b: (b, 0, 0))]
                + [full(a) for a in weights])

    out = pl.pallas_call(
        lstm_model_kernel,
        out_shape=jax.ShapeDtypeStruct((nt, 1, BB), jnp.float32),
        grid=(nt,),
        in_specs=in_specs,
        out_specs=pl.BlockSpec((1, 1, BB), lambda b: (b, 0, 0)),
        compiler_params=pltpu.CompilerParams(
            dimension_semantics=("parallel",),
            vmem_limit_bytes=48 * 1024 * 1024,
        ),
    )(x_lanes, *weights)
    return out.reshape(Bp)[:B]


def lstm_model_forward(x, prep):
    """x: (B, T, I) float32.  Returns predictions[:, -1] of shape (B,)."""
    return _lstm_forward_impl(x, prep, num_tiles=_num_batch_tiles(x.shape[0]))


def init_params(key, input_size=1, hidden=32, num_layers=2, output_size=1):
    H = hidden
    ks = jax.random.split(key, 8)
    return {
        # linear_1
        "w1": jax.random.normal(ks[0], (H, input_size), jnp.float32) * 0.5,
        "b1": jax.random.normal(ks[1], (H,), jnp.float32) * 0.1,
        # LSTM layer 0 (biases = 0 per init_weights)
        "wih0": jax.random.normal(ks[2], (4 * H, H), jnp.float32) * (2.0 / H) ** 0.5,
        "whh0": jax.random.normal(ks[3], (4 * H, H), jnp.float32) * (1.0 / H) ** 0.5,
        "bih0": jnp.zeros((4 * H,), jnp.float32),
        "bhh0": jnp.zeros((4 * H,), jnp.float32),
        # LSTM layer 1
        "wih1": jax.random.normal(ks[4], (4 * H, H), jnp.float32) * (2.0 / H) ** 0.5,
        "whh1": jax.random.normal(ks[5], (4 * H, H), jnp.float32) * (1.0 / H) ** 0.5,
        "bih1": jnp.zeros((4 * H,), jnp.float32),
        "bhh1": jnp.zeros((4 * H,), jnp.float32),
        # linear_2
        "w2": jax.random.normal(ks[6], (output_size, num_layers * H), jnp.float32) * 0.1,
        "b2": jnp.zeros((output_size,), jnp.float32),
    }


def reference_forward(x, p):
    """Pure-JAX f32 reference mirroring the PyTorch forward (eval mode)."""
    B, T, _ = x.shape
    H = p["b1"].shape[0]
    x1 = jax.nn.relu(jnp.einsum("bti,hi->bth", x, p["w1"]) + p["b1"])

    def cell(x_t, h, c, wih, whh, bih, bhh):
        g = x_t @ wih.T + h @ whh.T + bih + bhh
        i, f, gg, o = jnp.split(g, 4, axis=-1)
        c = jax.nn.sigmoid(f) * c + jax.nn.sigmoid(i) * jnp.tanh(gg)
        h = jax.nn.sigmoid(o) * jnp.tanh(c)
        return h, c

    h0 = c0 = h1 = c1 = jnp.zeros((B, H), jnp.float32)
    for t in range(T):
        h0, c0 = cell(x1[:, t], h0, c0, p["wih0"], p["whh0"], p["bih0"], p["bhh0"])
        h1, c1 = cell(h0, h1, c1, p["wih1"], p["whh1"], p["bih1"], p["bhh1"])
    hcat = jnp.concatenate([h0, h1], axis=-1)
    pred = hcat @ p["w2"].T + p["b2"]
    return pred[:, -1]


if __name__ == "__main__":
    key = jax.random.PRNGKey(0)
    kx, kp = jax.random.split(key)
    B, T, I, H = 16, 8, 1, 32
    x = jax.random.normal(kx, (B, T, I), jnp.float32)
    params = init_params(kp, input_size=I, hidden=H)
    prep = prepare_params(params)

    out = jax.block_until_ready(lstm_model_forward(x, prep))
    ref = reference_forward(x, params)
    assert out.shape == (B,), out.shape
    # bf16 matmul inputs (f32 accumulation) -> slightly looser tolerance than pure f32
    assert jnp.allclose(out, ref, atol=2e-2, rtol=2e-2), (out, ref)
    print("KERNEL_OK")
</pallas_src>

<mosaic_0001>
module attributes {stable_mosaic.version = 11 : i64} {
  func.func @lstm_model_kernel(%arg0: i32, %arg1: memref<1x1x128xf32, #tpu.memory_space<vmem>>, %arg2: memref<32x1xf32, #tpu.memory_space<vmem>>, %arg3: memref<32x1xf32, #tpu.memory_space<vmem>>, %arg4: memref<128x32xbf16, #tpu.memory_space<vmem>>, %arg5: memref<128x32xbf16, #tpu.memory_space<vmem>>, %arg6: memref<128x1xf32, #tpu.memory_space<vmem>>, %arg7: memref<128x32xbf16, #tpu.memory_space<vmem>>, %arg8: memref<128x32xbf16, #tpu.memory_space<vmem>>, %arg9: memref<128x1xf32, #tpu.memory_space<vmem>>, %arg10: memref<64x1xf32, #tpu.memory_space<vmem>>, %arg11: memref<1x1xf32, #tpu.memory_space<vmem>>, %arg12: memref<1x1x16xf32, #tpu.memory_space<vmem>>) attributes {dimension_semantics = [#tpu.dimension_semantics<parallel>], iteration_bounds = array<i64: 1>, scalar_prefetch = 0 : i64, scratch_operands = 0 : i64, tpu.core_type = #tpu.core_type<tc>, window_params = [{transform_indices = @transform_0, window_bounds = array<i64: 1, 1, 128>}, {pipeline_mode = #tpu.pipeline_mode<synchronous>, transform_indices = @transform_1, window_bounds = array<i64: 32, 1>}, {pipeline_mode = #tpu.pipeline_mode<synchronous>, transform_indices = @transform_2, window_bounds = array<i64: 32, 1>}, {pipeline_mode = #tpu.pipeline_mode<synchronous>, transform_indices = @transform_3, window_bounds = array<i64: 128, 32>}, {pipeline_mode = #tpu.pipeline_mode<synchronous>, transform_indices = @transform_4, window_bounds = array<i64: 128, 32>}, {pipeline_mode = #tpu.pipeline_mode<synchronous>, transform_indices = @transform_5, window_bounds = array<i64: 128, 1>}, {pipeline_mode = #tpu.pipeline_mode<synchronous>, transform_indices = @transform_6, window_bounds = array<i64: 128, 32>}, {pipeline_mode = #tpu.pipeline_mode<synchronous>, transform_indices = @transform_7, window_bounds = array<i64: 128, 32>}, {pipeline_mode = #tpu.pipeline_mode<synchronous>, transform_indices = @transform_8, window_bounds = array<i64: 128, 1>}, {pipeline_mode = #tpu.pipeline_mode<synchronous>, transform_indices = @transform_9, window_bounds = array<i64: 64, 1>}, {pipeline_mode = #tpu.pipeline_mode<synchronous>, transform_indices = @transform_10, window_bounds = array<i64: 1, 1>}, {transform_indices = @transform_11, window_bounds = array<i64: 1, 1, 16>}]} {
    %c0 = arith.constant 0 : index
    %c0_0 = arith.constant 0 : index
    %c0_1 = arith.constant 0 : index
    %0 = vector.load %arg1[%c0, %c0_0, %c0_1] : memref<1x1x128xf32, #tpu.memory_space<vmem>>, vector<1x1x128xf32>
    %1 = vector.shape_cast %0 : vector<1x1x128xf32> to vector<1x128xf32>
    %c0_2 = arith.constant 0 : index
    %c0_3 = arith.constant 0 : index
    %2 = vector.load %arg2[%c0_2, %c0_3] : memref<32x1xf32, #tpu.memory_space<vmem>>, vector<32x1xf32>
    %3 = vector.broadcast %2 : vector<32x1xf32> to vector<32x128xf32>
    %4 = vector.broadcast %1 : vector<1x128xf32> to vector<32x128xf32>
    %5 = arith.mulf %3, %4 : vector<32x128xf32>
    %c0_4 = arith.constant 0 : index
    %c0_5 = arith.constant 0 : index
    %6 = vector.load %arg3[%c0_4, %c0_5] : memref<32x1xf32, #tpu.memory_space<vmem>>, vector<32x1xf32>
    %7 = vector.broadcast %6 : vector<32x1xf32> to vector<32x128xf32>
    %8 = arith.addf %5, %7 : vector<32x128xf32>
    %cst = arith.constant 0.000000e+00 : f32
    %9 = vector.broadcast %cst : f32 to vector<32x128xf32>
    %10 = arith.maximumf %8, %9 : vector<32x128xf32>
    %c0_6 = arith.constant 0 : index
    %c0_7 = arith.constant 0 : index
    %11 = vector.load %arg4[%c0_6, %c0_7] : memref<128x32xbf16, #tpu.memory_space<vmem>>, vector<128x32xbf16>
    %12 = arith.truncf %10 : vector<32x128xf32> to vector<32x128xbf16>
    %cst_8 = arith.constant dense<0.000000e+00> : vector<128x128xf32>
    %13 = tpu.matmul %11, %12, %cst_8 {dimension_numbers = #tpu.dot_dimension_numbers<[1], [0], [0], [1], [0, 0, 1, 1], [], []>} : vector<128x32xbf16>, vector<32x128xbf16>, vector<128x128xf32> -> vector<128x128xf32>
    %c0_9 = arith.constant 0 : index
    %c0_10 = arith.constant 0 : index
    %14 = vector.load %arg6[%c0_9, %c0_10] : memref<128x1xf32, #tpu.memory_space<vmem>>, vector<128x1xf32>
    %15 = vector.broadcast %14 : vector<128x1xf32> to vector<128x128xf32>
    %16 = arith.addf %13, %15 : vector<128x128xf32>
    %c0_11 = arith.constant 0 : index
    %c0_12 = arith.constant 0 : index
    %17 = vector.load %arg5[%c0_11, %c0_12] : memref<128x32xbf16, #tpu.memory_space<vmem>>, vector<128x32xbf16>
    %c0_13 = arith.constant 0 : index
    %c0_14 = arith.constant 0 : index
    %18 = vector.load %arg7[%c0_13, %c0_14] : memref<128x32xbf16, #tpu.memory_space<vmem>>, vector<128x32xbf16>
    %c0_15 = arith.constant 0 : index
    %c0_16 = arith.constant 0 : index
    %19 = vector.load %arg8[%c0_15, %c0_16] : memref<128x32xbf16, #tpu.memory_space<vmem>>, vector<128x32xbf16>
    %c0_17 = arith.constant 0 : index
    %c0_18 = arith.constant 0 : index
    %20 = vector.load %arg9[%c0_17, %c0_18] : memref<128x1xf32, #tpu.memory_space<vmem>>, vector<128x1xf32>
    %cst_19 = arith.constant 0.000000e+00 : f32
    %21 = vector.broadcast %cst_19 : f32 to vector<32x16xf32>
    %22 = vector.extract_strided_slice %16 {offsets = [0, 0], sizes = [128, 16], strides = [1, 1]} : vector<128x128xf32> to vector<128x16xf32>
    %23 = arith.truncf %21 : vector<32x16xf32> to vector<32x16xbf16>
    %cst_20 = arith.constant dense<0.000000e+00> : vector<128x16xf32>
    %24 = tpu.matmul %17, %23, %cst_20 {dimension_numbers = #tpu.dot_dimension_numbers<[1], [0], [0], [1], [0, 0, 1, 1], [], []>} : vector<128x32xbf16>, vector<32x16xbf16>, vector<128x16xf32> -> vector<128x16xf32>
    %25 = arith.addf %22, %24 : vector<128x16xf32>
    %26 = vector.extract_strided_slice %25 {offsets = [0, 0], sizes = [64, 16], strides = [1, 1]} : vector<128x16xf32> to vector<64x16xf32>
    %27 = arith.negf %26 : vector<64x16xf32>
    %28 = math.exp %27 : vector<64x16xf32>
    %cst_21 = arith.constant 1.000000e+00 : f32
    %29 = vector.broadcast %cst_21 : f32 to vector<64x16xf32>
    %30 = arith.addf %29, %28 : vector<64x16xf32>
    %31 = arith.divf %29, %30 : vector<64x16xf32>
    %32 = vector.extract_strided_slice %31 {offsets = [0, 0], sizes = [32, 16], strides = [1, 1]} : vector<64x16xf32> to vector<32x16xf32>
    %33 = vector.extract_strided_slice %31 {offsets = [32, 0], sizes = [32, 16], strides = [1, 1]} : vector<64x16xf32> to vector<32x16xf32>
    %34 = vector.extract_strided_slice %25 {offsets = [64, 0], sizes = [32, 16], strides = [1, 1]} : vector<128x16xf32> to vector<32x16xf32>
    %35 = math.tanh %34 : vector<32x16xf32>
    %36 = vector.extract_strided_slice %25 {offsets = [96, 0], sizes = [32, 16], strides = [1, 1]} : vector<128x16xf32> to vector<32x16xf32>
    %37 = arith.negf %36 : vector<32x16xf32>
    %38 = math.exp %37 : vector<32x16xf32>
    %cst_22 = arith.constant 1.000000e+00 : f32
    %39 = vector.broadcast %cst_22 : f32 to vector<32x16xf32>
    %40 = arith.addf %39, %38 : vector<32x16xf32>
    %41 = arith.divf %39, %40 : vector<32x16xf32>
    %42 = arith.mulf %33, %21 : vector<32x16xf32>
    %43 = arith.mulf %32, %35 : vector<32x16xf32>
    %44 = arith.addf %42, %43 : vector<32x16xf32>
    %45 = math.tanh %44 : vector<32x16xf32>
    %46 = arith.mulf %41, %45 : vector<32x16xf32>
    %47 = arith.truncf %46 : vector<32x16xf32> to vector<32x16xbf16>
    %cst_23 = arith.constant dense<0.000000e+00> : vector<128x16xf32>
    %48 = tpu.matmul %18, %47, %cst_23 {dimension_numbers = #tpu.dot_dimension_numbers<[1], [0], [0], [1], [0, 0, 1, 1], [], []>} : vector<128x32xbf16>, vector<32x16xbf16>, vector<128x16xf32> -> vector<128x16xf32>
    %49 = arith.truncf %21 : vector<32x16xf32> to vector<32x16xbf16>
    %cst_24 = arith.constant dense<0.000000e+00> : vector<128x16xf32>
    %50 = tpu.matmul %19, %49, %cst_24 {dimension_numbers = #tpu.dot_dimension_numbers<[1], [0], [0], [1], [0, 0, 1, 1], [], []>} : vector<128x32xbf16>, vector<32x16xbf16>, vector<128x16xf32> -> vector<128x16xf32>
    %51 = arith.addf %48, %50 : vector<128x16xf32>
    %52 = vector.broadcast %20 : vector<128x1xf32> to vector<128x16xf32>
    %53 = arith.addf %51, %52 : vector<128x16xf32>
    %54 = vector.extract_strided_slice %53 {offsets = [0, 0], sizes = [64, 16], strides = [1, 1]} : vector<128x16xf32> to vector<64x16xf32>
    %55 = arith.negf %54 : vector<64x16xf32>
    %56 = math.exp %55 : vector<64x16xf32>
    %cst_25 = arith.constant 1.000000e+00 : f32
    %57 = vector.broadcast %cst_25 : f32 to vector<64x16xf32>
    %58 = arith.addf %57, %56 : vector<64x16xf32>
    %59 = arith.divf %57, %58 : vector<64x16xf32>
    %60 = vector.extract_strided_slice %59 {offsets = [0, 0], sizes = [32, 16], strides = [1, 1]} : vector<64x16xf32> to vector<32x16xf32>
    %61 = vector.extract_strided_slice %59 {offsets = [32, 0], sizes = [32, 16], strides = [1, 1]} : vector<64x16xf32> to vector<32x16xf32>
    %62 = vector.extract_strided_slice %53 {offsets = [64, 0], sizes = [32, 16], strides = [1, 1]} : vector<128x16xf32> to vector<32x16xf32>
    %63 = math.tanh %62 : vector<32x16xf32>
    %64 = vector.extract_strided_slice %53 {offsets = [96, 0], sizes = [32, 16], strides = [1, 1]} : vector<128x16xf32> to vector<32x16xf32>
    %65 = arith.negf %64 : vector<32x16xf32>
    %66 = math.exp %65 : vector<32x16xf32>
    %cst_26 = arith.constant 1.000000e+00 : f32
    %67 = vector.broadcast %cst_26 : f32 to vector<32x16xf32>
    %68 = arith.addf %67, %66 : vector<32x16xf32>
    %69 = arith.divf %67, %68 : vector<32x16xf32>
    %70 = arith.mulf %61, %21 : vector<32x16xf32>
    %71 = arith.mulf %60, %63 : vector<32x16xf32>
    %72 = arith.addf %70, %71 : vector<32x16xf32>
    %73 = math.tanh %72 : vector<32x16xf32>
    %74 = arith.mulf %69, %73 : vector<32x16xf32>
    %75 = vector.extract_strided_slice %16 {offsets = [0, 16], sizes = [128, 16], strides = [1, 1]} : vector<128x128xf32> to vector<128x16xf32>
    %76 = arith.truncf %46 : vector<32x16xf32> to vector<32x16xbf16>
    %cst_27 = arith.constant dense<0.000000e+00> : vector<128x16xf32>
    %77 = tpu.matmul %17, %76, %cst_27 {dimension_numbers = #tpu.dot_dimension_numbers<[1], [0], [0], [1], [0, 0, 1, 1], [], []>} : vector<128x32xbf16>, vector<32x16xbf16>, vector<128x16xf32> -> vector<128x16xf32>
    %78 = arith.addf %75, %77 : vector<128x16xf32>
    %79 = vector.extract_strided_slice %78 {offsets = [0, 0], sizes = [64, 16], strides = [1, 1]} : vector<128x16xf32> to vector<64x16xf32>
    %80 = arith.negf %79 : vector<64x16xf32>
    %81 = math.exp %80 : vector<64x16xf32>
    %cst_28 = arith.constant 1.000000e+00 : f32
    %82 = vector.broadcast %cst_28 : f32 to vector<64x16xf32>
    %83 = arith.addf %82, %81 : vector<64x16xf32>
    %84 = arith.divf %82, %83 : vector<64x16xf32>
    %85 = vector.extract_strided_slice %84 {offsets = [0, 0], sizes = [32, 16], strides = [1, 1]} : vector<64x16xf32> to vector<32x16xf32>
    %86 = vector.extract_strided_slice %84 {offsets = [32, 0], sizes = [32, 16], strides = [1, 1]} : vector<64x16xf32> to vector<32x16xf32>
    %87 = vector.extract_strided_slice %78 {offsets = [64, 0], sizes = [32, 16], strides = [1, 1]} : vector<128x16xf32> to vector<32x16xf32>
    %88 = math.tanh %87 : vector<32x16xf32>
    %89 = vector.extract_strided_slice %78 {offsets = [96, 0], sizes = [32, 16], strides = [1, 1]} : vector<128x16xf32> to vector<32x16xf32>
    %90 = arith.negf %89 : vector<32x16xf32>
    %91 = math.exp %90 : vector<32x16xf32>
    %cst_29 = arith.constant 1.000000e+00 : f32
    %92 = vector.broadcast %cst_29 : f32 to vector<32x16xf32>
    %93 = arith.addf %92, %91 : vector<32x16xf32>
    %94 = arith.divf %92, %93 : vector<32x16xf32>
    %95 = arith.mulf %86, %44 : vector<32x16xf32>
    %96 = arith.mulf %85, %88 : vector<32x16xf32>
    %97 = arith.addf %95, %96 : vector<32x16xf32>
    %98 = math.tanh %97 : vector<32x16xf32>
    %99 = arith.mulf %94, %98 : vector<32x16xf32>
    %100 = arith.truncf %99 : vector<32x16xf32> to vector<32x16xbf16>
    %cst_30 = arith.constant dense<0.000000e+00> : vector<128x16xf32>
    %101 = tpu.matmul %18, %100, %cst_30 {dimension_numbers = #tpu.dot_dimension_numbers<[1], [0], [0], [1], [0, 0, 1, 1], [], []>} : vector<128x32xbf16>, vector<32x16xbf16>, vector<128x16xf32> -> vector<128x16xf32>
    %102 = arith.truncf %74 : vector<32x16xf32> to vector<32x16xbf16>
    %cst_31 = arith.constant dense<0.000000e+00> : vector<128x16xf32>
    %103 = tpu.matmul %19, %102, %cst_31 {dimension_numbers = #tpu.dot_dimension_numbers<[1], [0], [0], [1], [0, 0, 1, 1], [], []>} : vector<128x32xbf16>, vector<32x16xbf16>, vector<128x16xf32> -> vector<128x16xf32>
    %104 = arith.addf %101, %103 : vector<128x16xf32>
    %105 = vector.broadcast %20 : vector<128x1xf32> to vector<128x16xf32>
    %106 = arith.addf %104, %105 : vector<128x16xf32>
    %107 = vector.extract_strided_slice %106 {offsets = [0, 0], sizes = [64, 16], strides = [1, 1]} : vector<128x16xf32> to vector<64x16xf32>
    %108 = arith.negf %107 : vector<64x16xf32>
    %109 = math.exp %108 : vector<64x16xf32>
    %cst_32 = arith.constant 1.000000e+00 : f32
    %110 = vector.broadcast %cst_32 : f32 to vector<64x16xf32>
    %111 = arith.addf %110, %109 : vector<64x16xf32>
    %112 = arith.divf %110, %111 : vector<64x16xf32>
    %113 = vector.extract_strided_slice %112 {offsets = [0, 0], sizes = [32, 16], strides = [1, 1]} : vector<64x16xf32> to vector<32x16xf32>
    %114 = vector.extract_strided_slice %112 {offsets = [32, 0], sizes = [32, 16], strides = [1, 1]} : vector<64x16xf32> to vector<32x16xf32>
    %115 = vector.extract_strided_slice %106 {offsets = [64, 0], sizes = [32, 16], strides = [1, 1]} : vector<128x16xf32> to vector<32x16xf32>
    %116 = math.tanh %115 : vector<32x16xf32>
    %117 = vector.extract_strided_slice %106 {offsets = [96, 0], sizes = [32, 16], strides = [1, 1]} : vector<128x16xf32> to vector<32x16xf32>
    %118 = arith.negf %117 : vector<32x16xf32>
    %119 = math.exp %118 : vector<32x16xf32>
    %cst_33 = arith.constant 1.000000e+00 : f32
    %120 = vector.broadcast %cst_33 : f32 to vector<32x16xf32>
    %121 = arith.addf %120, %119 : vector<32x16xf32>
    %122 = arith.divf %120, %121 : vector<32x16xf32>
    %123 = arith.mulf %114, %72 : vector<32x16xf32>
    %124 = arith.mulf %113, %116 : vector<32x16xf32>
    %125 = arith.addf %123, %124 : vector<32x16xf32>
    %126 = math.tanh %125 : vector<32x16xf32>
    %127 = arith.mulf %122, %126 : vector<32x16xf32>
    %128 = vector.extract_strided_slice %16 {offsets = [0, 32], sizes = [128, 16], strides = [1, 1]} : vector<128x128xf32> to vector<128x16xf32>
    %129 = arith.truncf %99 : vector<32x16xf32> to vector<32x16xbf16>
    %cst_34 = arith.constant dense<0.000000e+00> : vector<128x16xf32>
    %130 = tpu.matmul %17, %129, %cst_34 {dimension_numbers = #tpu.dot_dimension_numbers<[1], [0], [0], [1], [0, 0, 1, 1], [], []>} : vector<128x32xbf16>, vector<32x16xbf16>, vector<128x16xf32> -> vector<128x16xf32>
    %131 = arith.addf %128, %130 : vector<128x16xf32>
    %132 = vector.extract_strided_slice %131 {offsets = [0, 0], sizes = [64, 16], strides = [1, 1]} : vector<128x16xf32> to vector<64x16xf32>
    %133 = arith.negf %132 : vector<64x16xf32>
    %134 = math.exp %133 : vector<64x16xf32>
    %cst_35 = arith.constant 1.000000e+00 : f32
    %135 = vector.broadcast %cst_35 : f32 to vector<64x16xf32>
    %136 = arith.addf %135, %134 : vector<64x16xf32>
    %137 = arith.divf %135, %136 : vector<64x16xf32>
    %138 = vector.extract_strided_slice %137 {offsets = [0, 0], sizes = [32, 16], strides = [1, 1]} : vector<64x16xf32> to vector<32x16xf32>
    %139 = vector.extract_strided_slice %137 {offsets = [32, 0], sizes = [32, 16], strides = [1, 1]} : vector<64x16xf32> to vector<32x16xf32>
    %140 = vector.extract_strided_slice %131 {offsets = [64, 0], sizes = [32, 16], strides = [1, 1]} : vector<128x16xf32> to vector<32x16xf32>
    %141 = math.tanh %140 : vector<32x16xf32>
    %142 = vector.extract_strided_slice %131 {offsets = [96, 0], sizes = [32, 16], strides = [1, 1]} : vector<128x16xf32> to vector<32x16xf32>
    %143 = arith.negf %142 : vector<32x16xf32>
    %144 = math.exp %143 : vector<32x16xf32>
    %cst_36 = arith.constant 1.000000e+00 : f32
    %145 = vector.broadcast %cst_36 : f32 to vector<32x16xf32>
    %146 = arith.addf %145, %144 : vector<32x16xf32>
    %147 = arith.divf %145, %146 : vector<32x16xf32>
    %148 = arith.mulf %139, %97 : vector<32x16xf32>
    %149 = arith.mulf %138, %141 : vector<32x16xf32>
    %150 = arith.addf %148, %149 : vector<32x16xf32>
    %151 = math.tanh %150 : vector<32x16xf32>
    %152 = arith.mulf %147, %151 : vector<32x16xf32>
    %153 = arith.truncf %152 : vector<32x16xf32> to vector<32x16xbf16>
    %cst_37 = arith.constant dense<0.000000e+00> : vector<128x16xf32>
    %154 = tpu.matmul %18, %153, %cst_37 {dimension_numbers = #tpu.dot_dimension_numbers<[1], [0], [0], [1], [0, 0, 1, 1], [], []>} : vector<128x32xbf16>, vector<32x16xbf16>, vector<128x16xf32> -> vector<128x16xf32>
    %155 = arith.truncf %127 : vector<32x16xf32> to vector<32x16xbf16>
    %cst_38 = arith.constant dense<0.000000e+00> : vector<128x16xf32>
    %156 = tpu.matmul %19, %155, %cst_38 {dimension_numbers = #tpu.dot_dimension_numbers<[1], [0], [0], [1], [0, 0, 1, 1], [], []>} : vector<128x32xbf16>, vector<32x16xbf16>, vector<128x16xf32> -> vector<128x16xf32>
    %157 = arith.addf %154, %156 : vector<128x16xf32>
    %158 = vector.broadcast %20 : vector<128x1xf32> to vector<128x16xf32>
    %159 = arith.addf %157, %158 : vector<128x16xf32>
    %160 = vector.extract_strided_slice %159 {offsets = [0, 0], sizes = [64, 16], strides = [1, 1]} : vector<128x16xf32> to vector<64x16xf32>
    %161 = arith.negf %160 : vector<64x16xf32>
    %162 = math.exp %161 : vector<64x16xf32>
    %cst_39 = arith.constant 1.000000e+00 : f32
    %163 = vector.broadcast %cst_39 : f32 to vector<64x16xf32>
    %164 = arith.addf %163, %162 : vector<64x16xf32>
    %165 = arith.divf %163, %164 : vector<64x16xf32>
    %166 = vector.extract_strided_slice %165 {offsets = [0, 0], sizes = [32, 16], strides = [1, 1]} : vector<64x16xf32> to vector<32x16xf32>
    %167 = vector.extract_strided_slice %165 {offsets = [32, 0], sizes = [32, 16], strides = [1, 1]} : vector<64x16xf32> to vector<32x16xf32>
    %168 = vector.extract_strided_slice %159 {offsets = [64, 0], sizes = [32, 16], strides = [1, 1]} : vector<128x16xf32> to vector<32x16xf32>
    %169 = math.tanh %168 : vector<32x16xf32>
    %170 = vector.extract_strided_slice %159 {offsets = [96, 0], sizes = [32, 16], strides = [1, 1]} : vector<128x16xf32> to vector<32x16xf32>
    %171 = arith.negf %170 : vector<32x16xf32>
    %172 = math.exp %171 : vector<32x16xf32>
    %cst_40 = arith.constant 1.000000e+00 : f32
    %173 = vector.broadcast %cst_40 : f32 to vector<32x16xf32>
    %174 = arith.addf %173, %172 : vector<32x16xf32>
    %175 = arith.divf %173, %174 : vector<32x16xf32>
    %176 = arith.mulf %167, %125 : vector<32x16xf32>
    %177 = arith.mulf %166, %169 : vector<32x16xf32>
    %178 = arith.addf %176, %177 : vector<32x16xf32>
    %179 = math.tanh %178 : vector<32x16xf32>
    %180 = arith.mulf %175, %179 : vector<32x16xf32>
    %181 = vector.extract_strided_slice %16 {offsets = [0, 48], sizes = [128, 16], strides = [1, 1]} : vector<128x128xf32> to vector<128x16xf32>
    %182 = arith.truncf %152 : vector<32x16xf32> to vector<32x16xbf16>
    %cst_41 = arith.constant dense<0.000000e+00> : vector<128x16xf32>
    %183 = tpu.matmul %17, %182, %cst_41 {dimension_numbers = #tpu.dot_dimension_numbers<[1], [0], [0], [1], [0, 0, 1, 1], [], []>} : vector<128x32xbf16>, vector<32x16xbf16>, vector<128x16xf32> -> vector<128x16xf32>
    %184 = arith.addf %181, %183 : vector<128x16xf32>
    %185 = vector.extract_strided_slice %184 {offsets = [0, 0], sizes = [64, 16], strides = [1, 1]} : vector<128x16xf32> to vector<64x16xf32>
    %186 = arith.negf %185 : vector<64x16xf32>
    %187 = math.exp %186 : vector<64x16xf32>
    %cst_42 = arith.constant 1.000000e+00 : f32
    %188 = vector.broadcast %cst_42 : f32 to vector<64x16xf32>
    %189 = arith.addf %188, %187 : vector<64x16xf32>
    %190 = arith.divf %188, %189 : vector<64x16xf32>
    %191 = vector.extract_strided_slice %190 {offsets = [0, 0], sizes = [32, 16], strides = [1, 1]} : vector<64x16xf32> to vector<32x16xf32>
    %192 = vector.extract_strided_slice %190 {offsets = [32, 0], sizes = [32, 16], strides = [1, 1]} : vector<64x16xf32> to vector<32x16xf32>
    %193 = vector.extract_strided_slice %184 {offsets = [64, 0], sizes = [32, 16], strides = [1, 1]} : vector<128x16xf32> to vector<32x16xf32>
    %194 = math.tanh %193 : vector<32x16xf32>
    %195 = vector.extract_strided_slice %184 {offsets = [96, 0], sizes = [32, 16], strides = [1, 1]} : vector<128x16xf32> to vector<32x16xf32>
    %196 = arith.negf %195 : vector<32x16xf32>
    %197 = math.exp %196 : vector<32x16xf32>
    %cst_43 = arith.constant 1.000000e+00 : f32
    %198 = vector.broadcast %cst_43 : f32 to vector<32x16xf32>
    %199 = arith.addf %198, %197 : vector<32x16xf32>
    %200 = arith.divf %198, %199 : vector<32x16xf32>
    %201 = arith.mulf %192, %150 : vector<32x16xf32>
    %202 = arith.mulf %191, %194 : vector<32x16xf32>
    %203 = arith.addf %201, %202 : vector<32x16xf32>
    %204 = math.tanh %203 : vector<32x16xf32>
    %205 = arith.mulf %200, %204 : vector<32x16xf32>
    %206 = arith.truncf %205 : vector<32x16xf32> to vector<32x16xbf16>
    %cst_44 = arith.constant dense<0.000000e+00> : vector<128x16xf32>
    %207 = tpu.matmul %18, %206, %cst_44 {dimension_numbers = #tpu.dot_dimension_numbers<[1], [0], [0], [1], [0, 0, 1, 1], [], []>} : vector<128x32xbf16>, vector<32x16xbf16>, vector<128x16xf32> -> vector<128x16xf32>
    %208 = arith.truncf %180 : vector<32x16xf32> to vector<32x16xbf16>
    %cst_45 = arith.constant dense<0.000000e+00> : vector<128x16xf32>
    %209 = tpu.matmul %19, %208, %cst_45 {dimension_numbers = #tpu.dot_dimension_numbers<[1], [0], [0], [1], [0, 0, 1, 1], [], []>} : vector<128x32xbf16>, vector<32x16xbf16>, vector<128x16xf32> -> vector<128x16xf32>
    %210 = arith.addf %207, %209 : vector<128x16xf32>
    %211 = vector.broadcast %20 : vector<128x1xf32> to vector<128x16xf32>
    %212 = arith.addf %210, %211 : vector<128x16xf32>
    %213 = vector.extract_strided_slice %212 {offsets = [0, 0], sizes = [64, 16], strides = [1, 1]} : vector<128x16xf32> to vector<64x16xf32>
    %214 = arith.negf %213 : vector<64x16xf32>
    %215 = math.exp %214 : vector<64x16xf32>
    %cst_46 = arith.constant 1.000000e+00 : f32
    %216 = vector.broadcast %cst_46 : f32 to vector<64x16xf32>
    %217 = arith.addf %216, %215 : vector<64x16xf32>
    %218 = arith.divf %216, %217 : vector<64x16xf32>
    %219 = vector.extract_strided_slice %218 {offsets = [0, 0], sizes = [32, 16], strides = [1, 1]} : vector<64x16xf32> to vector<32x16xf32>
    %220 = vector.extract_strided_slice %218 {offsets = [32, 0], sizes = [32, 16], strides = [1, 1]} : vector<64x16xf32> to vector<32x16xf32>
    %221 = vector.extract_strided_slice %212 {offsets = [64, 0], sizes = [32, 16], strides = [1, 1]} : vector<128x16xf32> to vector<32x16xf32>
    %222 = math.tanh %221 : vector<32x16xf32>
    %223 = vector.extract_strided_slice %212 {offsets = [96, 0], sizes = [32, 16], strides = [1, 1]} : vector<128x16xf32> to vector<32x16xf32>
    %224 = arith.negf %223 : vector<32x16xf32>
    %225 = math.exp %224 : vector<32x16xf32>
    %cst_47 = arith.constant 1.000000e+00 : f32
    %226 = vector.broadcast %cst_47 : f32 to vector<32x16xf32>
    %227 = arith.addf %226, %225 : vector<32x16xf32>
    %228 = arith.divf %226, %227 : vector<32x16xf32>
    %229 = arith.mulf %220, %178 : vector<32x16xf32>
    %230 = arith.mulf %219, %222 : vector<32x16xf32>
    %231 = arith.addf %229, %230 : vector<32x16xf32>
    %232 = math.tanh %231 : vector<32x16xf32>
    %233 = arith.mulf %228, %232 : vector<32x16xf32>
    %234 = vector.extract_strided_slice %16 {offsets = [0, 64], sizes = [128, 16], strides = [1, 1]} : vector<128x128xf32> to vector<128x16xf32>
    %235 = arith.truncf %205 : vector<32x16xf32> to vector<32x16xbf16>
    %cst_48 = arith.constant dense<0.000000e+00> : vector<128x16xf32>
    %236 = tpu.matmul %17, %235, %cst_48 {dimension_numbers = #tpu.dot_dimension_numbers<[1], [0], [0], [1], [0, 0, 1, 1], [], []>} : vector<128x32xbf16>, vector<32x16xbf16>, vector<128x16xf32> -> vector<128x16xf32>
    %237 = arith.addf %234, %236 : vector<128x16xf32>
    %238 = vector.extract_strided_slice %237 {offsets = [0, 0], sizes = [64, 16], strides = [1, 1]} : vector<128x16xf32> to vector<64x16xf32>
    %239 = arith.negf %238 : vector<64x16xf32>
    %240 = math.exp %239 : vector<64x16xf32>
    %cst_49 = arith.constant 1.000000e+00 : f32
    %241 = vector.broadcast %cst_49 : f32 to vector<64x16xf32>
    %242 = arith.addf %241, %240 : vector<64x16xf32>
    %243 = arith.divf %241, %242 : vector<64x16xf32>
    %244 = vector.extract_strided_slice %243 {offsets = [0, 0], sizes = [32, 16], strides = [1, 1]} : vector<64x16xf32> to vector<32x16xf32>
    %245 = vector.extract_strided_slice %243 {offsets = [32, 0], sizes = [32, 16], strides = [1, 1]} : vector<64x16xf32> to vector<32x16xf32>
    %246 = vector.extract_strided_slice %237 {offsets = [64, 0], sizes = [32, 16], strides = [1, 1]} : vector<128x16xf32> to vector<32x16xf32>
    %247 = math.tanh %246 : vector<32x16xf32>
    %248 = vector.extract_strided_slice %237 {offsets = [96, 0], sizes = [32, 16], strides = [1, 1]} : vector<128x16xf32> to vector<32x16xf32>
    %249 = arith.negf %248 : vector<32x16xf32>
    %250 = math.exp %249 : vector<32x16xf32>
    %cst_50 = arith.constant 1.000000e+00 : f32
    %251 = vector.broadcast %cst_50 : f32 to vector<32x16xf32>
    %252 = arith.addf %251, %250 : vector<32x16xf32>
    %253 = arith.divf %251, %252 : vector<32x16xf32>
    %254 = arith.mulf %245, %203 : vector<32x16xf32>
    %255 = arith.mulf %244, %247 : vector<32x16xf32>
    %256 = arith.addf %254, %255 : vector<32x16xf32>
    %257 = math.tanh %256 : vector<32x16xf32>
    %258 = arith.mulf %253, %257 : vector<32x16xf32>
    %259 = arith.truncf %258 : vector<32x16xf32> to vector<32x16xbf16>
    %cst_51 = arith.constant dense<0.000000e+00> : vector<128x16xf32>
    %260 = tpu.matmul %18, %259, %cst_51 {dimension_numbers = #tpu.dot_dimension_numbers<[1], [0], [0], [1], [0, 0, 1, 1], [], []>} : vector<128x32xbf16>, vector<32x16xbf16>, vector<128x16xf32> -> vector<128x16xf32>
    %261 = arith.truncf %233 : vector<32x16xf32> to vector<32x16xbf16>
    %cst_52 = arith.constant dense<0.000000e+00> : vector<128x16xf32>
    %262 = tpu.matmul %19, %261, %cst_52 {dimension_numbers = #tpu.dot_dimension_numbers<[1], [0], [0], [1], [0, 0, 1, 1], [], []>} : vector<128x32xbf16>, vector<32x16xbf16>, vector<128x16xf32> -> vector<128x16xf32>
    %263 = arith.addf %260, %262 : vector<128x16xf32>
    %264 = vector.broadcast %20 : vector<128x1xf32> to vector<128x16xf32>
    %265 = arith.addf %263, %264 : vector<128x16xf32>
    %266 = vector.extract_strided_slice %265 {offsets = [0, 0], sizes = [64, 16], strides = [1, 1]} : vector<128x16xf32> to vector<64x16xf32>
    %267 = arith.negf %266 : vector<64x16xf32>
    %268 = math.exp %267 : vector<64x16xf32>
    %cst_53 = arith.constant 1.000000e+00 : f32
    %269 = vector.broadcast %cst_53 : f32 to vector<64x16xf32>
    %270 = arith.addf %269, %268 : vector<64x16xf32>
    %271 = arith.divf %269, %270 : vector<64x16xf32>
    %272 = vector.extract_strided_slice %271 {offsets = [0, 0], sizes = [32, 16], strides = [1, 1]} : vector<64x16xf32> to vector<32x16xf32>
    %273 = vector.extract_strided_slice %271 {offsets = [32, 0], sizes = [32, 16], strides = [1, 1]} : vector<64x16xf32> to vector<32x16xf32>
    %274 = vector.extract_strided_slice %265 {offsets = [64, 0], sizes = [32, 16], strides = [1, 1]} : vector<128x16xf32> to vector<32x16xf32>
    %275 = math.tanh %274 : vector<32x16xf32>
    %276 = vector.extract_strided_slice %265 {offsets = [96, 0], sizes = [32, 16], strides = [1, 1]} : vector<128x16xf32> to vector<32x16xf32>
    %277 = arith.negf %276 : vector<32x16xf32>
    %278 = math.exp %277 : vector<32x16xf32>
    %cst_54 = arith.constant 1.000000e+00 : f32
    %279 = vector.broadcast %cst_54 : f32 to vector<32x16xf32>
    %280 = arith.addf %279, %278 : vector<32x16xf32>
    %281 = arith.divf %279, %280 : vector<32x16xf32>
    %282 = arith.mulf %273, %231 : vector<32x16xf32>
    %283 = arith.mulf %272, %275 : vector<32x16xf32>
    %284 = arith.addf %282, %283 : vector<32x16xf32>
    %285 = math.tanh %284 : vector<32x16xf32>
    %286 = arith.mulf %281, %285 : vector<32x16xf32>
    %287 = vector.extract_strided_slice %16 {offsets = [0, 80], sizes = [128, 16], strides = [1, 1]} : vector<128x128xf32> to vector<128x16xf32>
    %288 = arith.truncf %258 : vector<32x16xf32> to vector<32x16xbf16>
    %cst_55 = arith.constant dense<0.000000e+00> : vector<128x16xf32>
    %289 = tpu.matmul %17, %288, %cst_55 {dimension_numbers = #tpu.dot_dimension_numbers<[1], [0], [0], [1], [0, 0, 1, 1], [], []>} : vector<128x32xbf16>, vector<32x16xbf16>, vector<128x16xf32> -> vector<128x16xf32>
    %290 = arith.addf %287, %289 : vector<128x16xf32>
    %291 = vector.extract_strided_slice %290 {offsets = [0, 0], sizes = [64, 16], strides = [1, 1]} : vector<128x16xf32> to vector<64x16xf32>
    %292 = arith.negf %291 : vector<64x16xf32>
    %293 = math.exp %292 : vector<64x16xf32>
    %cst_56 = arith.constant 1.000000e+00 : f32
    %294 = vector.broadcast %cst_56 : f32 to vector<64x16xf32>
    %295 = arith.addf %294, %293 : vector<64x16xf32>
    %296 = arith.divf %294, %295 : vector<64x16xf32>
    %297 = vector.extract_strided_slice %296 {offsets = [0, 0], sizes = [32, 16], strides = [1, 1]} : vector<64x16xf32> to vector<32x16xf32>
    %298 = vector.extract_strided_slice %296 {offsets = [32, 0], sizes = [32, 16], strides = [1, 1]} : vector<64x16xf32> to vector<32x16xf32>
    %299 = vector.extract_strided_slice %290 {offsets = [64, 0], sizes = [32, 16], strides = [1, 1]} : vector<128x16xf32> to vector<32x16xf32>
    %300 = math.tanh %299 : vector<32x16xf32>
    %301 = vector.extract_strided_slice %290 {offsets = [96, 0], sizes = [32, 16], strides = [1, 1]} : vector<128x16xf32> to vector<32x16xf32>
    %302 = arith.negf %301 : vector<32x16xf32>
    %303 = math.exp %302 : vector<32x16xf32>
    %cst_57 = arith.constant 1.000000e+00 : f32
    %304 = vector.broadcast %cst_57 : f32 to vector<32x16xf32>
    %305 = arith.addf %304, %303 : vector<32x16xf32>
    %306 = arith.divf %304, %305 : vector<32x16xf32>
    %307 = arith.mulf %298, %256 : vector<32x16xf32>
    %308 = arith.mulf %297, %300 : vector<32x16xf32>
    %309 = arith.addf %307, %308 : vector<32x16xf32>
    %310 = math.tanh %309 : vector<32x16xf32>
    %311 = arith.mulf %306, %310 : vector<32x16xf32>
    %312 = arith.truncf %311 : vector<32x16xf32> to vector<32x16xbf16>
    %cst_58 = arith.constant dense<0.000000e+00> : vector<128x16xf32>
    %313 = tpu.matmul %18, %312, %cst_58 {dimension_numbers = #tpu.dot_dimension_numbers<[1], [0], [0], [1], [0, 0, 1, 1], [], []>} : vector<128x32xbf16>, vector<32x16xbf16>, vector<128x16xf32> -> vector<128x16xf32>
    %314 = arith.truncf %286 : vector<32x16xf32> to vector<32x16xbf16>
    %cst_59 = arith.constant dense<0.000000e+00> : vector<128x16xf32>
    %315 = tpu.matmul %19, %314, %cst_59 {dimension_numbers = #tpu.dot_dimension_numbers<[1], [0], [0], [1], [0, 0, 1, 1], [], []>} : vector<128x32xbf16>, vector<32x16xbf16>, vector<128x16xf32> -> vector<128x16xf32>
    %316 = arith.addf %313, %315 : vector<128x16xf32>
    %317 = vector.broadcast %20 : vector<128x1xf32> to vector<128x16xf32>
    %318 = arith.addf %316, %317 : vector<128x16xf32>
    %319 = vector.extract_strided_slice %318 {offsets = [0, 0], sizes = [64, 16], strides = [1, 1]} : vector<128x16xf32> to vector<64x16xf32>
    %320 = arith.negf %319 : vector<64x16xf32>
    %321 = math.exp %320 : vector<64x16xf32>
    %cst_60 = arith.constant 1.000000e+00 : f32
    %322 = vector.broadcast %cst_60 : f32 to vector<64x16xf32>
    %323 = arith.addf %322, %321 : vector<64x16xf32>
    %324 = arith.divf %322, %323 : vector<64x16xf32>
    %325 = vector.extract_strided_slice %324 {offsets = [0, 0], sizes = [32, 16], strides = [1, 1]} : vector<64x16xf32> to vector<32x16xf32>
    %326 = vector.extract_strided_slice %324 {offsets = [32, 0], sizes = [32, 16], strides = [1, 1]} : vector<64x16xf32> to vector<32x16xf32>
    %327 = vector.extract_strided_slice %318 {offsets = [64, 0], sizes = [32, 16], strides = [1, 1]} : vector<128x16xf32> to vector<32x16xf32>
    %328 = math.tanh %327 : vector<32x16xf32>
    %329 = vector.extract_strided_slice %318 {offsets = [96, 0], sizes = [32, 16], strides = [1, 1]} : vector<128x16xf32> to vector<32x16xf32>
    %330 = arith.negf %329 : vector<32x16xf32>
    %331 = math.exp %330 : vector<32x16xf32>
    %cst_61 = arith.constant 1.000000e+00 : f32
    %332 = vector.broadcast %cst_61 : f32 to vector<32x16xf32>
    %333 = arith.addf %332, %331 : vector<32x16xf32>
    %334 = arith.divf %332, %333 : vector<32x16xf32>
    %335 = arith.mulf %326, %284 : vector<32x16xf32>
    %336 = arith.mulf %325, %328 : vector<32x16xf32>
    %337 = arith.addf %335, %336 : vector<32x16xf32>
    %338 = math.tanh %337 : vector<32x16xf32>
    %339 = arith.mulf %334, %338 : vector<32x16xf32>
    %340 = vector.extract_strided_slice %16 {offsets = [0, 96], sizes = [128, 16], strides = [1, 1]} : vector<128x128xf32> to vector<128x16xf32>
    %341 = arith.truncf %311 : vector<32x16xf32> to vector<32x16xbf16>
    %cst_62 = arith.constant dense<0.000000e+00> : vector<128x16xf32>
    %342 = tpu.matmul %17, %341, %cst_62 {dimension_numbers = #tpu.dot_dimension_numbers<[1], [0], [0], [1], [0, 0, 1, 1], [], []>} : vector<128x32xbf16>, vector<32x16xbf16>, vector<128x16xf32> -> vector<128x16xf32>
    %343 = arith.addf %340, %342 : vector<128x16xf32>
    %344 = vector.extract_strided_slice %343 {offsets = [0, 0], sizes = [64, 16], strides = [1, 1]} : vector<128x16xf32> to vector<64x16xf32>
    %345 = arith.negf %344 : vector<64x16xf32>
    %346 = math.exp %345 : vector<64x16xf32>
    %cst_63 = arith.constant 1.000000e+00 : f32
    %347 = vector.broadcast %cst_63 : f32 to vector<64x16xf32>
    %348 = arith.addf %347, %346 : vector<64x16xf32>
    %349 = arith.divf %347, %348 : vector<64x16xf32>
    %350 = vector.extract_strided_slice %349 {offsets = [0, 0], sizes = [32, 16], strides = [1, 1]} : vector<64x16xf32> to vector<32x16xf32>
    %351 = vector.extract_strided_slice %349 {offsets = [32, 0], sizes = [32, 16], strides = [1, 1]} : vector<64x16xf32> to vector<32x16xf32>
    %352 = vector.extract_strided_slice %343 {offsets = [64, 0], sizes = [32, 16], strides = [1, 1]} : vector<128x16xf32> to vector<32x16xf32>
    %353 = math.tanh %352 : vector<32x16xf32>
    %354 = vector.extract_strided_slice %343 {offsets = [96, 0], sizes = [32, 16], strides = [1, 1]} : vector<128x16xf32> to vector<32x16xf32>
    %355 = arith.negf %354 : vector<32x16xf32>
    %356 = math.exp %355 : vector<32x16xf32>
    %cst_64 = arith.constant 1.000000e+00 : f32
    %357 = vector.broadcast %cst_64 : f32 to vector<32x16xf32>
    %358 = arith.addf %357, %356 : vector<32x16xf32>
    %359 = arith.divf %357, %358 : vector<32x16xf32>
    %360 = arith.mulf %351, %309 : vector<32x16xf32>
    %361 = arith.mulf %350, %353 : vector<32x16xf32>
    %362 = arith.addf %360, %361 : vector<32x16xf32>
    %363 = math.tanh %362 : vector<32x16xf32>
    %364 = arith.mulf %359, %363 : vector<32x16xf32>
    %365 = arith.truncf %364 : vector<32x16xf32> to vector<32x16xbf16>
    %cst_65 = arith.constant dense<0.000000e+00> : vector<128x16xf32>
    %366 = tpu.matmul %18, %365, %cst_65 {dimension_numbers = #tpu.dot_dimension_numbers<[1], [0], [0], [1], [0, 0, 1, 1], [], []>} : vector<128x32xbf16>, vector<32x16xbf16>, vector<128x16xf32> -> vector<128x16xf32>
    %367 = arith.truncf %339 : vector<32x16xf32> to vector<32x16xbf16>
    %cst_66 = arith.constant dense<0.000000e+00> : vector<128x16xf32>
    %368 = tpu.matmul %19, %367, %cst_66 {dimension_numbers = #tpu.dot_dimension_numbers<[1], [0], [0], [1], [0, 0, 1, 1], [], []>} : vector<128x32xbf16>, vector<32x16xbf16>, vector<128x16xf32> -> vector<128x16xf32>
    %369 = arith.addf %366, %368 : vector<128x16xf32>
    %370 = vector.broadcast %20 : vector<128x1xf32> to vector<128x16xf32>
    %371 = arith.addf %369, %370 : vector<128x16xf32>
    %372 = vector.extract_strided_slice %371 {offsets = [0, 0], sizes = [64, 16], strides = [1, 1]} : vector<128x16xf32> to vector<64x16xf32>
    %373 = arith.negf %372 : vector<64x16xf32>
    %374 = math.exp %373 : vector<64x16xf32>
    %cst_67 = arith.constant 1.000000e+00 : f32
    %375 = vector.broadcast %cst_67 : f32 to vector<64x16xf32>
    %376 = arith.addf %375, %374 : vector<64x16xf32>
    %377 = arith.divf %375, %376 : vector<64x16xf32>
    %378 = vector.extract_strided_slice %377 {offsets = [0, 0], sizes = [32, 16], strides = [1, 1]} : vector<64x16xf32> to vector<32x16xf32>
    %379 = vector.extract_strided_slice %377 {offsets = [32, 0], sizes = [32, 16], strides = [1, 1]} : vector<64x16xf32> to vector<32x16xf32>
    %380 = vector.extract_strided_slice %371 {offsets = [64, 0], sizes = [32, 16], strides = [1, 1]} : vector<128x16xf32> to vector<32x16xf32>
    %381 = math.tanh %380 : vector<32x16xf32>
    %382 = vector.extract_strided_slice %371 {offsets = [96, 0], sizes = [32, 16], strides = [1, 1]} : vector<128x16xf32> to vector<32x16xf32>
    %383 = arith.negf %382 : vector<32x16xf32>
    %384 = math.exp %383 : vector<32x16xf32>
    %cst_68 = arith.constant 1.000000e+00 : f32
    %385 = vector.broadcast %cst_68 : f32 to vector<32x16xf32>
    %386 = arith.addf %385, %384 : vector<32x16xf32>
    %387 = arith.divf %385, %386 : vector<32x16xf32>
    %388 = arith.mulf %379, %337 : vector<32x16xf32>
    %389 = arith.mulf %378, %381 : vector<32x16xf32>
    %390 = arith.addf %388, %389 : vector<32x16xf32>
    %391 = math.tanh %390 : vector<32x16xf32>
    %392 = arith.mulf %387, %391 : vector<32x16xf32>
    %393 = vector.extract_strided_slice %16 {offsets = [0, 112], sizes = [128, 16], strides = [1, 1]} : vector<128x128xf32> to vector<128x16xf32>
    %394 = arith.truncf %364 : vector<32x16xf32> to vector<32x16xbf16>
    %cst_69 = arith.constant dense<0.000000e+00> : vector<128x16xf32>
    %395 = tpu.matmul %17, %394, %cst_69 {dimension_numbers = #tpu.dot_dimension_numbers<[1], [0], [0], [1], [0, 0, 1, 1], [], []>} : vector<128x32xbf16>, vector<32x16xbf16>, vector<128x16xf32> -> vector<128x16xf32>
    %396 = arith.addf %393, %395 : vector<128x16xf32>
    %397 = vector.extract_strided_slice %396 {offsets = [0, 0], sizes = [64, 16], strides = [1, 1]} : vector<128x16xf32> to vector<64x16xf32>
    %398 = arith.negf %397 : vector<64x16xf32>
    %399 = math.exp %398 : vector<64x16xf32>
    %cst_70 = arith.constant 1.000000e+00 : f32
    %400 = vector.broadcast %cst_70 : f32 to vector<64x16xf32>
    %401 = arith.addf %400, %399 : vector<64x16xf32>
    %402 = arith.divf %400, %401 : vector<64x16xf32>
    %403 = vector.extract_strided_slice %402 {offsets = [0, 0], sizes = [32, 16], strides = [1, 1]} : vector<64x16xf32> to vector<32x16xf32>
    %404 = vector.extract_strided_slice %402 {offsets = [32, 0], sizes = [32, 16], strides = [1, 1]} : vector<64x16xf32> to vector<32x16xf32>
    %405 = vector.extract_strided_slice %396 {offsets = [64, 0], sizes = [32, 16], strides = [1, 1]} : vector<128x16xf32> to vector<32x16xf32>
    %406 = math.tanh %405 : vector<32x16xf32>
    %407 = vector.extract_strided_slice %396 {offsets = [96, 0], sizes = [32, 16], strides = [1, 1]} : vector<128x16xf32> to vector<32x16xf32>
    %408 = arith.negf %407 : vector<32x16xf32>
    %409 = math.exp %408 : vector<32x16xf32>
    %cst_71 = arith.constant 1.000000e+00 : f32
    %410 = vector.broadcast %cst_71 : f32 to vector<32x16xf32>
    %411 = arith.addf %410, %409 : vector<32x16xf32>
    %412 = arith.divf %410, %411 : vector<32x16xf32>
    %413 = arith.mulf %404, %362 : vector<32x16xf32>
    %414 = arith.mulf %403, %406 : vector<32x16xf32>
    %415 = arith.addf %413, %414 : vector<32x16xf32>
    %416 = math.tanh %415 : vector<32x16xf32>
    %417 = arith.mulf %412, %416 : vector<32x16xf32>
    %418 = arith.truncf %417 : vector<32x16xf32> to vector<32x16xbf16>
    %cst_72 = arith.constant dense<0.000000e+00> : vector<128x16xf32>
    %419 = tpu.matmul %18, %418, %cst_72 {dimension_numbers = #tpu.dot_dimension_numbers<[1], [0], [0], [1], [0, 0, 1, 1], [], []>} : vector<128x32xbf16>, vector<32x16xbf16>, vector<128x16xf32> -> vector<128x16xf32>
    %420 = arith.truncf %392 : vector<32x16xf32> to vector<32x16xbf16>
    %cst_73 = arith.constant dense<0.000000e+00> : vector<128x16xf32>
    %421 = tpu.matmul %19, %420, %cst_73 {dimension_numbers = #tpu.dot_dimension_numbers<[1], [0], [0], [1], [0, 0, 1, 1], [], []>} : vector<128x32xbf16>, vector<32x16xbf16>, vector<128x16xf32> -> vector<128x16xf32>
    %422 = arith.addf %419, %421 : vector<128x16xf32>
    %423 = vector.broadcast %20 : vector<128x1xf32> to vector<128x16xf32>
    %424 = arith.addf %422, %423 : vector<128x16xf32>
    %425 = vector.extract_strided_slice %424 {offsets = [0, 0], sizes = [64, 16], strides = [1, 1]} : vector<128x16xf32> to vector<64x16xf32>
    %426 = arith.negf %425 : vector<64x16xf32>
    %427 = math.exp %426 : vector<64x16xf32>
    %cst_74 = arith.constant 1.000000e+00 : f32
    %428 = vector.broadcast %cst_74 : f32 to vector<64x16xf32>
    %429 = arith.addf %428, %427 : vector<64x16xf32>
    %430 = arith.divf %428, %429 : vector<64x16xf32>
    %431 = vector.extract_strided_slice %430 {offsets = [0, 0], sizes = [32, 16], strides = [1, 1]} : vector<64x16xf32> to vector<32x16xf32>
    %432 = vector.extract_strided_slice %430 {offsets = [32, 0], sizes = [32, 16], strides = [1, 1]} : vector<64x16xf32> to vector<32x16xf32>
    %433 = vector.extract_strided_slice %424 {offsets = [64, 0], sizes = [32, 16], strides = [1, 1]} : vector<128x16xf32> to vector<32x16xf32>
    %434 = math.tanh %433 : vector<32x16xf32>
    %435 = vector.extract_strided_slice %424 {offsets = [96, 0], sizes = [32, 16], strides = [1, 1]} : vector<128x16xf32> to vector<32x16xf32>
    %436 = arith.negf %435 : vector<32x16xf32>
    %437 = math.exp %436 : vector<32x16xf32>
    %cst_75 = arith.constant 1.000000e+00 : f32
    %438 = vector.broadcast %cst_75 : f32 to vector<32x16xf32>
    %439 = arith.addf %438, %437 : vector<32x16xf32>
    %440 = arith.divf %438, %439 : vector<32x16xf32>
    %441 = arith.mulf %432, %390 : vector<32x16xf32>
    %442 = arith.mulf %431, %434 : vector<32x16xf32>
    %443 = arith.addf %441, %442 : vector<32x16xf32>
    %444 = math.tanh %443 : vector<32x16xf32>
    %445 = arith.mulf %440, %444 : vector<32x16xf32>
    %446 = tpu.concatenate %417, %445 in 0 : vector<32x16xf32>, vector<32x16xf32> -> vector<64x16xf32>
    %c0_76 = arith.constant 0 : index
    %c0_77 = arith.constant 0 : index
    %447 = vector.load %arg10[%c0_76, %c0_77] : memref<64x1xf32, #tpu.memory_space<vmem>>, vector<64x1xf32>
    %448 = vector.broadcast %447 : vector<64x1xf32> to vector<64x16xf32>
    %449 = arith.mulf %446, %448 : vector<64x16xf32>
    %cst_78 = arith.constant dense<0.000000e+00> : vector<16xf32>
    %450 = vector.multi_reduction <add>, %449, %cst_78 [0] : vector<64x16xf32> to vector<16xf32>
    %451 = vector.shape_cast %450 : vector<16xf32> to vector<1x16xf32>
    %c0_79 = arith.constant 0 : index
    %c0_80 = arith.constant 0 : index
    %452 = vector.load %arg11[%c0_79, %c0_80] : memref<1x1xf32, #tpu.memory_space<vmem>>, vector<1x1xf32>
    %453 = vector.broadcast %452 : vector<1x1xf32> to vector<1x16xf32>
    %454 = arith.addf %451, %453 : vector<1x16xf32>
    %455 = vector.shape_cast %454 : vector<1x16xf32> to vector<1x1x16xf32>
    %c0_81 = arith.constant 0 : index
    %c0_82 = arith.constant 0 : index
    %c0_83 = arith.constant 0 : index
    %456 = vector.load %arg12[%c0_81, %c0_82, %c0_83] : memref<1x1x16xf32, #tpu.memory_space<vmem>>, vector<1x1x16xf32>
    tpu.vector_store %arg12[%c0_81, %c0_82, %c0_83], %455 {strides = array<i32>} : memref<1x1x16xf32, #tpu.memory_space<vmem>>, vector<1x1x16xf32>,
    return
  }
  func.func @transform_0(%arg0: i32) -> (i32, i32, i32) {
    %c0_i32 = arith.constant 0 : i32
    %c0_i32_0 = arith.constant 0 : i32
    %c0_i32_1 = arith.constant 0 : i32
    return %arg0, %c0_i32, %c0_i32_0 : i32, i32, i32
  }
  func.func @transform_1(%arg0: i32) -> (i32, i32) {
    %c0_i32 = arith.constant 0 : i32
    %c0_i32_0 = arith.constant 0 : i32
    %c0_i32_1 = arith.constant 0 : i32
    return %c0_i32, %c0_i32_0 : i32, i32
  }
  func.func @transform_2(%arg0: i32) -> (i32, i32) {
    %c0_i32 = arith.constant 0 : i32
    %c0_i32_0 = arith.constant 0 : i32
    %c0_i32_1 = arith.constant 0 : i32
    return %c0_i32, %c0_i32_0 : i32, i32
  }
  func.func @transform_3(%arg0: i32) -> (i32, i32) {
    %c0_i32 = arith.constant 0 : i32
    %c0_i32_0 = arith.constant 0 : i32
    %c0_i32_1 = arith.constant 0 : i32
    return %c0_i32, %c0_i32_0 : i32, i32
  }
  func.func @transform_4(%arg0: i32) -> (i32, i32) {
    %c0_i32 = arith.constant 0 : i32
    %c0_i32_0 = arith.constant 0 : i32
    %c0_i32_1 = arith.constant 0 : i32
    return %c0_i32, %c0_i32_0 : i32, i32
  }
  func.func @transform_5(%arg0: i32) -> (i32, i32) {
    %c0_i32 = arith.constant 0 : i32
    %c0_i32_0 = arith.constant 0 : i32
    %c0_i32_1 = arith.constant 0 : i32
    return %c0_i32, %c0_i32_0 : i32, i32
  }
  func.func @transform_6(%arg0: i32) -> (i32, i32) {
    %c0_i32 = arith.constant 0 : i32
    %c0_i32_0 = arith.constant 0 : i32
    %c0_i32_1 = arith.constant 0 : i32
    return %c0_i32, %c0_i32_0 : i32, i32
  }
  func.func @transform_7(%arg0: i32) -> (i32, i32) {
    %c0_i32 = arith.constant 0 : i32
    %c0_i32_0 = arith.constant 0 : i32
    %c0_i32_1 = arith.constant 0 : i32
    return %c0_i32, %c0_i32_0 : i32, i32
  }
  func.func @transform_8(%arg0: i32) -> (i32, i32) {
    %c0_i32 = arith.constant 0 : i32
    %c0_i32_0 = arith.constant 0 : i32
    %c0_i32_1 = arith.constant 0 : i32
    return %c0_i32, %c0_i32_0 : i32, i32
  }
  func.func @transform_9(%arg0: i32) -> (i32, i32) {
    %c0_i32 = arith.constant 0 : i32
    %c0_i32_0 = arith.constant 0 : i32
    %c0_i32_1 = arith.constant 0 : i32
    return %c0_i32, %c0_i32_0 : i32, i32
  }
  func.func @transform_10(%arg0: i32) -> (i32, i32) {
    %c0_i32 = arith.constant 0 : i32
    %c0_i32_0 = arith.constant 0 : i32
    %c0_i32_1 = arith.constant 0 : i32
    return %c0_i32, %c0_i32_0 : i32, i32
  }
  func.func @transform_11(%arg0: i32) -> (i32, i32, i32) {
    %c0_i32 = arith.constant 0 : i32
    %c0_i32_0 = arith.constant 0 : i32
    %c0_i32_1 = arith.constant 0 : i32
    return %arg0, %c0_i32, %c0_i32_0 : i32, i32, i32
  }
}

</mosaic_0001>

<llo_original>
// kernel: _lstm_forward_impl.1
$region0: #{_lstm_forward_impl.1}
  #allocation0 [shape = 'u32[]', space=smem, size = 0x4, offset = 0x4, fixed_abs, tag = 'smem constant byte address 0x4 - core index']
  #allocation1 [shape = 'u32[144,128]{1,0:T(1,128)}', space=vmem, size = 0x12000, scoped, tag = 'internal scratch']
  #allocation2 [shape = 'f32[1,1]{1,0:T(1,128)S(1)}', space=vmem, size = 0x200, scoped, tag = 'scoped memory for _lstm_forward_impl.1']
  %s0 = inlined_call_operand.vmem [shape: f32[1,1,128], index: 0, kind: input, shape index: {}]
  %s1 = inlined_call_operand.vmem [shape: f32[32,1], index: 1, kind: input, shape index: {}]
  %s2 = inlined_call_operand.vmem [shape: f32[32,1], index: 2, kind: input, shape index: {}]
  %s3 = inlined_call_operand.vmem [shape: bf16[128,32], index: 3, kind: input, shape index: {}]
  %s4 = inlined_call_operand.vmem [shape: bf16[128,32], index: 4, kind: input, shape index: {}]
  %s5 = inlined_call_operand.vmem [shape: f32[128,1], index: 5, kind: input, shape index: {}]
  %s6 = inlined_call_operand.vmem [shape: bf16[128,32], index: 6, kind: input, shape index: {}]
  %s7 = inlined_call_operand.vmem [shape: bf16[128,32], index: 7, kind: input, shape index: {}]
  %s8 = inlined_call_operand.vmem [shape: f32[128,1], index: 8, kind: input, shape index: {}]
  %s9 = inlined_call_operand.vmem [shape: f32[64,1], index: 9, kind: input, shape index: {}]
  %s10 = inlined_call_operand.<no memory space> [shape: f32[1,1], index: 10, kind: input, shape index: {}]
  %s11 = inlined_call_operand.hbm [shape: f32[1,1,16], index: 11, kind: output, shape index: {}]
  %s12 = sld [smem:[#allocation0]]
  $region54: #{_lstm_forward_impl.1} parent=0
    _
  %s14 = ssub.s32 1, %s12
  %s15 = scalar_select 0, %s14, %s12
  %v16 = vstv %s10
  %17 = vst [vmem:[#allocation2] sm:$0x1] %v16
  $region1: #{_lstm_forward_impl.1} parent=0
    #allocation3 [shape = 'u8[512]{0}', space=vmem, size = 0x400, scoped, tag = 'output window, operand 0, single buffered']
    #allocation4 [shape = 's32[1]{0}', space=sflag, size = 0x4, scoped, tag = 'scoped memory for _lstm_forward_impl.1']
    %18 = vsyncpa [#allocation4], 0
    // Predicated region
    $region2: #{_lstm_forward_impl.1} parent=1 // pred_check
      _
    $region3: #{_lstm_forward_impl.1} parent=1 // pred_check_branch
      %20 = sbr.rel (0) target = $region5
    $region4: #{_lstm_forward_impl.1} parent=1 // pred_region
      _
    $region5: #{_lstm_forward_impl.1} parent=1 // pred_fallthru
      _
    // Predicated region
    $region6: #{_lstm_forward_impl.1} parent=1 // pred_check
      _
    $region7: #{_lstm_forward_impl.1} parent=1 // pred_check_branch
      %22 = sbr.rel (0) target = $region9
    $region8: #{_lstm_forward_impl.1} parent=1 // pred_region
      _
    $region9: #{_lstm_forward_impl.1} parent=1 // pred_fallthru
      _
    // Predicated region
    $region10: #{_lstm_forward_impl.1} parent=1 // pred_check
      _
    $region11: #{_lstm_forward_impl.1} parent=1 // pred_check_branch
      %24 = sbr.rel (0) target = $region13
    $region12: #{_lstm_forward_impl.1} parent=1 // pred_region
      _
    $region13: #{_lstm_forward_impl.1} parent=1 // pred_fallthru
      _
    // Predicated region
    $region14: #{_lstm_forward_impl.1} parent=1 // pred_check
      _
    $region15: #{_lstm_forward_impl.1} parent=1 // pred_check_branch
      %26 = sbr.rel (0) target = $region17
    $region16: #{_lstm_forward_impl.1} parent=1 // pred_region
      _
    $region17: #{_lstm_forward_impl.1} parent=1 // pred_fallthru
      _
    // Predicated region
    $region18: #{_lstm_forward_impl.1} parent=1 // pred_check
      _
    $region19: #{_lstm_forward_impl.1} parent=1 // pred_check_branch
      %28 = sbr.rel (0) target = $region21
    $region20: #{_lstm_forward_impl.1} parent=1 // pred_region
      _
    $region21: #{_lstm_forward_impl.1} parent=1 // pred_fallthru
      _
    // Predicated region
    $region22: #{_lstm_forward_impl.1} parent=1 // pred_check
      _
    $region23: #{_lstm_forward_impl.1} parent=1 // pred_check_branch
      %30 = sbr.rel (0) target = $region25
    $region24: #{_lstm_forward_impl.1} parent=1 // pred_region
      _
    $region25: #{_lstm_forward_impl.1} parent=1 // pred_fallthru
      _
    // Predicated region
    $region26: #{_lstm_forward_impl.1} parent=1 // pred_check
      _
    $region27: #{_lstm_forward_impl.1} parent=1 // pred_check_branch
      %32 = sbr.rel (0) target = $region29
    $region28: #{_lstm_forward_impl.1} parent=1 // pred_region
      _
    $region29: #{_lstm_forward_impl.1} parent=1 // pred_fallthru
      _
    // Predicated region
    $region30: #{_lstm_forward_impl.1} parent=1 // pred_check
      _
    $region31: #{_lstm_forward_impl.1} parent=1 // pred_check_branch
      %34 = sbr.rel (0) target = $region33
    $region32: #{_lstm_forward_impl.1} parent=1 // pred_region
      _
    $region33: #{_lstm_forward_impl.1} parent=1 // pred_fallthru
      _
    // Predicated region
    $region34: #{_lstm_forward_impl.1} parent=1 // pred_check
      _
    $region35: #{_lstm_forward_impl.1} parent=1 // pred_check_branch
      %36 = sbr.rel (0) target = $region37
    $region36: #{_lstm_forward_impl.1} parent=1 // pred_region
      _
    $region37: #{_lstm_forward_impl.1} parent=1 // pred_fallthru
      _
    // Predicated region
    $region38: #{_lstm_forward_impl.1} parent=1 // pred_check
      _
    $region39: #{_lstm_forward_impl.1} parent=1 // pred_check_branch
      %38 = sbr.rel (0) target = $region41
    $region40: #{_lstm_forward_impl.1} parent=1 // pred_region
      _
    $region41: #{_lstm_forward_impl.1} parent=1 // pred_fallthru
      _
    // Predicated region
    $region42: #{_lstm_forward_impl.1} parent=1 // pred_check
      _
    $region43: #{_lstm_forward_impl.1} parent=1 // pred_check_branch
      %40 = sbr.rel (0) target = $region45
    $region44: #{_lstm_forward_impl.1} parent=1 // pred_region
      _
    $region45: #{_lstm_forward_impl.1} parent=1 // pred_fallthru
      _
    %v42 = vld [vmem:[%s0] sm:$0x1]
    %v43 = vld [vmem:[%s1] sm:$0xff]
    %v44 = vld [vmem:[%s1 + $0x8] sm:$0xff]
    %v45 = vld [vmem:[%s1 + $0x10] sm:$0xff]
    %v46 = vld [vmem:[%s1 + $0x18] sm:$0xff]
    %48 = vset.pattern.permute.xlu0 0
    %49 = vperm.xlu0 %48, %v43
    %v50 = vpop.permute.xlu0 %49
    %53 = vset.pattern.permute.xlu0 0
    %54 = vperm.xlu0 %53, %v44
    %v55 = vpop.permute.xlu0 %54
    %58 = vset.pattern.permute.xlu0 0
    %59 = vperm.xlu0 %58, %v45
    %v60 = vpop.permute.xlu0 %59
    %63 = vset.pattern.permute.xlu0 0
    %64 = vperm.xlu0 %63, %v46
    %v65 = vpop.permute.xlu0 %64
    %v68 = vlaneseq
    %v69 = vshrl.u32 %v68, 7
    %v70 = vsub.s32 0, %v69
    %v71 = vrot.slane %v42, %v70
    %v73 = vmul.f32 %v50, %v71
    %v74 = vmul.f32 %v55, %v71
    %v75 = vmul.f32 %v60, %v71
    %v76 = vmul.f32 %v65, %v71
    %v77 = vld [vmem:[%s2] sm:$0xff]
    %v78 = vld [vmem:[%s2 + $0x8] sm:$0xff]
    %v79 = vld [vmem:[%s2 + $0x10] sm:$0xff]
    %v80 = vld [vmem:[%s2 + $0x18] sm:$0xff]
    %82 = vset.pattern.permute.xlu0 0
    %83 = vperm.xlu0 %82, %v77
    %v84 = vpop.permute.xlu0 %83
    %87 = vset.pattern.permute.xlu0 0
    %88 = vperm.xlu0 %87, %v78
    %v89 = vpop.permute.xlu0 %88
    %92 = vset.pattern.permute.xlu0 0
    %93 = vperm.xlu0 %92, %v79
    %v94 = vpop.permute.xlu0 %93
    %97 = vset.pattern.permute.xlu0 0
    %98 = vperm.xlu0 %97, %v80
    %v99 = vpop.permute.xlu0 %98
    %v101 = vadd.f32 %v73, %v84
    %v102 = vadd.f32 %v74, %v89
    %v103 = vadd.f32 %v75, %v94
    %v104 = vadd.f32 %v76, %v99
    %v105 = vmax.f32 %v101, 0.0
    %v106 = vmax.f32 %v102, 0.0
    %v107 = vmax.f32 %v103, 0.0
    %v108 = vmax.f32 %v104, 0.0
    %v109 = vld [vmem:[%s3] sm:$0xf]
    %v110 = vld [vmem:[%s3 + $0x4] sm:$0xf]
    %v111 = vld [vmem:[%s3 + $0x8] sm:$0xf]
    %v112 = vld [vmem:[%s3 + $0xc] sm:$0xf]
    %v113 = vld [vmem:[%s3 + $0x10] sm:$0xf]
    %v114 = vld [vmem:[%s3 + $0x14] sm:$0xf]
    %v115 = vld [vmem:[%s3 + $0x18] sm:$0xf]
    %v116 = vld [vmem:[%s3 + $0x1c] sm:$0xf]
    %v117 = vld [vmem:[%s3 + $0x20] sm:$0xf]
    %v118 = vld [vmem:[%s3 + $0x24] sm:$0xf]
    %v119 = vld [vmem:[%s3 + $0x28] sm:$0xf]
    %v120 = vld [vmem:[%s3 + $0x2c] sm:$0xf]
    %v121 = vld [vmem:[%s3 + $0x30] sm:$0xf]
    %v122 = vld [vmem:[%s3 + $0x34] sm:$0xf]
    %v123 = vld [vmem:[%s3 + $0x38] sm:$0xf]
    %v124 = vld [vmem:[%s3 + $0x3c] sm:$0xf]
    %v125 = vpack.c.bf16 %v106, %v105
    %v126 = vpack.c.bf16 %v108, %v107
    %v127 = vld [vmem:[%s5] sm:$0xff]
    %v128 = vld [vmem:[%s5 + $0x8] sm:$0xff]
    %v129 = vld [vmem:[%s5 + $0x10] sm:$0xff]
    %v130 = vld [vmem:[%s5 + $0x18] sm:$0xff]
    %v131 = vld [vmem:[%s5 + $0x20] sm:$0xff]
    %v132 = vld [vmem:[%s5 + $0x28] sm:$0xff]
    %v133 = vld [vmem:[%s5 + $0x30] sm:$0xff]
    %v134 = vld [vmem:[%s5 + $0x38] sm:$0xff]
    %v135 = vld [vmem:[%s5 + $0x40] sm:$0xff]
    %v136 = vld [vmem:[%s5 + $0x48] sm:$0xff]
    %v137 = vld [vmem:[%s5 + $0x50] sm:$0xff]
    %v138 = vld [vmem:[%s5 + $0x58] sm:$0xff]
    %v139 = vld [vmem:[%s5 + $0x60] sm:$0xff]
    %v140 = vld [vmem:[%s5 + $0x68] sm:$0xff]
    %v141 = vld [vmem:[%s5 + $0x70] sm:$0xff]
    %v142 = vld [vmem:[%s5 + $0x78] sm:$0xff]
    %144 = vset.pattern.permute.xlu0 0
    %145 = vperm.xlu0 %144, %v127
    %v146 = vpop.permute.xlu0 %145
    %149 = vset.pattern.permute.xlu0 0
    %150 = vperm.xlu0 %149, %v128
    %v151 = vpop.permute.xlu0 %150
    %154 = vset.pattern.permute.xlu0 0
    %155 = vperm.xlu0 %154, %v129
    %v156 = vpop.permute.xlu0 %155
    %159 = vset.pattern.permute.xlu0 0
    %160 = vperm.xlu0 %159, %v130
    %v161 = vpop.permute.xlu0 %160
    %164 = vset.pattern.permute.xlu0 0
    %165 = vperm.xlu0 %164, %v131
    %v166 = vpop.permute.xlu0 %165
    %169 = vset.pattern.permute.xlu0 0
    %170 = vperm.xlu0 %169, %v132
    %v171 = vpop.permute.xlu0 %170
    %174 = vset.pattern.permute.xlu0 0
    %175 = vperm.xlu0 %174, %v133
    %v176 = vpop.permute.xlu0 %175
    %179 = vset.pattern.permute.xlu0 0
    %180 = vperm.xlu0 %179, %v134
    %v181 = vpop.permute.xlu0 %180
    %184 = vset.pattern.permute.xlu0 0
    %185 = vperm.xlu0 %184, %v135
    %v186 = vpop.permute.xlu0 %185
    %189 = vset.pattern.permute.xlu0 0
    %190 = vperm.xlu0 %189, %v136
    %v191 = vpop.permute.xlu0 %190
    %194 = vset.pattern.permute.xlu0 0
    %195 = vperm.xlu0 %194, %v137
    %v196 = vpop.permute.xlu0 %195
    %199 = vset.pattern.permute.xlu0 0
    %200 = vperm.xlu0 %199, %v138
    %v201 = vpop.permute.xlu0 %200
    %204 = vset.pattern.permute.xlu0 0
    %205 = vperm.xlu0 %204, %v139
    %v206 = vpop.permute.xlu0 %205
    %209 = vset.pattern.permute.xlu0 0
    %210 = vperm.xlu0 %209, %v140
    %v211 = vpop.permute.xlu0 %210
    %214 = vset.pattern.permute.xlu0 0
    %215 = vperm.xlu0 %214, %v141
    %v216 = vpop.permute.xlu0 %215
    %219 = vset.pattern.permute.xlu0 0
    %220 = vperm.xlu0 %219, %v142
    %v221 = vpop.permute.xlu0 %220
    %v239 = vunpack.c.l.b16 %v109
    %v240 = vunpack.c.l.b16 %v110
    %v241 = vunpack.c.l.b16 %v111
    %v242 = vunpack.c.l.b16 %v112
    %v243 = vunpack.c.l.b16 %v113
    %v244 = vunpack.c.l.b16 %v114
    %v245 = vunpack.c.l.b16 %v115
    %v246 = vunpack.c.l.b16 %v116
    %v247 = vunpack.c.l.b16 %v117
    %v248 = vunpack.c.l.b16 %v118
    %v249 = vunpack.c.l.b16 %v119
    %v250 = vunpack.c.l.b16 %v120
    %v251 = vunpack.c.l.b16 %v121
    %v252 = vunpack.c.l.b16 %v122
    %v253 = vunpack.c.l.b16 %v123
    %v254 = vunpack.c.l.b16 %v124
    %v255 = vpack.c.b16 %v240, %v239
    %v256 = vpack.c.b16 %v242, %v241
    %v257 = vpack.c.b16 %v244, %v243
    %v258 = vpack.c.b16 %v246, %v245
    %v259 = vpack.c.b16 %v248, %v247
    %v260 = vpack.c.b16 %v250, %v249
    %v261 = vpack.c.b16 %v252, %v251
    %v262 = vpack.c.b16 %v254, %v253
    %vm263 = vcmask 261120
    %v265 = vsel %vm263, %v255, 0
    %v268 = vsel %vm263, %v256, 0
    %v271 = vsel %vm263, %v257, 0
    %v274 = vsel %vm263, %v258, 0
    %v277 = vsel %vm263, %v259, 0
    %v280 = vsel %vm263, %v260, 0
    %v283 = vsel %vm263, %v261, 0
    %v286 = vsel %vm263, %v262, 0
    %288 = vmatprep.subr.bf16.mxu0 0
    %289 = vmatpush1.bf16.msra.mxu0 0
    %290 = vmatprep.subr.bf16.mxu0 0
    %291 = vmatpush1.bf16.msra.mxu0 0
    %292 = vmatprep.subr.bf16.mxu0 0
    %293 = vmatpush1.bf16.msra.mxu0 0
    %294 = vmatprep.subr.bf16.mxu0 0
    %295 = vmatpush1.bf16.msra.mxu0 0
    %296 = vmatprep.subr.bf16.mxu0 0
    %297 = vmatpush1.bf16.msra.mxu0 0
    %298 = vmatprep.subr.bf16.mxu0 0
    %299 = vmatpush1.bf16.msra.mxu0 0
    %300 = vmatprep.subr.bf16.mxu0 0
    %301 = vmatpush1.bf16.msra.mxu0 %v126
    %302 = vmatprep.subr.bf16.mxu0 0
    %303 = vmatpush1.bf16.msra.mxu0 %v125
    %304 = vmatprep.subr.bf16.mxu0 0
    %305 = vmatpush2.bf16.msra.mxu0 0
    %306 = vmatprep.subr.bf16.mxu0 0
    %307 = vmatpush2.bf16.msra.mxu0 0
    %308 = vmatprep.subr.bf16.mxu0 0
    %309 = vmatpush2.bf16.msra.mxu0 0
    %310 = vmatprep.subr.bf16.mxu0 0
    %311 = vmatpush2.bf16.msra.mxu0 0
    %312 = vmatprep.subr.bf16.mxu0 0
    %313 = vmatpush2.bf16.msra.mxu0 0
    %314 = vmatprep.subr.bf16.mxu0 0
    %315 = vmatpush2.bf16.msra.mxu0 0
    %316 = vmatprep.subr.bf16.mxu0 0
    %317 = vmatpush2.bf16.msra.mxu0 0
    %318 = vmatprep.subr.bf16.mxu0 0
    %319 = vmatpush2.bf16.msra.mxu0 0
    %320 = vmatprep.mubr.bf16.mxu0 0
    %321 = vmatmul.mubr.bf16.gmra.mxu0 %v265
    %v322 = vpop.f32.mrf.mxu0
    %v323 = vadd.f32 %v146, %v322
    %v324 = vpop.f32.mrf.mxu0
    %v325 = vpop.f32.mrf.mxu0
    %v326 = vadd.f32 %v151, %v325
    %v327 = vpop.f32.mrf.mxu0
    %328 = vmatprep.mubr.bf16.mxu0 0
    %329 = vmatmul.mubr.bf16.gmra.mxu0 %v268
    %v330 = vpop.f32.mrf.mxu0
    %v331 = vadd.f32 %v156, %v330
    %v332 = vpop.f32.mrf.mxu0
    %v333 = vpop.f32.mrf.mxu0
    %v334 = vadd.f32 %v161, %v333
    %v335 = vpop.f32.mrf.mxu0
    %336 = vmatprep.mubr.bf16.mxu0 0
    %337 = vmatmul.mubr.bf16.gmra.mxu0 %v271
    %v338 = vpop.f32.mrf.mxu0
    %v339 = vadd.f32 %v166, %v338
    %v340 = vpop.f32.mrf.mxu0
    %v341 = vpop.f32.mrf.mxu0
    %v342 = vadd.f32 %v171, %v341
    %v343 = vpop.f32.mrf.mxu0
    %344 = vmatprep.mubr.bf16.mxu0 0
    %345 = vmatmul.mubr.bf16.gmra.mxu0 %v274
    %v346 = vpop.f32.mrf.mxu0
    %v347 = vadd.f32 %v176, %v346
    %v348 = vpop.f32.mrf.mxu0
    %v349 = vpop.f32.mrf.mxu0
    %v350 = vadd.f32 %v181, %v349
    %v351 = vpop.f32.mrf.mxu0
    %352 = vmatprep.mubr.bf16.mxu0 0
    %353 = vmatmul.mubr.bf16.gmra.mxu0 %v277
    %v354 = vpop.f32.mrf.mxu0
    %v355 = vadd.f32 %v186, %v354
    %v356 = vpop.f32.mrf.mxu0
    %v357 = vpop.f32.mrf.mxu0
    %v358 = vadd.f32 %v191, %v357
    %v359 = vpop.f32.mrf.mxu0
    %360 = vmatprep.mubr.bf16.mxu0 0
    %361 = vmatmul.mubr.bf16.gmra.mxu0 %v280
    %v362 = vpop.f32.mrf.mxu0
    %v363 = vadd.f32 %v196, %v362
    %v364 = vpop.f32.mrf.mxu0
    %v365 = vpop.f32.mrf.mxu0
    %v366 = vadd.f32 %v201, %v365
    %v367 = vpop.f32.mrf.mxu0
    %368 = vmatprep.mubr.bf16.mxu0 0
    %369 = vmatmul.mubr.bf16.gmra.mxu0 %v283
    %v370 = vpop.f32.mrf.mxu0
    %v371 = vadd.f32 %v206, %v370
    %v372 = vpop.f32.mrf.mxu0
    %v373 = vpop.f32.mrf.mxu0
    %v374 = vadd.f32 %v211, %v373
    %v375 = vpop.f32.mrf.mxu0
    %376 = vmatprep.mubr.bf16.mxu0 0
    %377 = vmatmul.mubr.bf16.gmra.mxu0 %v286
    %v378 = vpop.f32.mrf.mxu0
    %v379 = vadd.f32 %v216, %v378
    %v380 = vpop.f32.mrf.mxu0
    %v381 = vpop.f32.mrf.mxu0
    %v382 = vadd.f32 %v221, %v381
    %v383 = vpop.f32.mrf.mxu0
    %384 = vdwg.mxu0
    %v385 = vld [vmem:[%s4] sm:$0xf]
    %v386 = vld [vmem:[%s4 + $0x4] sm:$0xf]
    %v387 = vld [vmem:[%s4 + $0x8] sm:$0xf]
    %v388 = vld [vmem:[%s4 + $0xc] sm:$0xf]
    %v389 = vld [vmem:[%s4 + $0x10] sm:$0xf]
    %v390 = vld [vmem:[%s4 + $0x14] sm:$0xf]
    %v391 = vld [vmem:[%s4 + $0x18] sm:$0xf]
    %v392 = vld [vmem:[%s4 + $0x1c] sm:$0xf]
    %v393 = vld [vmem:[%s4 + $0x20] sm:$0xf]
    %v394 = vld [vmem:[%s4 + $0x24] sm:$0xf]
    %v395 = vld [vmem:[%s4 + $0x28] sm:$0xf]
    %v396 = vld [vmem:[%s4 + $0x2c] sm:$0xf]
    %v397 = vld [vmem:[%s4 + $0x30] sm:$0xf]
    %v398 = vld [vmem:[%s4 + $0x34] sm:$0xf]
    %v399 = vld [vmem:[%s4 + $0x38] sm:$0xf]
    %v400 = vld [vmem:[%s4 + $0x3c] sm:$0xf]
    %v401 = vld [vmem:[%s6] sm:$0xf]
    %v402 = vld [vmem:[%s6 + $0x4] sm:$0xf]
    %v403 = vld [vmem:[%s6 + $0x8] sm:$0xf]
    %v404 = vld [vmem:[%s6 + $0xc] sm:$0xf]
    %v405 = vld [vmem:[%s6 + $0x10] sm:$0xf]
    %v406 = vld [vmem:[%s6 + $0x14] sm:$0xf]
    %v407 = vld [vmem:[%s6 + $0x18] sm:$0xf]
    %v408 = vld [vmem:[%s6 + $0x1c] sm:$0xf]
    %v409 = vld [vmem:[%s6 + $0x20] sm:$0xf]
    %v410 = vld [vmem:[%s6 + $0x24] sm:$0xf]
    %v411 = vld [vmem:[%s6 + $0x28] sm:$0xf]
    %v412 = vld [vmem:[%s6 + $0x2c] sm:$0xf]
    %v413 = vld [vmem:[%s6 + $0x30] sm:$0xf]
    %v414 = vld [vmem:[%s6 + $0x34] sm:$0xf]
    %v415 = vld [vmem:[%s6 + $0x38] sm:$0xf]
    %v416 = vld [vmem:[%s6 + $0x3c] sm:$0xf]
    %v417 = vld [vmem:[%s7] sm:$0xf]
    %v418 = vld [vmem:[%s7 + $0x4] sm:$0xf]
    %v419 = vld [vmem:[%s7 + $0x8] sm:$0xf]
    %v420 = vld [vmem:[%s7 + $0xc] sm:$0xf]
    %v421 = vld [vmem:[%s7 + $0x10] sm:$0xf]
    %v422 = vld [vmem:[%s7 + $0x14] sm:$0xf]
    %v423 = vld [vmem:[%s7 + $0x18] sm:$0xf]
    %v424 = vld [vmem:[%s7 + $0x1c] sm:$0xf]
    %v425 = vld [vmem:[%s7 + $0x20] sm:$0xf]
    %v426 = vld [vmem:[%s7 + $0x24] sm:$0xf]
    %v427 = vld [vmem:[%s7 + $0x28] sm:$0xf]
    %v428 = vld [vmem:[%s7 + $0x2c] sm:$0xf]
    %v429 = vld [vmem:[%s7 + $0x30] sm:$0xf]
    %v430 = vld [vmem:[%s7 + $0x34] sm:$0xf]
    %v431 = vld [vmem:[%s7 + $0x38] sm:$0xf]
    %v432 = vld [vmem:[%s7 + $0x3c] sm:$0xf]
    %v433 = vld [vmem:[%s8] sm:$0xff]
    %v434 = vld [vmem:[%s8 + $0x8] sm:$0xff]
    %v435 = vld [vmem:[%s8 + $0x10] sm:$0xff]
    %v436 = vld [vmem:[%s8 + $0x18] sm:$0xff]
    %v437 = vld [vmem:[%s8 + $0x20] sm:$0xff]
    %v438 = vld [vmem:[%s8 + $0x28] sm:$0xff]
    %v439 = vld [vmem:[%s8 + $0x30] sm:$0xff]
    %v440 = vld [vmem:[%s8 + $0x38] sm:$0xff]
    %v441 = vld [vmem:[%s8 + $0x40] sm:$0xff]
    %v442 = vld [vmem:[%s8 + $0x48] sm:$0xff]
    %v443 = vld [vmem:[%s8 + $0x50] sm:$0xff]
    %v444 = vld [vmem:[%s8 + $0x58] sm:$0xff]
    %v445 = vld [vmem:[%s8 + $0x60] sm:$0xff]
    %v446 = vld [vmem:[%s8 + $0x68] sm:$0xff]
    %v447 = vld [vmem:[%s8 + $0x70] sm:$0xff]
    %v448 = vld [vmem:[%s8 + $0x78] sm:$0xff]
    %v465 = vunpack.c.l.b16 %v385
    %v466 = vunpack.c.l.b16 %v386
    %v467 = vunpack.c.l.b16 %v387
    %v468 = vunpack.c.l.b16 %v388
    %v469 = vunpack.c.l.b16 %v389
    %v470 = vunpack.c.l.b16 %v390
    %v471 = vunpack.c.l.b16 %v391
    %v472 = vunpack.c.l.b16 %v392
    %v473 = vunpack.c.l.b16 %v393
    %v474 = vunpack.c.l.b16 %v394
    %v475 = vunpack.c.l.b16 %v395
    %v476 = vunpack.c.l.b16 %v396
    %v477 = vunpack.c.l.b16 %v397
    %v478 = vunpack.c.l.b16 %v398
    %v479 = vunpack.c.l.b16 %v399
    %v480 = vunpack.c.l.b16 %v400
    %v481 = vpack.c.b16 %v466, %v465
    %v482 = vpack.c.b16 %v468, %v467
    %v483 = vpack.c.b16 %v470, %v469
    %v484 = vpack.c.b16 %v472, %v471
    %v485 = vpack.c.b16 %v474, %v473
    %v486 = vpack.c.b16 %v476, %v475
    %v487 = vpack.c.b16 %v478, %v477
    %v488 = vpack.c.b16 %v480, %v479
    %v490 = vsel %vm263, %v481, 0
    %v493 = vsel %vm263, %v482, 0
    %v496 = vsel %vm263, %v483, 0
    %v499 = vsel %vm263, %v484, 0
    %v502 = vsel %vm263, %v485, 0
    %v505 = vsel %vm263, %v486, 0
    %v508 = vsel %vm263, %v487, 0
    %v511 = vsel %vm263, %v488, 0
    %513 = vmatprep.subr.bf16.mxu0 0
    %514 = vmatpush1.bf16.msra.mxu0 0
    %515 = vmatprep.subr.bf16.mxu0 0
    %516 = vmatpush1.bf16.msra.mxu0 0
    %517 = vmatprep.subr.bf16.mxu0 0
    %518 = vmatpush1.bf16.msra.mxu0 0
    %519 = vmatprep.subr.bf16.mxu0 0
    %520 = vmatpush1.bf16.msra.mxu0 0
    %521 = vmatprep.subr.bf16.mxu0 0
    %522 = vmatpush1.bf16.msra.mxu0 0
    %523 = vmatprep.subr.bf16.mxu0 0
    %524 = vmatpush1.bf16.msra.mxu0 0
    %525 = vmatprep.subr.bf16.mxu0 0
    %526 = vmatpush1.bf16.msra.mxu0 0
    %527 = vmatprep.subr.bf16.mxu0 0
    %528 = vmatpush1.bf16.msra.mxu0 0
    %529 = vmatprep.subr.bf16.mxu0 0
    %530 = vmatpush2.bf16.msra.mxu0 0
    %531 = vmatprep.subr.bf16.mxu0 0
    %532 = vmatpush2.bf16.msra.mxu0 0
    %533 = vmatprep.subr.bf16.mxu0 0
    %534 = vmatpush2.bf16.msra.mxu0 0
    %535 = vmatprep.subr.bf16.mxu0 0
    %536 = vmatpush2.bf16.msra.mxu0 0
    %537 = vmatprep.subr.bf16.mxu0 0
    %538 = vmatpush2.bf16.msra.mxu0 0
    %539 = vmatprep.subr.bf16.mxu0 0
    %540 = vmatpush2.bf16.msra.mxu0 0
    %541 = vmatprep.subr.bf16.mxu0 0
    %542 = vmatpush2.bf16.msra.mxu0 0
    %543 = vmatprep.subr.bf16.mxu0 0
    %544 = vmatpush2.bf16.msra.mxu0 0
    %545 = vmatprep.mubr.bf16.mxu0 0
    %546 = vmatmul.mubr.bf16.gmra.mxu0 %v490
    %v547 = vpop.f32.mrf.mxu0
    %v548 = vadd.f32 0.0, %v547
    %v549 = vpop.f32.mrf.mxu0
    %v550 = vpop.f32.mrf.mxu0
    %v551 = vadd.f32 0.0, %v550
    %v552 = vpop.f32.mrf.mxu0
    %553 = vmatprep.mubr.bf16.mxu0 0
    %554 = vmatmul.mubr.bf16.gmra.mxu0 %v493
    %v555 = vpop.f32.mrf.mxu0
    %v556 = vadd.f32 0.0, %v555
    %v557 = vpop.f32.mrf.mxu0
    %v558 = vpop.f32.mrf.mxu0
    %v559 = vadd.f32 0.0, %v558
    %v560 = vpop.f32.mrf.mxu0
    %561 = vmatprep.mubr.bf16.mxu0 0
    %562 = vmatmul.mubr.bf16.gmra.mxu0 %v496
    %v563 = vpop.f32.mrf.mxu0
    %v564 = vadd.f32 0.0, %v563
    %v565 = vpop.f32.mrf.mxu0
    %v566 = vpop.f32.mrf.mxu0
    %v567 = vadd.f32 0.0, %v566
    %v568 = vpop.f32.mrf.mxu0
    %569 = vmatprep.mubr.bf16.mxu0 0
    %570 = vmatmul.mubr.bf16.gmra.mxu0 %v499
    %v571 = vpop.f32.mrf.mxu0
    %v572 = vadd.f32 0.0, %v571
    %v573 = vpop.f32.mrf.mxu0
    %v574 = vpop.f32.mrf.mxu0
    %v575 = vadd.f32 0.0, %v574
    %v576 = vpop.f32.mrf.mxu0
    %577 = vmatprep.mubr.bf16.mxu0 0
    %578 = vmatmul.mubr.bf16.gmra.mxu0 %v502
    %v579 = vpop.f32.mrf.mxu0
    %v580 = vadd.f32 0.0, %v579
    %v581 = vpop.f32.mrf.mxu0
    %v582 = vpop.f32.mrf.mxu0
    %v583 = vadd.f32 0.0, %v582
    %v584 = vpop.f32.mrf.mxu0
    %585 = vmatprep.mubr.bf16.mxu0 0
    %586 = vmatmul.mubr.bf16.gmra.mxu0 %v505
    %v587 = vpop.f32.mrf.mxu0
    %v588 = vadd.f32 0.0, %v587
    %v589 = vpop.f32.mrf.mxu0
    %v590 = vpop.f32.mrf.mxu0
    %v591 = vadd.f32 0.0, %v590
    %v592 = vpop.f32.mrf.mxu0
    %593 = vmatprep.mubr.bf16.mxu0 0
    %594 = vmatmul.mubr.bf16.gmra.mxu0 %v508
    %v595 = vpop.f32.mrf.mxu0
    %v596 = vadd.f32 0.0, %v595
    %v597 = vpop.f32.mrf.mxu0
    %v598 = vpop.f32.mrf.mxu0
    %v599 = vadd.f32 0.0, %v598
    %v600 = vpop.f32.mrf.mxu0
    %601 = vmatprep.mubr.bf16.mxu0 0
    %602 = vmatmul.mubr.bf16.gmra.mxu0 %v511
    %v603 = vpop.f32.mrf.mxu0
    %v604 = vadd.f32 0.0, %v603
    %v605 = vpop.f32.mrf.mxu0
    %v606 = vpop.f32.mrf.mxu0
    %v607 = vadd.f32 0.0, %v606
    %v608 = vpop.f32.mrf.mxu0
    %609 = vdwg.mxu0
    %v610 = vadd.f32 %v323, %v548
    %v611 = vadd.f32 %v326, %v551
    %v612 = vadd.f32 %v331, %v556
    %v613 = vadd.f32 %v334, %v559
    %v614 = vadd.f32 %v339, %v564
    %v615 = vadd.f32 %v342, %v567
    %v616 = vadd.f32 %v347, %v572
    %v617 = vadd.f32 %v350, %v575
    %v618 = vadd.f32 %v355, %v580
    %v619 = vadd.f32 %v358, %v583
    %v620 = vadd.f32 %v363, %v588
    %v621 = vadd.f32 %v366, %v591
    %v622 = vadd.f32 %v371, %v596
    %v623 = vadd.f32 %v374, %v599
    %v624 = vadd.f32 %v379, %v604
    %v625 = vadd.f32 %v382, %v607
    %v626 = vxor.u32 %v610, 2147483648
    %v627 = vxor.u32 %v611, 2147483648
    %v628 = vxor.u32 %v612, 2147483648
    %v629 = vxor.u32 %v613, 2147483648
    %v630 = vxor.u32 %v614, 2147483648
    %v631 = vxor.u32 %v615, 2147483648
    %v632 = vxor.u32 %v616, 2147483648
    %v633 = vxor.u32 %v617, 2147483648
    %v634 = vmul.f32 %v626, 1.442695
    %v635 = vpow.pop %v634
    %v636 = vmul.f32 %v627, 1.442695
    %v637 = vpow.pop %v636
    %v638 = vmul.f32 %v628, 1.442695
    %v639 = vpow.pop %v638
    %v640 = vmul.f32 %v629, 1.442695
    %v641 = vpow.pop %v640
    %v642 = vmul.f32 %v630, 1.442695
    %v643 = vpow.pop %v642
    %v644 = vmul.f32 %v631, 1.442695
    %v645 = vpow.pop %v644
    %v646 = vmul.f32 %v632, 1.442695
    %v647 = vpow.pop %v646
    %v648 = vmul.f32 %v633, 1.442695
    %v649 = vpow.pop %v648
    %v650 = vadd.f32 %v635, 1.0
    %v651 = vadd.f32 %v637, 1.0
    %v652 = vadd.f32 %v639, 1.0
    %v653 = vadd.f32 %v641, 1.0
    %v654 = vadd.f32 %v643, 1.0
    %v655 = vadd.f32 %v645, 1.0
    %v656 = vadd.f32 %v647, 1.0
    %v657 = vadd.f32 %v649, 1.0
    %v658 = vrcp.pop %v650
    %v659 = vmul.f32 1.0, %v658
    %v660 = vrcp.pop %v651
    %v661 = vmul.f32 1.0, %v660
    %v662 = vrcp.pop %v652
    %v663 = vmul.f32 1.0, %v662
    %v664 = vrcp.pop %v653
    %v665 = vmul.f32 1.0, %v664
    %v666 = vrcp.pop %v654
    %v667 = vmul.f32 1.0, %v666
    %v668 = vrcp.pop %v655
    %v669 = vmul.f32 1.0, %v668
    %v670 = vrcp.pop %v656
    %v671 = vmul.f32 1.0, %v670
    %v672 = vrcp.pop %v657
    %v673 = vmul.f32 1.0, %v672
    %v674 = vtanh.pop %v618
    %v675 = vtanh.pop %v619
    %v676 = vtanh.pop %v620
    %v677 = vtanh.pop %v621
    %v678 = vxor.u32 %v622, 2147483648
    %v679 = vxor.u32 %v623, 2147483648
    %v680 = vxor.u32 %v624, 2147483648
    %v681 = vxor.u32 %v625, 2147483648
    %v682 = vmul.f32 %v678, 1.442695
    %v683 = vpow.pop %v682
    %v684 = vmul.f32 %v679, 1.442695
    %v685 = vpow.pop %v684
    %v686 = vmul.f32 %v680, 1.442695
    %v687 = vpow.pop %v686
    %v688 = vmul.f32 %v681, 1.442695
    %v689 = vpow.pop %v688
    %v690 = vadd.f32 %v683, 1.0
    %v691 = vadd.f32 %v685, 1.0
    %v692 = vadd.f32 %v687, 1.0
    %v693 = vadd.f32 %v689, 1.0
    %v694 = vrcp.pop %v690
    %v695 = vmul.f32 1.0, %v694
    %v696 = vrcp.pop %v691
    %v697 = vmul.f32 1.0, %v696
    %v698 = vrcp.pop %v692
    %v699 = vmul.f32 1.0, %v698
    %v700 = vrcp.pop %v693
    %v701 = vmul.f32 1.0, %v700
    %v702 = vmul.f32 %v667, 0.0
    %v703 = vmul.f32 %v669, 0.0
    %v704 = vmul.f32 %v671, 0.0
    %v705 = vmul.f32 %v673, 0.0
    %v706 = vmul.f32 %v659, %v674
    %v707 = vmul.f32 %v661, %v675
    %v708 = vmul.f32 %v663, %v676
    %v709 = vmul.f32 %v665, %v677
    %v710 = vadd.f32 %v702, %v706
    %v711 = vadd.f32 %v703, %v707
    %v712 = vadd.f32 %v704, %v708
    %v713 = vadd.f32 %v705, %v709
    %v714 = vtanh.pop %v710
    %v715 = vtanh.pop %v711
    %v716 = vtanh.pop %v712
    %v717 = vtanh.pop %v713
    %v718 = vmul.f32 %v695, %v714
    %v719 = vmul.f32 %v697, %v715
    %v720 = vmul.f32 %v699, %v716
    %v721 = vmul.f32 %v701, %v717
    %v722 = vpack.c.bf16 %v719, %v718
    %v723 = vpack.c.bf16 %v721, %v720
    %v740 = vunpack.c.l.b16 %v417
    %v741 = vunpack.c.l.b16 %v418
    %v742 = vunpack.c.l.b16 %v419
    %v743 = vunpack.c.l.b16 %v420
    %v744 = vunpack.c.l.b16 %v421
    %v745 = vunpack.c.l.b16 %v422
    %v746 = vunpack.c.l.b16 %v423
    %v747 = vunpack.c.l.b16 %v424
    %v748 = vunpack.c.l.b16 %v425
    %v749 = vunpack.c.l.b16 %v426
    %v750 = vunpack.c.l.b16 %v427
    %v751 = vunpack.c.l.b16 %v428
    %v752 = vunpack.c.l.b16 %v429
    %v753 = vunpack.c.l.b16 %v430
    %v754 = vunpack.c.l.b16 %v431
    %v755 = vunpack.c.l.b16 %v432
    %v756 = vpack.c.b16 %v741, %v740
    %v757 = vpack.c.b16 %v743, %v742
    %v758 = vpack.c.b16 %v745, %v744
    %v759 = vpack.c.b16 %v747, %v746
    %v760 = vpack.c.b16 %v749, %v748
    %v761 = vpack.c.b16 %v751, %v750
    %v762 = vpack.c.b16 %v753, %v752
    %v763 = vpack.c.b16 %v755, %v754
    %v765 = vsel %vm263, %v756, 0
    %v768 = vsel %vm263, %v757, 0
    %v771 = vsel %vm263, %v758, 0
    %v774 = vsel %vm263, %v759, 0
    %v777 = vsel %vm263, %v760, 0
    %v780 = vsel %vm263, %v761, 0
    %v783 = vsel %vm263, %v762, 0
    %v786 = vsel %vm263, %v763, 0
    %788 = vmatprep.subr.bf16.mxu0 0
    %789 = vmatpush1.bf16.msra.mxu0 0
    %790 = vmatprep.subr.bf16.mxu0 0
    %791 = vmatpush1.bf16.msra.mxu0 0
    %792 = vmatprep.subr.bf16.mxu0 0
    %793 = vmatpush1.bf16.msra.mxu0 0
    %794 = vmatprep.subr.bf16.mxu0 0
    %795 = vmatpush1.bf16.msra.mxu0 0
    %796 = vmatprep.subr.bf16.mxu0 0
    %797 = vmatpush1.bf16.msra.mxu0 0
    %798 = vmatprep.subr.bf16.mxu0 0
    %799 = vmatpush1.bf16.msra.mxu0 0
    %800 = vmatprep.subr.bf16.mxu0 0
    %801 = vmatpush1.bf16.msra.mxu0 0
    %802 = vmatprep.subr.bf16.mxu0 0
    %803 = vmatpush1.bf16.msra.mxu0 0
    %804 = vmatprep.subr.bf16.mxu0 0
    %805 = vmatpush2.bf16.msra.mxu0 0
    %806 = vmatprep.subr.bf16.mxu0 0
    %807 = vmatpush2.bf16.msra.mxu0 0
    %808 = vmatprep.subr.bf16.mxu0 0
    %809 = vmatpush2.bf16.msra.mxu0 0
    %810 = vmatprep.subr.bf16.mxu0 0
    %811 = vmatpush2.bf16.msra.mxu0 0
    %812 = vmatprep.subr.bf16.mxu0 0
    %813 = vmatpush2.bf16.msra.mxu0 0
    %814 = vmatprep.subr.bf16.mxu0 0
    %815 = vmatpush2.bf16.msra.mxu0 0
    %816 = vmatprep.subr.bf16.mxu0 0
    %817 = vmatpush2.bf16.msra.mxu0 0
    %818 = vmatprep.subr.bf16.mxu0 0
    %819 = vmatpush2.bf16.msra.mxu0 0
    %820 = vmatprep.mubr.bf16.mxu0 0
    %821 = vmatmul.mubr.bf16.gmra.mxu0 %v765
    %v822 = vpop.f32.mrf.mxu0
    %v823 = vadd.f32 0.0, %v822
    %v824 = vpop.f32.mrf.mxu0
    %v825 = vpop.f32.mrf.mxu0
    %v826 = vadd.f32 0.0, %v825
    %v827 = vpop.f32.mrf.mxu0
    %828 = vmatprep.mubr.bf16.mxu0 0
    %829 = vmatmul.mubr.bf16.gmra.mxu0 %v768
    %v830 = vpop.f32.mrf.mxu0
    %v831 = vadd.f32 0.0, %v830
    %v832 = vpop.f32.mrf.mxu0
    %v833 = vpop.f32.mrf.mxu0
    %v834 = vadd.f32 0.0, %v833
    %v835 = vpop.f32.mrf.mxu0
    %836 = vmatprep.mubr.bf16.mxu0 0
    %837 = vmatmul.mubr.bf16.gmra.mxu0 %v771
    %v838 = vpop.f32.mrf.mxu0
    %v839 = vadd.f32 0.0, %v838
    %v840 = vpop.f32.mrf.mxu0
    %v841 = vpop.f32.mrf.mxu0
    %v842 = vadd.f32 0.0, %v841
    %v843 = vpop.f32.mrf.mxu0
    %844 = vmatprep.mubr.bf16.mxu0 0
    %845 = vmatmul.mubr.bf16.gmra.mxu0 %v774
    %v846 = vpop.f32.mrf.mxu0
    %v847 = vadd.f32 0.0, %v846
    %v848 = vpop.f32.mrf.mxu0
    %v849 = vpop.f32.mrf.mxu0
    %v850 = vadd.f32 0.0, %v849
    %v851 = vpop.f32.mrf.mxu0
    %852 = vmatprep.mubr.bf16.mxu0 0
    %853 = vmatmul.mubr.bf16.gmra.mxu0 %v777
    %v854 = vpop.f32.mrf.mxu0
    %v855 = vadd.f32 0.0, %v854
    %v856 = vpop.f32.mrf.mxu0
    %v857 = vpop.f32.mrf.mxu0
    %v858 = vadd.f32 0.0, %v857
    %v859 = vpop.f32.mrf.mxu0
    %860 = vmatprep.mubr.bf16.mxu0 0
    %861 = vmatmul.mubr.bf16.gmra.mxu0 %v780
    %v862 = vpop.f32.mrf.mxu0
    %v863 = vadd.f32 0.0, %v862
    %v864 = vpop.f32.mrf.mxu0
    %v865 = vpop.f32.mrf.mxu0
    %v866 = vadd.f32 0.0, %v865
    %v867 = vpop.f32.mrf.mxu0
    %868 = vmatprep.mubr.bf16.mxu0 0
    %869 = vmatmul.mubr.bf16.gmra.mxu0 %v783
    %v870 = vpop.f32.mrf.mxu0
    %v871 = vadd.f32 0.0, %v870
    %v872 = vpop.f32.mrf.mxu0
    %v873 = vpop.f32.mrf.mxu0
    %v874 = vadd.f32 0.0, %v873
    %v875 = vpop.f32.mrf.mxu0
    %876 = vmatprep.mubr.bf16.mxu0 0
    %877 = vmatmul.mubr.bf16.gmra.mxu0 %v786
    %v878 = vpop.f32.mrf.mxu0
    %v879 = vadd.f32 0.0, %v878
    %v880 = vpop.f32.mrf.mxu0
    %v881 = vpop.f32.mrf.mxu0
    %v882 = vadd.f32 0.0, %v881
    %v883 = vpop.f32.mrf.mxu0
    %884 = vdwg.mxu0
    %v901 = vunpack.c.l.b16 %v401
    %v902 = vunpack.c.l.b16 %v402
    %v903 = vunpack.c.l.b16 %v403
    %v904 = vunpack.c.l.b16 %v404
    %v905 = vunpack.c.l.b16 %v405
    %v906 = vunpack.c.l.b16 %v406
    %v907 = vunpack.c.l.b16 %v407
    %v908 = vunpack.c.l.b16 %v408
    %v909 = vunpack.c.l.b16 %v409
    %v910 = vunpack.c.l.b16 %v410
    %v911 = vunpack.c.l.b16 %v411
    %v912 = vunpack.c.l.b16 %v412
    %v913 = vunpack.c.l.b16 %v413
    %v914 = vunpack.c.l.b16 %v414
    %v915 = vunpack.c.l.b16 %v415
    %v916 = vunpack.c.l.b16 %v416
    %v917 = vpack.c.b16 %v902, %v901
    %v918 = vpack.c.b16 %v904, %v903
    %v919 = vpack.c.b16 %v906, %v905
    %v920 = vpack.c.b16 %v908, %v907
    %v921 = vpack.c.b16 %v910, %v909
    %v922 = vpack.c.b16 %v912, %v911
    %v923 = vpack.c.b16 %v914, %v913
    %v924 = vpack.c.b16 %v916, %v915
    %v926 = vsel %vm263, %v917, 0
    %v929 = vsel %vm263, %v918, 0
    %v932 = vsel %vm263, %v919, 0
    %v935 = vsel %vm263, %v920, 0
    %v938 = vsel %vm263, %v921, 0
    %v941 = vsel %vm263, %v922, 0
    %v944 = vsel %vm263, %v923, 0
    %v947 = vsel %vm263, %v924, 0
    %949 = vmatprep.subr.bf16.mxu0 0
    %950 = vmatpush1.bf16.msra.mxu0 0
    %951 = vmatprep.subr.bf16.mxu0 0
    %952 = vmatpush1.bf16.msra.mxu0 0
    %953 = vmatprep.subr.bf16.mxu0 0
    %954 = vmatpush1.bf16.msra.mxu0 0
    %955 = vmatprep.subr.bf16.mxu0 0
    %956 = vmatpush1.bf16.msra.mxu0 0
    %957 = vmatprep.subr.bf16.mxu0 0
    %958 = vmatpush1.bf16.msra.mxu0 0
    %959 = vmatprep.subr.bf16.mxu0 0
    %960 = vmatpush1.bf16.msra.mxu0 0
    %961 = vmatprep.subr.bf16.mxu0 0
    %962 = vmatpush1.bf16.msra.mxu0 %v723
    %963 = vmatprep.subr.bf16.mxu0 0
    %964 = vmatpush1.bf16.msra.mxu0 %v722
    %965 = vmatprep.subr.bf16.mxu0 0
    %966 = vmatpush2.bf16.msra.mxu0 0
    %967 = vmatprep.subr.bf16.mxu0 0
    %968 = vmatpush2.bf16.msra.mxu0 0
    %969 = vmatprep.subr.bf16.mxu0 0
    %970 = vmatpush2.bf16.msra.mxu0 0
    %971 = vmatprep.subr.bf16.mxu0 0
    %972 = vmatpush2.bf16.msra.mxu0 0
    %973 = vmatprep.subr.bf16.mxu0 0
    %974 = vmatpush2.bf16.msra.mxu0 0
    %975 = vmatprep.subr.bf16.mxu0 0
    %976 = vmatpush2.bf16.msra.mxu0 0
    %977 = vmatprep.subr.bf16.mxu0 0
    %978 = vmatpush2.bf16.msra.mxu0 0
    %979 = vmatprep.subr.bf16.mxu0 0
    %980 = vmatpush2.bf16.msra.mxu0 0
    %981 = vmatprep.mubr.bf16.mxu0 0
    %982 = vmatmul.mubr.bf16.gmra.mxu0 %v926
    %v983 = vpop.f32.mrf.mxu0
    %v984 = vadd.f32 %v823, %v983
    %v985 = vpop.f32.mrf.mxu0
    %v986 = vpop.f32.mrf.mxu0
    %v987 = vadd.f32 %v826, %v986
    %v988 = vpop.f32.mrf.mxu0
    %989 = vmatprep.mubr.bf16.mxu0 0
    %990 = vmatmul.mubr.bf16.gmra.mxu0 %v929
    %v991 = vpop.f32.mrf.mxu0
    %v992 = vadd.f32 %v831, %v991
    %v993 = vpop.f32.mrf.mxu0
    %v994 = vpop.f32.mrf.mxu0
    %v995 = vadd.f32 %v834, %v994
    %v996 = vpop.f32.mrf.mxu0
    %997 = vmatprep.mubr.bf16.mxu0 0
    %998 = vmatmul.mubr.bf16.gmra.mxu0 %v932
    %v999 = vpop.f32.mrf.mxu0
    %v1000 = vadd.f32 %v839, %v999
    %v1001 = vpop.f32.mrf.mxu0
    %v1002 = vpop.f32.mrf.mxu0
    %v1003 = vadd.f32 %v842, %v1002
    %v1004 = vpop.f32.mrf.mxu0
    %1005 = vmatprep.mubr.bf16.mxu0 0
    %1006 = vmatmul.mubr.bf16.gmra.mxu0 %v935
    %v1007 = vpop.f32.mrf.mxu0
    %v1008 = vadd.f32 %v847, %v1007
    %v1009 = vpop.f32.mrf.mxu0
    %v1010 = vpop.f32.mrf.mxu0
    %v1011 = vadd.f32 %v850, %v1010
    %v1012 = vpop.f32.mrf.mxu0
    %1013 = vmatprep.mubr.bf16.mxu0 0
    %1014 = vmatmul.mubr.bf16.gmra.mxu0 %v938
    %v1015 = vpop.f32.mrf.mxu0
    %v1016 = vadd.f32 %v855, %v1015
    %v1017 = vpop.f32.mrf.mxu0
    %v1018 = vpop.f32.mrf.mxu0
    %v1019 = vadd.f32 %v858, %v1018
    %v1020 = vpop.f32.mrf.mxu0
    %1021 = vmatprep.mubr.bf16.mxu0 0
    %1022 = vmatmul.mubr.bf16.gmra.mxu0 %v941
    %v1023 = vpop.f32.mrf.mxu0
    %v1024 = vadd.f32 %v863, %v1023
    %v1025 = vpop.f32.mrf.mxu0
    %v1026 = vpop.f32.mrf.mxu0
    %v1027 = vadd.f32 %v866, %v1026
    %v1028 = vpop.f32.mrf.mxu0
    %1029 = vmatprep.mubr.bf16.mxu0 0
    %1030 = vmatmul.mubr.bf16.gmra.mxu0 %v944
    %v1031 = vpop.f32.mrf.mxu0
    %v1032 = vadd.f32 %v871, %v1031
    %v1033 = vpop.f32.mrf.mxu0
    %v1034 = vpop.f32.mrf.mxu0
    %v1035 = vadd.f32 %v874, %v1034
    %v1036 = vpop.f32.mrf.mxu0
    %1037 = vmatprep.mubr.bf16.mxu0 0
    %1038 = vmatmul.mubr.bf16.gmra.mxu0 %v947
    %v1039 = vpop.f32.mrf.mxu0
    %v1040 = vadd.f32 %v879, %v1039
    %v1041 = vpop.f32.mrf.mxu0
    %v1042 = vpop.f32.mrf.mxu0
    %v1043 = vadd.f32 %v882, %v1042
    %v1044 = vpop.f32.mrf.mxu0
    %1045 = vdwg.mxu0
    %1047 = vset.pattern.permute.xlu0 0
    %1048 = vperm.xlu0 %1047, %v433
    %v1049 = vpop.permute.xlu0 %1048
    %1052 = vset.pattern.permute.xlu0 0
    %1053 = vperm.xlu0 %1052, %v434
    %v1054 = vpop.permute.xlu0 %1053
    %1057 = vset.pattern.permute.xlu0 0
    %1058 = vperm.xlu0 %1057, %v435
    %v1059 = vpop.permute.xlu0 %1058
    %1062 = vset.pattern.permute.xlu0 0
    %1063 = vperm.xlu0 %1062, %v436
    %v1064 = vpop.permute.xlu0 %1063
    %1067 = vset.pattern.permute.xlu0 0
    %1068 = vperm.xlu0 %1067, %v437
    %v1069 = vpop.permute.xlu0 %1068
    %1072 = vset.pattern.permute.xlu0 0
    %1073 = vperm.xlu0 %1072, %v438
    %v1074 = vpop.permute.xlu0 %1073
    %1077 = vset.pattern.permute.xlu0 0
    %1078 = vperm.xlu0 %1077, %v439
    %v1079 = vpop.permute.xlu0 %1078
    %1082 = vset.pattern.permute.xlu0 0
    %1083 = vperm.xlu0 %1082, %v440
    %v1084 = vpop.permute.xlu0 %1083
    %1087 = vset.pattern.permute.xlu0 0
    %1088 = vperm.xlu0 %1087, %v441
    %v1089 = vpop.permute.xlu0 %1088
    %1092 = vset.pattern.permute.xlu0 0
    %1093 = vperm.xlu0 %1092, %v442
    %v1094 = vpop.permute.xlu0 %1093
    %1097 = vset.pattern.permute.xlu0 0
    %1098 = vperm.xlu0 %1097, %v443
    %v1099 = vpop.permute.xlu0 %1098
    %1102 = vset.pattern.permute.xlu0 0
    %1103 = vperm.xlu0 %1102, %v444
    %v1104 = vpop.permute.xlu0 %1103
    %1107 = vset.pattern.permute.xlu0 0
    %1108 = vperm.xlu0 %1107, %v445
    %v1109 = vpop.permute.xlu0 %1108
    %1112 = vset.pattern.permute.xlu0 0
    %1113 = vperm.xlu0 %1112, %v446
    %v1114 = vpop.permute.xlu0 %1113
    %1117 = vset.pattern.permute.xlu0 0
    %1118 = vperm.xlu0 %1117, %v447
    %v1119 = vpop.permute.xlu0 %1118
    %1122 = vset.pattern.permute.xlu0 0
    %1123 = vperm.xlu0 %1122, %v448
    %v1124 = vpop.permute.xlu0 %1123
    %v1126 = vadd.f32 %v984, %v1049
    %v1127 = vadd.f32 %v987, %v1054
    %v1128 = vadd.f32 %v992, %v1059
    %v1129 = vadd.f32 %v995, %v1064
    %v1130 = vadd.f32 %v1000, %v1069
    %v1131 = vadd.f32 %v1003, %v1074
    %v1132 = vadd.f32 %v1008, %v1079
    %v1133 = vadd.f32 %v1011, %v1084
    %v1134 = vadd.f32 %v1016, %v1089
    %v1135 = vadd.f32 %v1019, %v1094
    %v1136 = vadd.f32 %v1024, %v1099
    %v1137 = vadd.f32 %v1027, %v1104
    %v1138 = vadd.f32 %v1032, %v1109
    %v1139 = vadd.f32 %v1035, %v1114
    %v1140 = vadd.f32 %v1040, %v1119
    %v1141 = vadd.f32 %v1043, %v1124
    %v1142 = vxor.u32 %v1126, 2147483648
    %v1143 = vxor.u32 %v1127, 2147483648
    %v1144 = vxor.u32 %v1128, 2147483648
    %v1145 = vxor.u32 %v1129, 2147483648
    %v1146 = vxor.u32 %v1130, 2147483648
    %v1147 = vxor.u32 %v1131, 2147483648
    %v1148 = vxor.u32 %v1132, 2147483648
    %v1149 = vxor.u32 %v1133, 2147483648
    %v1150 = vmul.f32 %v1142, 1.442695
    %v1151 = vpow.pop %v1150
    %v1152 = vmul.f32 %v1143, 1.442695
    %v1153 = vpow.pop %v1152
    %v1154 = vmul.f32 %v1144, 1.442695
    %v1155 = vpow.pop %v1154
    %v1156 = vmul.f32 %v1145, 1.442695
    %v1157 = vpow.pop %v1156
    %v1158 = vmul.f32 %v1146, 1.442695
    %v1159 = vpow.pop %v1158
    %v1160 = vmul.f32 %v1147, 1.442695
    %v1161 = vpow.pop %v1160
    %v1162 = vmul.f32 %v1148, 1.442695
    %v1163 = vpow.pop %v1162
    %v1164 = vmul.f32 %v1149, 1.442695
    %v1165 = vpow.pop %v1164
    %v1166 = vadd.f32 %v1151, 1.0
    %v1167 = vadd.f32 %v1153, 1.0
    %v1168 = vadd.f32 %v1155, 1.0
    %v1169 = vadd.f32 %v1157, 1.0
    %v1170 = vadd.f32 %v1159, 1.0
    %v1171 = vadd.f32 %v1161, 1.0
    %v1172 = vadd.f32 %v1163, 1.0
    %v1173 = vadd.f32 %v1165, 1.0
    %v1174 = vrcp.pop %v1166
    %v1175 = vmul.f32 1.0, %v1174
    %v1176 = vrcp.pop %v1167
    %v1177 = vmul.f32 1.0, %v1176
    %v1178 = vrcp.pop %v1168
    %v1179 = vmul.f32 1.0, %v1178
    %v1180 = vrcp.pop %v1169
    %v1181 = vmul.f32 1.0, %v1180
    %v1182 = vrcp.pop %v1170
    %v1183 = vmul.f32 1.0, %v1182
    %v1184 = vrcp.pop %v1171
    %v1185 = vmul.f32 1.0, %v1184
    %v1186 = vrcp.pop %v1172
    %v1187 = vmul.f32 1.0, %v1186
    %v1188 = vrcp.pop %v1173
    %v1189 = vmul.f32 1.0, %v1188
    %v1190 = vtanh.pop %v1134
    %v1191 = vtanh.pop %v1135
    %v1192 = vtanh.pop %v1136
    %v1193 = vtanh.pop %v1137
    %v1194 = vxor.u32 %v1138, 2147483648
    %v1195 = vxor.u32 %v1139, 2147483648
    %v1196 = vxor.u32 %v1140, 2147483648
    %v1197 = vxor.u32 %v1141, 2147483648
    %v1198 = vmul.f32 %v1194, 1.442695
    %v1199 = vpow.pop %v1198
    %v1200 = vmul.f32 %v1195, 1.442695
    %v1201 = vpow.pop %v1200
    %v1202 = vmul.f32 %v1196, 1.442695
    %v1203 = vpow.pop %v1202
    %v1204 = vmul.f32 %v1197, 1.442695
    %v1205 = vpow.pop %v1204
    %v1206 = vadd.f32 %v1199, 1.0
    %v1207 = vadd.f32 %v1201, 1.0
    %v1208 = vadd.f32 %v1203, 1.0
    %v1209 = vadd.f32 %v1205, 1.0
    %v1210 = vrcp.pop %v1206
    %v1211 = vmul.f32 1.0, %v1210
    %v1212 = vrcp.pop %v1207
    %v1213 = vmul.f32 1.0, %v1212
    %v1214 = vrcp.pop %v1208
    %v1215 = vmul.f32 1.0, %v1214
    %v1216 = vrcp.pop %v1209
    %v1217 = vmul.f32 1.0, %v1216
    %v1218 = vmul.f32 %v1183, 0.0
    %v1219 = vmul.f32 %v1185, 0.0
    %v1220 = vmul.f32 %v1187, 0.0
    %v1221 = vmul.f32 %v1189, 0.0
    %v1222 = vmul.f32 %v1175, %v1190
    %v1223 = vmul.f32 %v1177, %v1191
    %v1224 = vmul.f32 %v1179, %v1192
    %v1225 = vmul.f32 %v1181, %v1193
    %v1226 = vadd.f32 %v1218, %v1222
    %v1227 = vadd.f32 %v1219, %v1223
    %v1228 = vadd.f32 %v1220, %v1224
    %v1229 = vadd.f32 %v1221, %v1225
    %v1230 = vtanh.pop %v1226
    %v1231 = vtanh.pop %v1227
    %v1232 = vtanh.pop %v1228
    %v1233 = vtanh.pop %v1229
    %v1234 = vmul.f32 %v1211, %v1230
    %v1235 = vmul.f32 %v1213, %v1231
    %v1236 = vmul.f32 %v1215, %v1232
    %v1237 = vmul.f32 %v1217, %v1233
    %1238 = vmatprep.subr.bf16.mxu0 0
    %1239 = vmatpush1.bf16.msra.mxu0 0
    %1240 = vmatprep.subr.bf16.mxu0 0
    %1241 = vmatpush1.bf16.msra.mxu0 0
    %1242 = vmatprep.subr.bf16.mxu0 0
    %1243 = vmatpush1.bf16.msra.mxu0 0
    %1244 = vmatprep.subr.bf16.mxu0 0
    %1245 = vmatpush1.bf16.msra.mxu0 0
    %1246 = vmatprep.subr.bf16.mxu0 0
    %1247 = vmatpush1.bf16.msra.mxu0 0
    %1248 = vmatprep.subr.bf16.mxu0 0
    %1249 = vmatpush1.bf16.msra.mxu0 0
    %1250 = vmatprep.subr.bf16.mxu0 0
    %1251 = vmatpush1.bf16.msra.mxu0 %v723
    %1252 = vmatprep.subr.bf16.mxu0 0
    %1253 = vmatpush1.bf16.msra.mxu0 %v722
    %1254 = vmatprep.subr.bf16.mxu0 0
    %1255 = vmatpush2.bf16.msra.mxu0 0
    %1256 = vmatprep.subr.bf16.mxu0 0
    %1257 = vmatpush2.bf16.msra.mxu0 0
    %1258 = vmatprep.subr.bf16.mxu0 0
    %1259 = vmatpush2.bf16.msra.mxu0 0
    %1260 = vmatprep.subr.bf16.mxu0 0
    %1261 = vmatpush2.bf16.msra.mxu0 0
    %1262 = vmatprep.subr.bf16.mxu0 0
    %1263 = vmatpush2.bf16.msra.mxu0 0
    %1264 = vmatprep.subr.bf16.mxu0 0
    %1265 = vmatpush2.bf16.msra.mxu0 0
    %1266 = vmatprep.subr.bf16.mxu0 0
    %1267 = vmatpush2.bf16.msra.mxu0 0
    %1268 = vmatprep.subr.bf16.mxu0 0
    %1269 = vmatpush2.bf16.msra.mxu0 0
    %1270 = vmatprep.mubr.bf16.mxu0 0
    %1271 = vmatmul.mubr.bf16.gmra.mxu0 %v490
    %v1272 = vpop.f32.mrf.mxu0
    %v1273 = vadd.f32 0.0, %v1272
    %v1274 = vpop.f32.mrf.mxu0
    %v1275 = vpop.f32.mrf.mxu0
    %v1276 = vadd.f32 0.0, %v1275
    %v1277 = vpop.f32.mrf.mxu0
    %1278 = vmatprep.mubr.bf16.mxu0 0
    %1279 = vmatmul.mubr.bf16.gmra.mxu0 %v493
    %v1280 = vpop.f32.mrf.mxu0
    %v1281 = vadd.f32 0.0, %v1280
    %v1282 = vpop.f32.mrf.mxu0
    %v1283 = vpop.f32.mrf.mxu0
    %v1284 = vadd.f32 0.0, %v1283
    %v1285 = vpop.f32.mrf.mxu0
    %1286 = vmatprep.mubr.bf16.mxu0 0
    %1287 = vmatmul.mubr.bf16.gmra.mxu0 %v496
    %v1288 = vpop.f32.mrf.mxu0
    %v1289 = vadd.f32 0.0, %v1288
    %v1290 = vpop.f32.mrf.mxu0
    %v1291 = vpop.f32.mrf.mxu0
    %v1292 = vadd.f32 0.0, %v1291
    %v1293 = vpop.f32.mrf.mxu0
    %1294 = vmatprep.mubr.bf16.mxu0 0
    %1295 = vmatmul.mubr.bf16.gmra.mxu0 %v499
    %v1296 = vpop.f32.mrf.mxu0
    %v1297 = vadd.f32 0.0, %v1296
    %v1298 = vpop.f32.mrf.mxu0
    %v1299 = vpop.f32.mrf.mxu0
    %v1300 = vadd.f32 0.0, %v1299
    %v1301 = vpop.f32.mrf.mxu0
    %1302 = vmatprep.mubr.bf16.mxu0 0
    %1303 = vmatmul.mubr.bf16.gmra.mxu0 %v502
    %v1304 = vpop.f32.mrf.mxu0
    %v1305 = vadd.f32 0.0, %v1304
    %v1306 = vpop.f32.mrf.mxu0
    %v1307 = vpop.f32.mrf.mxu0
    %v1308 = vadd.f32 0.0, %v1307
    %v1309 = vpop.f32.mrf.mxu0
    %1310 = vmatprep.mubr.bf16.mxu0 0
    %1311 = vmatmul.mubr.bf16.gmra.mxu0 %v505
    %v1312 = vpop.f32.mrf.mxu0
    %v1313 = vadd.f32 0.0, %v1312
    %v1314 = vpop.f32.mrf.mxu0
    %v1315 = vpop.f32.mrf.mxu0
    %v1316 = vadd.f32 0.0, %v1315
    %v1317 = vpop.f32.mrf.mxu0
    %1318 = vmatprep.mubr.bf16.mxu0 0
    %1319 = vmatmul.mubr.bf16.gmra.mxu0 %v508
    %v1320 = vpop.f32.mrf.mxu0
    %v1321 = vadd.f32 0.0, %v1320
    %v1322 = vpop.f32.mrf.mxu0
    %v1323 = vpop.f32.mrf.mxu0
    %v1324 = vadd.f32 0.0, %v1323
    %v1325 = vpop.f32.mrf.mxu0
    %1326 = vmatprep.mubr.bf16.mxu0 0
    %1327 = vmatmul.mubr.bf16.gmra.mxu0 %v511
    %v1328 = vpop.f32.mrf.mxu0
    %v1329 = vadd.f32 0.0, %v1328
    %v1330 = vpop.f32.mrf.mxu0
    %v1331 = vpop.f32.mrf.mxu0
    %v1332 = vadd.f32 0.0, %v1331
    %v1333 = vpop.f32.mrf.mxu0
    %1334 = vdwg.mxu0
    %1351 = vrot.lane.b32.xlu0 %v1273, 16
    %v1352 = vpop.permute.xlu0 %1351
    %1353 = vrot.lane.b32.xlu0 %v1276, 16
    %v1354 = vpop.permute.xlu0 %1353
    %1355 = vrot.lane.b32.xlu0 %v1281, 16
    %v1356 = vpop.permute.xlu0 %1355
    %1357 = vrot.lane.b32.xlu0 %v1284, 16
    %v1358 = vpop.permute.xlu0 %1357
    %1359 = vrot.lane.b32.xlu0 %v1289, 16
    %v1360 = vpop.permute.xlu0 %1359
    %1361 = vrot.lane.b32.xlu0 %v1292, 16
    %v1362 = vpop.permute.xlu0 %1361
    %1363 = vrot.lane.b32.xlu0 %v1297, 16
    %v1364 = vpop.permute.xlu0 %1363
    %1365 = vrot.lane.b32.xlu0 %v1300, 16
    %v1366 = vpop.permute.xlu0 %1365
    %1367 = vrot.lane.b32.xlu0 %v1305, 16
    %v1368 = vpop.permute.xlu0 %1367
    %1369 = vrot.lane.b32.xlu0 %v1308, 16
    %v1370 = vpop.permute.xlu0 %1369
    %1371 = vrot.lane.b32.xlu0 %v1313, 16
    %v1372 = vpop.permute.xlu0 %1371
    %1373 = vrot.lane.b32.xlu0 %v1316, 16
    %v1374 = vpop.permute.xlu0 %1373
    %1375 = vrot.lane.b32.xlu0 %v1321, 16
    %v1376 = vpop.permute.xlu0 %1375
    %1377 = vrot.lane.b32.xlu0 %v1324, 16
    %v1378 = vpop.permute.xlu0 %1377
    %1379 = vrot.lane.b32.xlu0 %v1329, 16
    %v1380 = vpop.permute.xlu0 %1379
    %1381 = vrot.lane.b32.xlu0 %v1332, 16
    %v1382 = vpop.permute.xlu0 %1381
    %v1399 = vadd.f32 %v323, %v1352
    %v1400 = vadd.f32 %v326, %v1354
    %v1401 = vadd.f32 %v331, %v1356
    %v1402 = vadd.f32 %v334, %v1358
    %v1403 = vadd.f32 %v339, %v1360
    %v1404 = vadd.f32 %v342, %v1362
    %v1405 = vadd.f32 %v347, %v1364
    %v1406 = vadd.f32 %v350, %v1366
    %v1407 = vadd.f32 %v355, %v1368
    %v1408 = vadd.f32 %v358, %v1370
    %v1409 = vadd.f32 %v363, %v1372
    %v1410 = vadd.f32 %v366, %v1374
    %v1411 = vadd.f32 %v371, %v1376
    %v1412 = vadd.f32 %v374, %v1378
    %v1413 = vadd.f32 %v379, %v1380
    %v1414 = vadd.f32 %v382, %v1382
    %v1415 = vxor.u32 %v1399, 2147483648
    %v1416 = vxor.u32 %v1400, 2147483648
    %v1417 = vxor.u32 %v1401, 2147483648
    %v1418 = vxor.u32 %v1402, 2147483648
    %v1419 = vxor.u32 %v1403, 2147483648
    %v1420 = vxor.u32 %v1404, 2147483648
    %v1421 = vxor.u32 %v1405, 2147483648
    %v1422 = vxor.u32 %v1406, 2147483648
    %v1423 = vmul.f32 %v1415, 1.442695
    %v1424 = vpow.pop %v1423
    %v1425 = vmul.f32 %v1416, 1.442695
    %v1426 = vpow.pop %v1425
    %v1427 = vmul.f32 %v1417, 1.442695
    %v1428 = vpow.pop %v1427
    %v1429 = vmul.f32 %v1418, 1.442695
    %v1430 = vpow.pop %v1429
    %v1431 = vmul.f32 %v1419, 1.442695
    %v1432 = vpow.pop %v1431
    %v1433 = vmul.f32 %v1420, 1.442695
    %v1434 = vpow.pop %v1433
    %v1435 = vmul.f32 %v1421, 1.442695
    %v1436 = vpow.pop %v1435
    %v1437 = vmul.f32 %v1422, 1.442695
    %v1438 = vpow.pop %v1437
    %v1439 = vadd.f32 %v1424, 1.0
    %v1440 = vadd.f32 %v1426, 1.0
    %v1441 = vadd.f32 %v1428, 1.0
    %v1442 = vadd.f32 %v1430, 1.0
    %v1443 = vadd.f32 %v1432, 1.0
    %v1444 = vadd.f32 %v1434, 1.0
    %v1445 = vadd.f32 %v1436, 1.0
    %v1446 = vadd.f32 %v1438, 1.0
    %v1447 = vrcp.pop %v1439
    %v1448 = vmul.f32 1.0, %v1447
    %v1449 = vrcp.pop %v1440
    %v1450 = vmul.f32 1.0, %v1449
    %v1451 = vrcp.pop %v1441
    %v1452 = vmul.f32 1.0, %v1451
    %v1453 = vrcp.pop %v1442
    %v1454 = vmul.f32 1.0, %v1453
    %v1455 = vrcp.pop %v1443
    %v1456 = vmul.f32 1.0, %v1455
    %v1457 = vrcp.pop %v1444
    %v1458 = vmul.f32 1.0, %v1457
    %v1459 = vrcp.pop %v1445
    %v1460 = vmul.f32 1.0, %v1459
    %v1461 = vrcp.pop %v1446
    %v1462 = vmul.f32 1.0, %v1461
    %v1463 = vtanh.pop %v1407
    %v1464 = vtanh.pop %v1408
    %v1465 = vtanh.pop %v1409
    %v1466 = vtanh.pop %v1410
    %v1467 = vxor.u32 %v1411, 2147483648
    %v1468 = vxor.u32 %v1412, 2147483648
    %v1469 = vxor.u32 %v1413, 2147483648
    %v1470 = vxor.u32 %v1414, 2147483648
    %v1471 = vmul.f32 %v1467, 1.442695
    %v1472 = vpow.pop %v1471
    %v1473 = vmul.f32 %v1468, 1.442695
    %v1474 = vpow.pop %v1473
    %v1475 = vmul.f32 %v1469, 1.442695
    %v1476 = vpow.pop %v1475
    %v1477 = vmul.f32 %v1470, 1.442695
    %v1478 = vpow.pop %v1477
    %v1479 = vadd.f32 %v1472, 1.0
    %v1480 = vadd.f32 %v1474, 1.0
    %v1481 = vadd.f32 %v1476, 1.0
    %v1482 = vadd.f32 %v1478, 1.0
    %v1483 = vrcp.pop %v1479
    %v1484 = vmul.f32 1.0, %v1483
    %v1485 = vrcp.pop %v1480
    %v1486 = vmul.f32 1.0, %v1485
    %v1487 = vrcp.pop %v1481
    %v1488 = vmul.f32 1.0, %v1487
    %v1489 = vrcp.pop %v1482
    %v1490 = vmul.f32 1.0, %v1489
    %1495 = vrot.lane.b32.xlu0 %v710, 16
    %v1496 = vpop.permute.xlu0 %1495
    %1497 = vrot.lane.b32.xlu0 %v711, 16
    %v1498 = vpop.permute.xlu0 %1497
    %1499 = vrot.lane.b32.xlu0 %v712, 16
    %v1500 = vpop.permute.xlu0 %1499
    %1501 = vrot.lane.b32.xlu0 %v713, 16
    %v1502 = vpop.permute.xlu0 %1501
    %v1507 = vmul.f32 %v1456, %v1496
    %v1508 = vmul.f32 %v1458, %v1498
    %v1509 = vmul.f32 %v1460, %v1500
    %v1510 = vmul.f32 %v1462, %v1502
    %v1511 = vmul.f32 %v1448, %v1463
    %v1512 = vmul.f32 %v1450, %v1464
    %v1513 = vmul.f32 %v1452, %v1465
    %v1514 = vmul.f32 %v1454, %v1466
    %v1515 = vadd.f32 %v1507, %v1511
    %v1516 = vadd.f32 %v1508, %v1512
    %v1517 = vadd.f32 %v1509, %v1513
    %v1518 = vadd.f32 %v1510, %v1514
    %v1519 = vtanh.pop %v1515
    %v1520 = vtanh.pop %v1516
    %v1521 = vtanh.pop %v1517
    %v1522 = vtanh.pop %v1518
    %v1523 = vmul.f32 %v1484, %v1519
    %v1524 = vmul.f32 %v1486, %v1520
    %v1525 = vmul.f32 %v1488, %v1521
    %v1526 = vmul.f32 %v1490, %v1522
    %v1527 = vpack.c.bf16 %v1524, %v1523
    %v1528 = vpack.c.bf16 %v1526, %v1525
    %v1529 = vpack.c.bf16 %v1235, %v1234
    %v1530 = vpack.c.bf16 %v1237, %v1236
    %1531 = vmatprep.subr.bf16.mxu0 0
    %1532 = vmatpush1.bf16.msra.mxu0 0
    %1533 = vmatprep.subr.bf16.mxu0 0
    %1534 = vmatpush1.bf16.msra.mxu0 0
    %1535 = vmatprep.subr.bf16.mxu0 0
    %1536 = vmatpush1.bf16.msra.mxu0 0
    %1537 = vmatprep.subr.bf16.mxu0 0
    %1538 = vmatpush1.bf16.msra.mxu0 0
    %1539 = vmatprep.subr.bf16.mxu0 0
    %1540 = vmatpush1.bf16.msra.mxu0 0
    %1541 = vmatprep.subr.bf16.mxu0 0
    %1542 = vmatpush1.bf16.msra.mxu0 0
    %1543 = vmatprep.subr.bf16.mxu0 0
    %1544 = vmatpush1.bf16.msra.mxu0 %v1530
    %1545 = vmatprep.subr.bf16.mxu0 0
    %1546 = vmatpush1.bf16.msra.mxu0 %v1529
    %1547 = vmatprep.subr.bf16.mxu0 0
    %1548 = vmatpush2.bf16.msra.mxu0 0
    %1549 = vmatprep.subr.bf16.mxu0 0
    %1550 = vmatpush2.bf16.msra.mxu0 0
    %1551 = vmatprep.subr.bf16.mxu0 0
    %1552 = vmatpush2.bf16.msra.mxu0 0
    %1553 = vmatprep.subr.bf16.mxu0 0
    %1554 = vmatpush2.bf16.msra.mxu0 0
    %1555 = vmatprep.subr.bf16.mxu0 0
    %1556 = vmatpush2.bf16.msra.mxu0 0
    %1557 = vmatprep.subr.bf16.mxu0 0
    %1558 = vmatpush2.bf16.msra.mxu0 0
    %1559 = vmatprep.subr.bf16.mxu0 0
    %1560 = vmatpush2.bf16.msra.mxu0 0
    %1561 = vmatprep.subr.bf16.mxu0 0
    %1562 = vmatpush2.bf16.msra.mxu0 0
    %1563 = vmatprep.mubr.bf16.mxu0 0
    %1564 = vmatmul.mubr.bf16.gmra.mxu0 %v765
    %v1565 = vpop.f32.mrf.mxu0
    %v1566 = vadd.f32 0.0, %v1565
    %v1567 = vpop.f32.mrf.mxu0
    %v1568 = vpop.f32.mrf.mxu0
    %v1569 = vadd.f32 0.0, %v1568
    %v1570 = vpop.f32.mrf.mxu0
    %1571 = vmatprep.mubr.bf16.mxu0 0
    %1572 = vmatmul.mubr.bf16.gmra.mxu0 %v768
    %v1573 = vpop.f32.mrf.mxu0
    %v1574 = vadd.f32 0.0, %v1573
    %v1575 = vpop.f32.mrf.mxu0
    %v1576 = vpop.f32.mrf.mxu0
    %v1577 = vadd.f32 0.0, %v1576
    %v1578 = vpop.f32.mrf.mxu0
    %1579 = vmatprep.mubr.bf16.mxu0 0
    %1580 = vmatmul.mubr.bf16.gmra.mxu0 %v771
    %v1581 = vpop.f32.mrf.mxu0
    %v1582 = vadd.f32 0.0, %v1581
    %v1583 = vpop.f32.mrf.mxu0
    %v1584 = vpop.f32.mrf.mxu0
    %v1585 = vadd.f32 0.0, %v1584
    %v1586 = vpop.f32.mrf.mxu0
    %1587 = vmatprep.mubr.bf16.mxu0 0
    %1588 = vmatmul.mubr.bf16.gmra.mxu0 %v774
    %v1589 = vpop.f32.mrf.mxu0
    %v1590 = vadd.f32 0.0, %v1589
    %v1591 = vpop.f32.mrf.mxu0
    %v1592 = vpop.f32.mrf.mxu0
    %v1593 = vadd.f32 0.0, %v1592
    %v1594 = vpop.f32.mrf.mxu0
    %1595 = vmatprep.mubr.bf16.mxu0 0
    %1596 = vmatmul.mubr.bf16.gmra.mxu0 %v777
    %v1597 = vpop.f32.mrf.mxu0
    %v1598 = vadd.f32 0.0, %v1597
    %v1599 = vpop.f32.mrf.mxu0
    %v1600 = vpop.f32.mrf.mxu0
    %v1601 = vadd.f32 0.0, %v1600
    %v1602 = vpop.f32.mrf.mxu0
    %1603 = vmatprep.mubr.bf16.mxu0 0
    %1604 = vmatmul.mubr.bf16.gmra.mxu0 %v780
    %v1605 = vpop.f32.mrf.mxu0
    %v1606 = vadd.f32 0.0, %v1605
    %v1607 = vpop.f32.mrf.mxu0
    %v1608 = vpop.f32.mrf.mxu0
    %v1609 = vadd.f32 0.0, %v1608
    %v1610 = vpop.f32.mrf.mxu0
    %1611 = vmatprep.mubr.bf16.mxu0 0
    %1612 = vmatmul.mubr.bf16.gmra.mxu0 %v783
    %v1613 = vpop.f32.mrf.mxu0
    %v1614 = vadd.f32 0.0, %v1613
    %v1615 = vpop.f32.mrf.mxu0
    %v1616 = vpop.f32.mrf.mxu0
    %v1617 = vadd.f32 0.0, %v1616
    %v1618 = vpop.f32.mrf.mxu0
    %1619 = vmatprep.mubr.bf16.mxu0 0
    %1620 = vmatmul.mubr.bf16.gmra.mxu0 %v786
    %v1621 = vpop.f32.mrf.mxu0
    %v1622 = vadd.f32 0.0, %v1621
    %v1623 = vpop.f32.mrf.mxu0
    %v1624 = vpop.f32.mrf.mxu0
    %v1625 = vadd.f32 0.0, %v1624
    %v1626 = vpop.f32.mrf.mxu0
    %1627 = vdwg.mxu0
    %1630 = vrot.lane.b32.xlu0 %v1527, 112
    %v1631 = vpop.permute.xlu0 %1630
    %1632 = vrot.lane.b32.xlu0 %v1528, 112
    %v1633 = vpop.permute.xlu0 %1632
    %1636 = vmatprep.subr.bf16.mxu0 0
    %1637 = vmatpush1.bf16.msra.mxu0 0
    %1638 = vmatprep.subr.bf16.mxu0 0
    %1639 = vmatpush1.bf16.msra.mxu0 0
    %1640 = vmatprep.subr.bf16.mxu0 0
    %1641 = vmatpush1.bf16.msra.mxu0 0
    %1642 = vmatprep.subr.bf16.mxu0 0
    %1643 = vmatpush1.bf16.msra.mxu0 0
    %1644 = vmatprep.subr.bf16.mxu0 0
    %1645 = vmatpush1.bf16.msra.mxu0 0
    %1646 = vmatprep.subr.bf16.mxu0 0
    %1647 = vmatpush1.bf16.msra.mxu0 0
    %1648 = vmatprep.subr.bf16.mxu0 0
    %1649 = vmatpush1.bf16.msra.mxu0 %v1633
    %1650 = vmatprep.subr.bf16.mxu0 0
    %1651 = vmatpush1.bf16.msra.mxu0 %v1631
    %1652 = vmatprep.subr.bf16.mxu0 0
    %1653 = vmatpush2.bf16.msra.mxu0 0
    %1654 = vmatprep.subr.bf16.mxu0 0
    %1655 = vmatpush2.bf16.msra.mxu0 0
    %1656 = vmatprep.subr.bf16.mxu0 0
    %1657 = vmatpush2.bf16.msra.mxu0 0
    %1658 = vmatprep.subr.bf16.mxu0 0
    %1659 = vmatpush2.bf16.msra.mxu0 0
    %1660 = vmatprep.subr.bf16.mxu0 0
    %1661 = vmatpush2.bf16.msra.mxu0 0
    %1662 = vmatprep.subr.bf16.mxu0 0
    %1663 = vmatpush2.bf16.msra.mxu0 0
    %1664 = vmatprep.subr.bf16.mxu0 0
    %1665 = vmatpush2.bf16.msra.mxu0 0
    %1666 = vmatprep.subr.bf16.mxu0 0
    %1667 = vmatpush2.bf16.msra.mxu0 0
    %1668 = vmatprep.mubr.bf16.mxu0 0
    %1669 = vmatmul.mubr.bf16.gmra.mxu0 %v926
    %v1670 = vpop.f32.mrf.mxu0
    %v1671 = vadd.f32 %v1566, %v1670
    %v1672 = vpop.f32.mrf.mxu0
    %v1673 = vpop.f32.mrf.mxu0
    %v1674 = vadd.f32 %v1569, %v1673
    %v1675 = vpop.f32.mrf.mxu0
    %1676 = vmatprep.mubr.bf16.mxu0 0
    %1677 = vmatmul.mubr.bf16.gmra.mxu0 %v929
    %v1678 = vpop.f32.mrf.mxu0
    %v1679 = vadd.f32 %v1574, %v1678
    %v1680 = vpop.f32.mrf.mxu0
    %v1681 = vpop.f32.mrf.mxu0
    %v1682 = vadd.f32 %v1577, %v1681
    %v1683 = vpop.f32.mrf.mxu0
    %1684 = vmatprep.mubr.bf16.mxu0 0
    %1685 = vmatmul.mubr.bf16.gmra.mxu0 %v932
    %v1686 = vpop.f32.mrf.mxu0
    %v1687 = vadd.f32 %v1582, %v1686
    %v1688 = vpop.f32.mrf.mxu0
    %v1689 = vpop.f32.mrf.mxu0
    %v1690 = vadd.f32 %v1585, %v1689
    %v1691 = vpop.f32.mrf.mxu0
    %1692 = vmatprep.mubr.bf16.mxu0 0
    %1693 = vmatmul.mubr.bf16.gmra.mxu0 %v935
    %v1694 = vpop.f32.mrf.mxu0
    %v1695 = vadd.f32 %v1590, %v1694
    %v1696 = vpop.f32.mrf.mxu0
    %v1697 = vpop.f32.mrf.mxu0
    %v1698 = vadd.f32 %v1593, %v1697
    %v1699 = vpop.f32.mrf.mxu0
    %1700 = vmatprep.mubr.bf16.mxu0 0
    %1701 = vmatmul.mubr.bf16.gmra.mxu0 %v938
    %v1702 = vpop.f32.mrf.mxu0
    %v1703 = vadd.f32 %v1598, %v1702
    %v1704 = vpop.f32.mrf.mxu0
    %v1705 = vpop.f32.mrf.mxu0
    %v1706 = vadd.f32 %v1601, %v1705
    %v1707 = vpop.f32.mrf.mxu0
    %1708 = vmatprep.mubr.bf16.mxu0 0
    %1709 = vmatmul.mubr.bf16.gmra.mxu0 %v941
    %v1710 = vpop.f32.mrf.mxu0
    %v1711 = vadd.f32 %v1606, %v1710
    %v1712 = vpop.f32.mrf.mxu0
    %v1713 = vpop.f32.mrf.mxu0
    %v1714 = vadd.f32 %v1609, %v1713
    %v1715 = vpop.f32.mrf.mxu0
    %1716 = vmatprep.mubr.bf16.mxu0 0
    %1717 = vmatmul.mubr.bf16.gmra.mxu0 %v944
    %v1718 = vpop.f32.mrf.mxu0
    %v1719 = vadd.f32 %v1614, %v1718
    %v1720 = vpop.f32.mrf.mxu0
    %v1721 = vpop.f32.mrf.mxu0
    %v1722 = vadd.f32 %v1617, %v1721
    %v1723 = vpop.f32.mrf.mxu0
    %1724 = vmatprep.mubr.bf16.mxu0 0
    %1725 = vmatmul.mubr.bf16.gmra.mxu0 %v947
    %v1726 = vpop.f32.mrf.mxu0
    %v1727 = vadd.f32 %v1622, %v1726
    %v1728 = vpop.f32.mrf.mxu0
    %v1729 = vpop.f32.mrf.mxu0
    %v1730 = vadd.f32 %v1625, %v1729
    %v1731 = vpop.f32.mrf.mxu0
    %1732 = vdwg.mxu0
    %v1733 = vadd.f32 %v1671, %v1049
    %v1734 = vadd.f32 %v1674, %v1054
    %v1735 = vadd.f32 %v1679, %v1059
    %v1736 = vadd.f32 %v1682, %v1064
    %v1737 = vadd.f32 %v1687, %v1069
    %v1738 = vadd.f32 %v1690, %v1074
    %v1739 = vadd.f32 %v1695, %v1079
    %v1740 = vadd.f32 %v1698, %v1084
    %v1741 = vadd.f32 %v1703, %v1089
    %v1742 = vadd.f32 %v1706, %v1094
    %v1743 = vadd.f32 %v1711, %v1099
    %v1744 = vadd.f32 %v1714, %v1104
    %v1745 = vadd.f32 %v1719, %v1109
    %v1746 = vadd.f32 %v1722, %v1114
    %v1747 = vadd.f32 %v1727, %v1119
    %v1748 = vadd.f32 %v1730, %v1124
    %v1749 = vxor.u32 %v1733, 2147483648
    %v1750 = vxor.u32 %v1734, 2147483648
    %v1751 = vxor.u32 %v1735, 2147483648
    %v1752 = vxor.u32 %v1736, 2147483648
    %v1753 = vxor.u32 %v1737, 2147483648
    %v1754 = vxor.u32 %v1738, 2147483648
    %v1755 = vxor.u32 %v1739, 2147483648
    %v1756 = vxor.u32 %v1740, 2147483648
    %v1757 = vmul.f32 %v1749, 1.442695
    %v1758 = vpow.pop %v1757
    %v1759 = vmul.f32 %v1750, 1.442695
    %v1760 = vpow.pop %v1759
    %v1761 = vmul.f32 %v1751, 1.442695
    %v1762 = vpow.pop %v1761
    %v1763 = vmul.f32 %v1752, 1.442695
    %v1764 = vpow.pop %v1763
    %v1765 = vmul.f32 %v1753, 1.442695
    %v1766 = vpow.pop %v1765
    %v1767 = vmul.f32 %v1754, 1.442695
    %v1768 = vpow.pop %v1767
    %v1769 = vmul.f32 %v1755, 1.442695
    %v1770 = vpow.pop %v1769
    %v1771 = vmul.f32 %v1756, 1.442695
    %v1772 = vpow.pop %v1771
    %v1773 = vadd.f32 %v1758, 1.0
    %v1774 = vadd.f32 %v1760, 1.0
    %v1775 = vadd.f32 %v1762, 1.0
    %v1776 = vadd.f32 %v1764, 1.0
    %v1777 = vadd.f32 %v1766, 1.0
    %v1778 = vadd.f32 %v1768, 1.0
    %v1779 = vadd.f32 %v1770, 1.0
    %v1780 = vadd.f32 %v1772, 1.0
    %v1781 = vrcp.pop %v1773
    %v1782 = vmul.f32 1.0, %v1781
    %v1783 = vrcp.pop %v1774
    %v1784 = vmul.f32 1.0, %v1783
    %v1785 = vrcp.pop %v1775
    %v1786 = vmul.f32 1.0, %v1785
    %v1787 = vrcp.pop %v1776
    %v1788 = vmul.f32 1.0, %v1787
    %v1789 = vrcp.pop %v1777
    %v1790 = vmul.f32 1.0, %v1789
    %v1791 = vrcp.pop %v1778
    %v1792 = vmul.f32 1.0, %v1791
    %v1793 = vrcp.pop %v1779
    %v1794 = vmul.f32 1.0, %v1793
    %v1795 = vrcp.pop %v1780
    %v1796 = vmul.f32 1.0, %v1795
    %v1797 = vtanh.pop %v1741
    %v1798 = vtanh.pop %v1742
    %v1799 = vtanh.pop %v1743
    %v1800 = vtanh.pop %v1744
    %v1801 = vxor.u32 %v1745, 2147483648
    %v1802 = vxor.u32 %v1746, 2147483648
    %v1803 = vxor.u32 %v1747, 2147483648
    %v1804 = vxor.u32 %v1748, 2147483648
    %v1805 = vmul.f32 %v1801, 1.442695
    %v1806 = vpow.pop %v1805
    %v1807 = vmul.f32 %v1802, 1.442695
    %v1808 = vpow.pop %v1807
    %v1809 = vmul.f32 %v1803, 1.442695
    %v1810 = vpow.pop %v1809
    %v1811 = vmul.f32 %v1804, 1.442695
    %v1812 = vpow.pop %v1811
    %v1813 = vadd.f32 %v1806, 1.0
    %v1814 = vadd.f32 %v1808, 1.0
    %v1815 = vadd.f32 %v1810, 1.0
    %v1816 = vadd.f32 %v1812, 1.0
    %v1817 = vrcp.pop %v1813
    %v1818 = vmul.f32 1.0, %v1817
    %v1819 = vrcp.pop %v1814
    %v1820 = vmul.f32 1.0, %v1819
    %v1821 = vrcp.pop %v1815
    %v1822 = vmul.f32 1.0, %v1821
    %v1823 = vrcp.pop %v1816
    %v1824 = vmul.f32 1.0, %v1823
    %v1825 = vmul.f32 %v1790, %v1226
    %v1826 = vmul.f32 %v1792, %v1227
    %v1827 = vmul.f32 %v1794, %v1228
    %v1828 = vmul.f32 %v1796, %v1229
    %v1829 = vmul.f32 %v1782, %v1797
    %v1830 = vmul.f32 %v1784, %v1798
    %v1831 = vmul.f32 %v1786, %v1799
    %v1832 = vmul.f32 %v1788, %v1800
    %v1833 = vadd.f32 %v1825, %v1829
    %v1834 = vadd.f32 %v1826, %v1830
    %v1835 = vadd.f32 %v1827, %v1831
    %v1836 = vadd.f32 %v1828, %v1832
    %v1837 = vtanh.pop %v1833
    %v1838 = vtanh.pop %v1834
    %v1839 = vtanh.pop %v1835
    %v1840 = vtanh.pop %v1836
    %v1841 = vmul.f32 %v1818, %v1837
    %v1842 = vmul.f32 %v1820, %v1838
    %v1843 = vmul.f32 %v1822, %v1839
    %v1844 = vmul.f32 %v1824, %v1840
    %1845 = vmatprep.subr.bf16.mxu0 0
    %1846 = vmatpush1.bf16.msra.mxu0 0
    %1847 = vmatprep.subr.bf16.mxu0 0
    %1848 = vmatpush1.bf16.msra.mxu0 0
    %1849 = vmatprep.subr.bf16.mxu0 0
    %1850 = vmatpush1.bf16.msra.mxu0 0
    %1851 = vmatprep.subr.bf16.mxu0 0
    %1852 = vmatpush1.bf16.msra.mxu0 0
    %1853 = vmatprep.subr.bf16.mxu0 0
    %1854 = vmatpush1.bf16.msra.mxu0 0
    %1855 = vmatprep.subr.bf16.mxu0 0
    %1856 = vmatpush1.bf16.msra.mxu0 0
    %1857 = vmatprep.subr.bf16.mxu0 0
    %1858 = vmatpush1.bf16.msra.mxu0 %v1633
    %1859 = vmatprep.subr.bf16.mxu0 0
    %1860 = vmatpush1.bf16.msra.mxu0 %v1631
    %1861 = vmatprep.subr.bf16.mxu0 0
    %1862 = vmatpush2.bf16.msra.mxu0 0
    %1863 = vmatprep.subr.bf16.mxu0 0
    %1864 = vmatpush2.bf16.msra.mxu0 0
    %1865 = vmatprep.subr.bf16.mxu0 0
    %1866 = vmatpush2.bf16.msra.mxu0 0
    %1867 = vmatprep.subr.bf16.mxu0 0
    %1868 = vmatpush2.bf16.msra.mxu0 0
    %1869 = vmatprep.subr.bf16.mxu0 0
    %1870 = vmatpush2.bf16.msra.mxu0 0
    %1871 = vmatprep.subr.bf16.mxu0 0
    %1872 = vmatpush2.bf16.msra.mxu0 0
    %1873 = vmatprep.subr.bf16.mxu0 0
    %1874 = vmatpush2.bf16.msra.mxu0 0
    %1875 = vmatprep.subr.bf16.mxu0 0
    %1876 = vmatpush2.bf16.msra.mxu0 0
    %1877 = vmatprep.mubr.bf16.mxu0 0
    %1878 = vmatmul.mubr.bf16.gmra.mxu0 %v490
    %v1879 = vpop.f32.mrf.mxu0
    %v1880 = vadd.f32 0.0, %v1879
    %v1881 = vpop.f32.mrf.mxu0
    %v1882 = vpop.f32.mrf.mxu0
    %v1883 = vadd.f32 0.0, %v1882
    %v1884 = vpop.f32.mrf.mxu0
    %1885 = vmatprep.mubr.bf16.mxu0 0
    %1886 = vmatmul.mubr.bf16.gmra.mxu0 %v493
    %v1887 = vpop.f32.mrf.mxu0
    %v1888 = vadd.f32 0.0, %v1887
    %v1889 = vpop.f32.mrf.mxu0
    %v1890 = vpop.f32.mrf.mxu0
    %v1891 = vadd.f32 0.0, %v1890
    %v1892 = vpop.f32.mrf.mxu0
    %1893 = vmatprep.mubr.bf16.mxu0 0
    %1894 = vmatmul.mubr.bf16.gmra.mxu0 %v496
    %v1895 = vpop.f32.mrf.mxu0
    %v1896 = vadd.f32 0.0, %v1895
    %v1897 = vpop.f32.mrf.mxu0
    %v1898 = vpop.f32.mrf.mxu0
    %v1899 = vadd.f32 0.0, %v1898
    %v1900 = vpop.f32.mrf.mxu0
    %1901 = vmatprep.mubr.bf16.mxu0 0
    %1902 = vmatmul.mubr.bf16.gmra.mxu0 %v499
    %v1903 = vpop.f32.mrf.mxu0
    %v1904 = vadd.f32 0.0, %v1903
    %v1905 = vpop.f32.mrf.mxu0
    %v1906 = vpop.f32.mrf.mxu0
    %v1907 = vadd.f32 0.0, %v1906
    %v1908 = vpop.f32.mrf.mxu0
    %1909 = vmatprep.mubr.bf16.mxu0 0
    %1910 = vmatmul.mubr.bf16.gmra.mxu0 %v502
    %v1911 = vpop.f32.mrf.mxu0
    %v1912 = vadd.f32 0.0, %v1911
    %v1913 = vpop.f32.mrf.mxu0
    %v1914 = vpop.f32.mrf.mxu0
    %v1915 = vadd.f32 0.0, %v1914
    %v1916 = vpop.f32.mrf.mxu0
    %1917 = vmatprep.mubr.bf16.mxu0 0
    %1918 = vmatmul.mubr.bf16.gmra.mxu0 %v505
    %v1919 = vpop.f32.mrf.mxu0
    %v1920 = vadd.f32 0.0, %v1919
    %v1921 = vpop.f32.mrf.mxu0
    %v1922 = vpop.f32.mrf.mxu0
    %v1923 = vadd.f32 0.0, %v1922
    %v1924 = vpop.f32.mrf.mxu0
    %1925 = vmatprep.mubr.bf16.mxu0 0
    %1926 = vmatmul.mubr.bf16.gmra.mxu0 %v508
    %v1927 = vpop.f32.mrf.mxu0
    %v1928 = vadd.f32 0.0, %v1927
    %v1929 = vpop.f32.mrf.mxu0
    %v1930 = vpop.f32.mrf.mxu0
    %v1931 = vadd.f32 0.0, %v1930
    %v1932 = vpop.f32.mrf.mxu0
    %1933 = vmatprep.mubr.bf16.mxu0 0
    %1934 = vmatmul.mubr.bf16.gmra.mxu0 %v511
    %v1935 = vpop.f32.mrf.mxu0
    %v1936 = vadd.f32 0.0, %v1935
    %v1937 = vpop.f32.mrf.mxu0
    %v1938 = vpop.f32.mrf.mxu0
    %v1939 = vadd.f32 0.0, %v1938
    %v1940 = vpop.f32.mrf.mxu0
    %1941 = vdwg.mxu0
    %1958 = vrot.lane.b32.xlu0 %v1880, 32
    %v1959 = vpop.permute.xlu0 %1958
    %1960 = vrot.lane.b32.xlu0 %v1883, 32
    %v1961 = vpop.permute.xlu0 %1960
    %1962 = vrot.lane.b32.xlu0 %v1888, 32
    %v1963 = vpop.permute.xlu0 %1962
    %1964 = vrot.lane.b32.xlu0 %v1891, 32
    %v1965 = vpop.permute.xlu0 %1964
    %1966 = vrot.lane.b32.xlu0 %v1896, 32
    %v1967 = vpop.permute.xlu0 %1966
    %1968 = vrot.lane.b32.xlu0 %v1899, 32
    %v1969 = vpop.permute.xlu0 %1968
    %1970 = vrot.lane.b32.xlu0 %v1904, 32
    %v1971 = vpop.permute.xlu0 %1970
    %1972 = vrot.lane.b32.xlu0 %v1907, 32
    %v1973 = vpop.permute.xlu0 %1972
    %1974 = vrot.lane.b32.xlu0 %v1912, 32
    %v1975 = vpop.permute.xlu0 %1974
    %1976 = vrot.lane.b32.xlu0 %v1915, 32
    %v1977 = vpop.permute.xlu0 %1976
    %1978 = vrot.lane.b32.xlu0 %v1920, 32
    %v1979 = vpop.permute.xlu0 %1978
    %1980 = vrot.lane.b32.xlu0 %v1923, 32
    %v1981 = vpop.permute.xlu0 %1980
    %1982 = vrot.lane.b32.xlu0 %v1928, 32
    %v1983 = vpop.permute.xlu0 %1982
    %1984 = vrot.lane.b32.xlu0 %v1931, 32
    %v1985 = vpop.permute.xlu0 %1984
    %1986 = vrot.lane.b32.xlu0 %v1936, 32
    %v1987 = vpop.permute.xlu0 %1986
    %1988 = vrot.lane.b32.xlu0 %v1939, 32
    %v1989 = vpop.permute.xlu0 %1988
    %v2006 = vadd.f32 %v323, %v1959
    %v2007 = vadd.f32 %v326, %v1961
    %v2008 = vadd.f32 %v331, %v1963
    %v2009 = vadd.f32 %v334, %v1965
    %v2010 = vadd.f32 %v339, %v1967
    %v2011 = vadd.f32 %v342, %v1969
    %v2012 = vadd.f32 %v347, %v1971
    %v2013 = vadd.f32 %v350, %v1973
    %v2014 = vadd.f32 %v355, %v1975
    %v2015 = vadd.f32 %v358, %v1977
    %v2016 = vadd.f32 %v363, %v1979
    %v2017 = vadd.f32 %v366, %v1981
    %v2018 = vadd.f32 %v371, %v1983
    %v2019 = vadd.f32 %v374, %v1985
    %v2020 = vadd.f32 %v379, %v1987
    %v2021 = vadd.f32 %v382, %v1989
    %v2022 = vxor.u32 %v2006, 2147483648
    %v2023 = vxor.u32 %v2007, 2147483648
    %v2024 = vxor.u32 %v2008, 2147483648
    %v2025 = vxor.u32 %v2009, 2147483648
    %v2026 = vxor.u32 %v2010, 2147483648
    %v2027 = vxor.u32 %v2011, 2147483648
    %v2028 = vxor.u32 %v2012, 2147483648
    %v2029 = vxor.u32 %v2013, 2147483648
    %v2030 = vmul.f32 %v2022, 1.442695
    %v2031 = vpow.pop %v2030
    %v2032 = vmul.f32 %v2023, 1.442695
    %v2033 = vpow.pop %v2032
    %v2034 = vmul.f32 %v2024, 1.442695
    %v2035 = vpow.pop %v2034
    %v2036 = vmul.f32 %v2025, 1.442695
    %v2037 = vpow.pop %v2036
    %v2038 = vmul.f32 %v2026, 1.442695
    %v2039 = vpow.pop %v2038
    %v2040 = vmul.f32 %v2027, 1.442695
    %v2041 = vpow.pop %v2040
    %v2042 = vmul.f32 %v2028, 1.442695
    %v2043 = vpow.pop %v2042
    %v2044 = vmul.f32 %v2029, 1.442695
    %v2045 = vpow.pop %v2044
    %v2046 = vadd.f32 %v2031, 1.0
    %v2047 = vadd.f32 %v2033, 1.0
    %v2048 = vadd.f32 %v2035, 1.0
    %v2049 = vadd.f32 %v2037, 1.0
    %v2050 = vadd.f32 %v2039, 1.0
    %v2051 = vadd.f32 %v2041, 1.0
    %v2052 = vadd.f32 %v2043, 1.0
    %v2053 = vadd.f32 %v2045, 1.0
    %v2054 = vrcp.pop %v2046
    %v2055 = vmul.f32 1.0, %v2054
    %v2056 = vrcp.pop %v2047
    %v2057 = vmul.f32 1.0, %v2056
    %v2058 = vrcp.pop %v2048
    %v2059 = vmul.f32 1.0, %v2058
    %v2060 = vrcp.pop %v2049
    %v2061 = vmul.f32 1.0, %v2060
    %v2062 = vrcp.pop %v2050
    %v2063 = vmul.f32 1.0, %v2062
    %v2064 = vrcp.pop %v2051
    %v2065 = vmul.f32 1.0, %v2064
    %v2066 = vrcp.pop %v2052
    %v2067 = vmul.f32 1.0, %v2066
    %v2068 = vrcp.pop %v2053
    %v2069 = vmul.f32 1.0, %v2068
    %v2070 = vtanh.pop %v2014
    %v2071 = vtanh.pop %v2015
    %v2072 = vtanh.pop %v2016
    %v2073 = vtanh.pop %v2017
    %v2074 = vxor.u32 %v2018, 2147483648
    %v2075 = vxor.u32 %v2019, 2147483648
    %v2076 = vxor.u32 %v2020, 2147483648
    %v2077 = vxor.u32 %v2021, 2147483648
    %v2078 = vmul.f32 %v2074, 1.442695
    %v2079 = vpow.pop %v2078
    %v2080 = vmul.f32 %v2075, 1.442695
    %v2081 = vpow.pop %v2080
    %v2082 = vmul.f32 %v2076, 1.442695
    %v2083 = vpow.pop %v2082
    %v2084 = vmul.f32 %v2077, 1.442695
    %v2085 = vpow.pop %v2084
    %v2086 = vadd.f32 %v2079, 1.0
    %v2087 = vadd.f32 %v2081, 1.0
    %v2088 = vadd.f32 %v2083, 1.0
    %v2089 = vadd.f32 %v2085, 1.0
    %v2090 = vrcp.pop %v2086
    %v2091 = vmul.f32 1.0, %v2090
    %v2092 = vrcp.pop %v2087
    %v2093 = vmul.f32 1.0, %v2092
    %v2094 = vrcp.pop %v2088
    %v2095 = vmul.f32 1.0, %v2094
    %v2096 = vrcp.pop %v2089
    %v2097 = vmul.f32 1.0, %v2096
    %2102 = vrot.lane.b32.xlu0 %v1515, 16
    %v2103 = vpop.permute.xlu0 %2102
    %2104 = vrot.lane.b32.xlu0 %v1516, 16
    %v2105 = vpop.permute.xlu0 %2104
    %2106 = vrot.lane.b32.xlu0 %v1517, 16
    %v2107 = vpop.permute.xlu0 %2106
    %2108 = vrot.lane.b32.xlu0 %v1518, 16
    %v2109 = vpop.permute.xlu0 %2108
    %v2114 = vmul.f32 %v2063, %v2103
    %v2115 = vmul.f32 %v2065, %v2105
    %v2116 = vmul.f32 %v2067, %v2107
    %v2117 = vmul.f32 %v2069, %v2109
    %v2118 = vmul.f32 %v2055, %v2070
    %v2119 = vmul.f32 %v2057, %v2071
    %v2120 = vmul.f32 %v2059, %v2072
    %v2121 = vmul.f32 %v2061, %v2073
    %v2122 = vadd.f32 %v2114, %v2118
    %v2123 = vadd.f32 %v2115, %v2119
    %v2124 = vadd.f32 %v2116, %v2120
    %v2125 = vadd.f32 %v2117, %v2121
    %v2126 = vtanh.pop %v2122
    %v2127 = vtanh.pop %v2123
    %v2128 = vtanh.pop %v2124
    %v2129 = vtanh.pop %v2125
    %v2130 = vmul.f32 %v2091, %v2126
    %v2131 = vmul.f32 %v2093, %v2127
    %v2132 = vmul.f32 %v2095, %v2128
    %v2133 = vmul.f32 %v2097, %v2129
    %v2134 = vpack.c.bf16 %v2131, %v2130
    %v2135 = vpack.c.bf16 %v2133, %v2132
    %v2136 = vpack.c.bf16 %v1842, %v1841
    %v2137 = vpack.c.bf16 %v1844, %v1843
    %2138 = vmatprep.subr.bf16.mxu0 0
    %2139 = vmatpush1.bf16.msra.mxu0 0
    %2140 = vmatprep.subr.bf16.mxu0 0
    %2141 = vmatpush1.bf16.msra.mxu0 0
    %2142 = vmatprep.subr.bf16.mxu0 0
    %2143 = vmatpush1.bf16.msra.mxu0 0
    %2144 = vmatprep.subr.bf16.mxu0 0
    %2145 = vmatpush1.bf16.msra.mxu0 0
    %2146 = vmatprep.subr.bf16.mxu0 0
    %2147 = vmatpush1.bf16.msra.mxu0 0
    %2148 = vmatprep.subr.bf16.mxu0 0
    %2149 = vmatpush1.bf16.msra.mxu0 0
    %2150 = vmatprep.subr.bf16.mxu0 0
    %2151 = vmatpush1.bf16.msra.mxu0 %v2137
    %2152 = vmatprep.subr.bf16.mxu0 0
    %2153 = vmatpush1.bf16.msra.mxu0 %v2136
    %2154 = vmatprep.subr.bf16.mxu0 0
    %2155 = vmatpush2.bf16.msra.mxu0 0
    %2156 = vmatprep.subr.bf16.mxu0 0
    %2157 = vmatpush2.bf16.msra.mxu0 0
    %2158 = vmatprep.subr.bf16.mxu0 0
    %2159 = vmatpush2.bf16.msra.mxu0 0
    %2160 = vmatprep.subr.bf16.mxu0 0
    %2161 = vmatpush2.bf16.msra.mxu0 0
    %2162 = vmatprep.subr.bf16.mxu0 0
    %2163 = vmatpush2.bf16.msra.mxu0 0
    %2164 = vmatprep.subr.bf16.mxu0 0
    %2165 = vmatpush2.bf16.msra.mxu0 0
    %2166 = vmatprep.subr.bf16.mxu0 0
    %2167 = vmatpush2.bf16.msra.mxu0 0
    %2168 = vmatprep.subr.bf16.mxu0 0
    %2169 = vmatpush2.bf16.msra.mxu0 0
    %2170 = vmatprep.mubr.bf16.mxu0 0
    %2171 = vmatmul.mubr.bf16.gmra.mxu0 %v765
    %v2172 = vpop.f32.mrf.mxu0
    %v2173 = vadd.f32 0.0, %v2172
    %v2174 = vpop.f32.mrf.mxu0
    %v2175 = vpop.f32.mrf.mxu0
    %v2176 = vadd.f32 0.0, %v2175
    %v2177 = vpop.f32.mrf.mxu0
    %2178 = vmatprep.mubr.bf16.mxu0 0
    %2179 = vmatmul.mubr.bf16.gmra.mxu0 %v768
    %v2180 = vpop.f32.mrf.mxu0
    %v2181 = vadd.f32 0.0, %v2180
    %v2182 = vpop.f32.mrf.mxu0
    %v2183 = vpop.f32.mrf.mxu0
    %v2184 = vadd.f32 0.0, %v2183
    %v2185 = vpop.f32.mrf.mxu0
    %2186 = vmatprep.mubr.bf16.mxu0 0
    %2187 = vmatmul.mubr.bf16.gmra.mxu0 %v771
    %v2188 = vpop.f32.mrf.mxu0
    %v2189 = vadd.f32 0.0, %v2188
    %v2190 = vpop.f32.mrf.mxu0
    %v2191 = vpop.f32.mrf.mxu0
    %v2192 = vadd.f32 0.0, %v2191
    %v2193 = vpop.f32.mrf.mxu0
    %2194 = vmatprep.mubr.bf16.mxu0 0
    %2195 = vmatmul.mubr.bf16.gmra.mxu0 %v774
    %v2196 = vpop.f32.mrf.mxu0
    %v2197 = vadd.f32 0.0, %v2196
    %v2198 = vpop.f32.mrf.mxu0
    %v2199 = vpop.f32.mrf.mxu0
    %v2200 = vadd.f32 0.0, %v2199
    %v2201 = vpop.f32.mrf.mxu0
    %2202 = vmatprep.mubr.bf16.mxu0 0
    %2203 = vmatmul.mubr.bf16.gmra.mxu0 %v777
    %v2204 = vpop.f32.mrf.mxu0
    %v2205 = vadd.f32 0.0, %v2204
    %v2206 = vpop.f32.mrf.mxu0
    %v2207 = vpop.f32.mrf.mxu0
    %v2208 = vadd.f32 0.0, %v2207
    %v2209 = vpop.f32.mrf.mxu0
    %2210 = vmatprep.mubr.bf16.mxu0 0
    %2211 = vmatmul.mubr.bf16.gmra.mxu0 %v780
    %v2212 = vpop.f32.mrf.mxu0
    %v2213 = vadd.f32 0.0, %v2212
    %v2214 = vpop.f32.mrf.mxu0
    %v2215 = vpop.f32.mrf.mxu0
    %v2216 = vadd.f32 0.0, %v2215
    %v2217 = vpop.f32.mrf.mxu0
    %2218 = vmatprep.mubr.bf16.mxu0 0
    %2219 = vmatmul.mubr.bf16.gmra.mxu0 %v783
    %v2220 = vpop.f32.mrf.mxu0
    %v2221 = vadd.f32 0.0, %v2220
    %v2222 = vpop.f32.mrf.mxu0
    %v2223 = vpop.f32.mrf.mxu0
    %v2224 = vadd.f32 0.0, %v2223
    %v2225 = vpop.f32.mrf.mxu0
    %2226 = vmatprep.mubr.bf16.mxu0 0
    %2227 = vmatmul.mubr.bf16.gmra.mxu0 %v786
    %v2228 = vpop.f32.mrf.mxu0
    %v2229 = vadd.f32 0.0, %v2228
    %v2230 = vpop.f32.mrf.mxu0
    %v2231 = vpop.f32.mrf.mxu0
    %v2232 = vadd.f32 0.0, %v2231
    %v2233 = vpop.f32.mrf.mxu0
    %2234 = vdwg.mxu0
    %2237 = vrot.lane.b32.xlu0 %v2134, 96
    %v2238 = vpop.permute.xlu0 %2237
    %2239 = vrot.lane.b32.xlu0 %v2135, 96
    %v2240 = vpop.permute.xlu0 %2239
    %2243 = vmatprep.subr.bf16.mxu0 0
    %2244 = vmatpush1.bf16.msra.mxu0 0
    %2245 = vmatprep.subr.bf16.mxu0 0
    %2246 = vmatpush1.bf16.msra.mxu0 0
    %2247 = vmatprep.subr.bf16.mxu0 0
    %2248 = vmatpush1.bf16.msra.mxu0 0
    %2249 = vmatprep.subr.bf16.mxu0 0
    %2250 = vmatpush1.bf16.msra.mxu0 0
    %2251 = vmatprep.subr.bf16.mxu0 0
    %2252 = vmatpush1.bf16.msra.mxu0 0
    %2253 = vmatprep.subr.bf16.mxu0 0
    %2254 = vmatpush1.bf16.msra.mxu0 0
    %2255 = vmatprep.subr.bf16.mxu0 0
    %2256 = vmatpush1.bf16.msra.mxu0 %v2240
    %2257 = vmatprep.subr.bf16.mxu0 0
    %2258 = vmatpush1.bf16.msra.mxu0 %v2238
    %2259 = vmatprep.subr.bf16.mxu0 0
    %2260 = vmatpush2.bf16.msra.mxu0 0
    %2261 = vmatprep.subr.bf16.mxu0 0
    %2262 = vmatpush2.bf16.msra.mxu0 0
    %2263 = vmatprep.subr.bf16.mxu0 0
    %2264 = vmatpush2.bf16.msra.mxu0 0
    %2265 = vmatprep.subr.bf16.mxu0 0
    %2266 = vmatpush2.bf16.msra.mxu0 0
    %2267 = vmatprep.subr.bf16.mxu0 0
    %2268 = vmatpush2.bf16.msra.mxu0 0
    %2269 = vmatprep.subr.bf16.mxu0 0
    %2270 = vmatpush2.bf16.msra.mxu0 0
    %2271 = vmatprep.subr.bf16.mxu0 0
    %2272 = vmatpush2.bf16.msra.mxu0 0
    %2273 = vmatprep.subr.bf16.mxu0 0
    %2274 = vmatpush2.bf16.msra.mxu0 0
    %2275 = vmatprep.mubr.bf16.mxu0 0
    %2276 = vmatmul.mubr.bf16.gmra.mxu0 %v926
    %v2277 = vpop.f32.mrf.mxu0
    %v2278 = vadd.f32 %v2173, %v2277
    %v2279 = vpop.f32.mrf.mxu0
    %v2280 = vpop.f32.mrf.mxu0
    %v2281 = vadd.f32 %v2176, %v2280
    %v2282 = vpop.f32.mrf.mxu0
    %2283 = vmatprep.mubr.bf16.mxu0 0
    %2284 = vmatmul.mubr.bf16.gmra.mxu0 %v929
    %v2285 = vpop.f32.mrf.mxu0
    %v2286 = vadd.f32 %v2181, %v2285
    %v2287 = vpop.f32.mrf.mxu0
    %v2288 = vpop.f32.mrf.mxu0
    %v2289 = vadd.f32 %v2184, %v2288
    %v2290 = vpop.f32.mrf.mxu0
    %2291 = vmatprep.mubr.bf16.mxu0 0
    %2292 = vmatmul.mubr.bf16.gmra.mxu0 %v932
    %v2293 = vpop.f32.mrf.mxu0
    %v2294 = vadd.f32 %v2189, %v2293
    %v2295 = vpop.f32.mrf.mxu0
    %v2296 = vpop.f32.mrf.mxu0
    %v2297 = vadd.f32 %v2192, %v2296
    %v2298 = vpop.f32.mrf.mxu0
    %2299 = vmatprep.mubr.bf16.mxu0 0
    %2300 = vmatmul.mubr.bf16.gmra.mxu0 %v935
    %v2301 = vpop.f32.mrf.mxu0
    %v2302 = vadd.f32 %v2197, %v2301
    %v2303 = vpop.f32.mrf.mxu0
    %v2304 = vpop.f32.mrf.mxu0
    %v2305 = vadd.f32 %v2200, %v2304
    %v2306 = vpop.f32.mrf.mxu0
    %2307 = vmatprep.mubr.bf16.mxu0 0
    %2308 = vmatmul.mubr.bf16.gmra.mxu0 %v938
    %v2309 = vpop.f32.mrf.mxu0
    %v2310 = vadd.f32 %v2205, %v2309
    %v2311 = vpop.f32.mrf.mxu0
    %v2312 = vpop.f32.mrf.mxu0
    %v2313 = vadd.f32 %v2208, %v2312
    %v2314 = vpop.f32.mrf.mxu0
    %2315 = vmatprep.mubr.bf16.mxu0 0
    %2316 = vmatmul.mubr.bf16.gmra.mxu0 %v941
    %v2317 = vpop.f32.mrf.mxu0
    %v2318 = vadd.f32 %v2213, %v2317
    %v2319 = vpop.f32.mrf.mxu0
    %v2320 = vpop.f32.mrf.mxu0
    %v2321 = vadd.f32 %v2216, %v2320
    %v2322 = vpop.f32.mrf.mxu0
    %2323 = vmatprep.mubr.bf16.mxu0 0
    %2324 = vmatmul.mubr.bf16.gmra.mxu0 %v944
    %v2325 = vpop.f32.mrf.mxu0
    %v2326 = vadd.f32 %v2221, %v2325
    %v2327 = vpop.f32.mrf.mxu0
    %v2328 = vpop.f32.mrf.mxu0
    %v2329 = vadd.f32 %v2224, %v2328
    %v2330 = vpop.f32.mrf.mxu0
    %2331 = vmatprep.mubr.bf16.mxu0 0
    %2332 = vmatmul.mubr.bf16.gmra.mxu0 %v947
    %v2333 = vpop.f32.mrf.mxu0
    %v2334 = vadd.f32 %v2229, %v2333
    %v2335 = vpop.f32.mrf.mxu0
    %v2336 = vpop.f32.mrf.mxu0
    %v2337 = vadd.f32 %v2232, %v2336
    %v2338 = vpop.f32.mrf.mxu0
    %2339 = vdwg.mxu0
    %v2340 = vadd.f32 %v2278, %v1049
    %v2341 = vadd.f32 %v2281, %v1054
    %v2342 = vadd.f32 %v2286, %v1059
    %v2343 = vadd.f32 %v2289, %v1064
    %v2344 = vadd.f32 %v2294, %v1069
    %v2345 = vadd.f32 %v2297, %v1074
    %v2346 = vadd.f32 %v2302, %v1079
    %v2347 = vadd.f32 %v2305, %v1084
    %v2348 = vadd.f32 %v2310, %v1089
    %v2349 = vadd.f32 %v2313, %v1094
    %v2350 = vadd.f32 %v2318, %v1099
    %v2351 = vadd.f32 %v2321, %v1104
    %v2352 = vadd.f32 %v2326, %v1109
    %v2353 = vadd.f32 %v2329, %v1114
    %v2354 = vadd.f32 %v2334, %v1119
    %v2355 = vadd.f32 %v2337, %v1124
    %v2356 = vxor.u32 %v2340, 2147483648
    %v2357 = vxor.u32 %v2341, 2147483648
    %v2358 = vxor.u32 %v2342, 2147483648
    %v2359 = vxor.u32 %v2343, 2147483648
    %v2360 = vxor.u32 %v2344, 2147483648
    %v2361 = vxor.u32 %v2345, 2147483648
    %v2362 = vxor.u32 %v2346, 2147483648
    %v2363 = vxor.u32 %v2347, 2147483648
    %v2364 = vmul.f32 %v2356, 1.442695
    %v2365 = vpow.pop %v2364
    %v2366 = vmul.f32 %v2357, 1.442695
    %v2367 = vpow.pop %v2366
    %v2368 = vmul.f32 %v2358, 1.442695
    %v2369 = vpow.pop %v2368
    %v2370 = vmul.f32 %v2359, 1.442695
    %v2371 = vpow.pop %v2370
    %v2372 = vmul.f32 %v2360, 1.442695
    %v2373 = vpow.pop %v2372
    %v2374 = vmul.f32 %v2361, 1.442695
    %v2375 = vpow.pop %v2374
    %v2376 = vmul.f32 %v2362, 1.442695
    %v2377 = vpow.pop %v2376
    %v2378 = vmul.f32 %v2363, 1.442695
    %v2379 = vpow.pop %v2378
    %v2380 = vadd.f32 %v2365, 1.0
    %v2381 = vadd.f32 %v2367, 1.0
    %v2382 = vadd.f32 %v2369, 1.0
    %v2383 = vadd.f32 %v2371, 1.0
    %v2384 = vadd.f32 %v2373, 1.0
    %v2385 = vadd.f32 %v2375, 1.0
    %v2386 = vadd.f32 %v2377, 1.0
    %v2387 = vadd.f32 %v2379, 1.0
    %v2388 = vrcp.pop %v2380
    %v2389 = vmul.f32 1.0, %v2388
    %v2390 = vrcp.pop %v2381
    %v2391 = vmul.f32 1.0, %v2390
    %v2392 = vrcp.pop %v2382
    %v2393 = vmul.f32 1.0, %v2392
    %v2394 = vrcp.pop %v2383
    %v2395 = vmul.f32 1.0, %v2394
    %v2396 = vrcp.pop %v2384
    %v2397 = vmul.f32 1.0, %v2396
    %v2398 = vrcp.pop %v2385
    %v2399 = vmul.f32 1.0, %v2398
    %v2400 = vrcp.pop %v2386
    %v2401 = vmul.f32 1.0, %v2400
    %v2402 = vrcp.pop %v2387
    %v2403 = vmul.f32 1.0, %v2402
    %v2404 = vtanh.pop %v2348
    %v2405 = vtanh.pop %v2349
    %v2406 = vtanh.pop %v2350
    %v2407 = vtanh.pop %v2351
    %v2408 = vxor.u32 %v2352, 2147483648
    %v2409 = vxor.u32 %v2353, 2147483648
    %v2410 = vxor.u32 %v2354, 2147483648
    %v2411 = vxor.u32 %v2355, 2147483648
    %v2412 = vmul.f32 %v2408, 1.442695
    %v2413 = vpow.pop %v2412
    %v2414 = vmul.f32 %v2409, 1.442695
    %v2415 = vpow.pop %v2414
    %v2416 = vmul.f32 %v2410, 1.442695
    %v2417 = vpow.pop %v2416
    %v2418 = vmul.f32 %v2411, 1.442695
    %v2419 = vpow.pop %v2418
    %v2420 = vadd.f32 %v2413, 1.0
    %v2421 = vadd.f32 %v2415, 1.0
    %v2422 = vadd.f32 %v2417, 1.0
    %v2423 = vadd.f32 %v2419, 1.0
    %v2424 = vrcp.pop %v2420
    %v2425 = vmul.f32 1.0, %v2424
    %v2426 = vrcp.pop %v2421
    %v2427 = vmul.f32 1.0, %v2426
    %v2428 = vrcp.pop %v2422
    %v2429 = vmul.f32 1.0, %v2428
    %v2430 = vrcp.pop %v2423
    %v2431 = vmul.f32 1.0, %v2430
    %v2432 = vmul.f32 %v2397, %v1833
    %v2433 = vmul.f32 %v2399, %v1834
    %v2434 = vmul.f32 %v2401, %v1835
    %v2435 = vmul.f32 %v2403, %v1836
    %v2436 = vmul.f32 %v2389, %v2404
    %v2437 = vmul.f32 %v2391, %v2405
    %v2438 = vmul.f32 %v2393, %v2406
    %v2439 = vmul.f32 %v2395, %v2407
    %v2440 = vadd.f32 %v2432, %v2436
    %v2441 = vadd.f32 %v2433, %v2437
    %v2442 = vadd.f32 %v2434, %v2438
    %v2443 = vadd.f32 %v2435, %v2439
    %v2444 = vtanh.pop %v2440
    %v2445 = vtanh.pop %v2441
    %v2446 = vtanh.pop %v2442
    %v2447 = vtanh.pop %v2443
    %v2448 = vmul.f32 %v2425, %v2444
    %v2449 = vmul.f32 %v2427, %v2445
    %v2450 = vmul.f32 %v2429, %v2446
    %v2451 = vmul.f32 %v2431, %v2447
    %2452 = vmatprep.subr.bf16.mxu0 0
    %2453 = vmatpush1.bf16.msra.mxu0 0
    %2454 = vmatprep.subr.bf16.mxu0 0
    %2455 = vmatpush1.bf16.msra.mxu0 0
    %2456 = vmatprep.subr.bf16.mxu0 0
    %2457 = vmatpush1.bf16.msra.mxu0 0
    %2458 = vmatprep.subr.bf16.mxu0 0
    %2459 = vmatpush1.bf16.msra.mxu0 0
    %2460 = vmatprep.subr.bf16.mxu0 0
    %2461 = vmatpush1.bf16.msra.mxu0 0
    %2462 = vmatprep.subr.bf16.mxu0 0
    %2463 = vmatpush1.bf16.msra.mxu0 0
    %2464 = vmatprep.subr.bf16.mxu0 0
    %2465 = vmatpush1.bf16.msra.mxu0 %v2240
    %2466 = vmatprep.subr.bf16.mxu0 0
    %2467 = vmatpush1.bf16.msra.mxu0 %v2238
    %2468 = vmatprep.subr.bf16.mxu0 0
    %2469 = vmatpush2.bf16.msra.mxu0 0
    %2470 = vmatprep.subr.bf16.mxu0 0
    %2471 = vmatpush2.bf16.msra.mxu0 0
    %2472 = vmatprep.subr.bf16.mxu0 0
    %2473 = vmatpush2.bf16.msra.mxu0 0
    %2474 = vmatprep.subr.bf16.mxu0 0
    %2475 = vmatpush2.bf16.msra.mxu0 0
    %2476 = vmatprep.subr.bf16.mxu0 0
    %2477 = vmatpush2.bf16.msra.mxu0 0
    %2478 = vmatprep.subr.bf16.mxu0 0
    %2479 = vmatpush2.bf16.msra.mxu0 0
    %2480 = vmatprep.subr.bf16.mxu0 0
    %2481 = vmatpush2.bf16.msra.mxu0 0
    %2482 = vmatprep.subr.bf16.mxu0 0
    %2483 = vmatpush2.bf16.msra.mxu0 0
    %2484 = vmatprep.mubr.bf16.mxu0 0
    %2485 = vmatmul.mubr.bf16.gmra.mxu0 %v490
    %v2486 = vpop.f32.mrf.mxu0
    %v2487 = vadd.f32 0.0, %v2486
    %v2488 = vpop.f32.mrf.mxu0
    %v2489 = vpop.f32.mrf.mxu0
    %v2490 = vadd.f32 0.0, %v2489
    %v2491 = vpop.f32.mrf.mxu0
    %2492 = vmatprep.mubr.bf16.mxu0 0
    %2493 = vmatmul.mubr.bf16.gmra.mxu0 %v493
    %v2494 = vpop.f32.mrf.mxu0
    %v2495 = vadd.f32 0.0, %v2494
    %v2496 = vpop.f32.mrf.mxu0
    %v2497 = vpop.f32.mrf.mxu0
    %v2498 = vadd.f32 0.0, %v2497
    %v2499 = vpop.f32.mrf.mxu0
    %2500 = vmatprep.mubr.bf16.mxu0 0
    %2501 = vmatmul.mubr.bf16.gmra.mxu0 %v496
    %v2502 = vpop.f32.mrf.mxu0
    %v2503 = vadd.f32 0.0, %v2502
    %v2504 = vpop.f32.mrf.mxu0
    %v2505 = vpop.f32.mrf.mxu0
    %v2506 = vadd.f32 0.0, %v2505
    %v2507 = vpop.f32.mrf.mxu0
    %2508 = vmatprep.mubr.bf16.mxu0 0
    %2509 = vmatmul.mubr.bf16.gmra.mxu0 %v499
    %v2510 = vpop.f32.mrf.mxu0
    %v2511 = vadd.f32 0.0, %v2510
    %v2512 = vpop.f32.mrf.mxu0
    %v2513 = vpop.f32.mrf.mxu0
    %v2514 = vadd.f32 0.0, %v2513
    %v2515 = vpop.f32.mrf.mxu0
    %2516 = vmatprep.mubr.bf16.mxu0 0
    %2517 = vmatmul.mubr.bf16.gmra.mxu0 %v502
    %v2518 = vpop.f32.mrf.mxu0
    %v2519 = vadd.f32 0.0, %v2518
    %v2520 = vpop.f32.mrf.mxu0
    %v2521 = vpop.f32.mrf.mxu0
    %v2522 = vadd.f32 0.0, %v2521
    %v2523 = vpop.f32.mrf.mxu0
    %2524 = vmatprep.mubr.bf16.mxu0 0
    %2525 = vmatmul.mubr.bf16.gmra.mxu0 %v505
    %v2526 = vpop.f32.mrf.mxu0
    %v2527 = vadd.f32 0.0, %v2526
    %v2528 = vpop.f32.mrf.mxu0
    %v2529 = vpop.f32.mrf.mxu0
    %v2530 = vadd.f32 0.0, %v2529
    %v2531 = vpop.f32.mrf.mxu0
    %2532 = vmatprep.mubr.bf16.mxu0 0
    %2533 = vmatmul.mubr.bf16.gmra.mxu0 %v508
    %v2534 = vpop.f32.mrf.mxu0
    %v2535 = vadd.f32 0.0, %v2534
    %v2536 = vpop.f32.mrf.mxu0
    %v2537 = vpop.f32.mrf.mxu0
    %v2538 = vadd.f32 0.0, %v2537
    %v2539 = vpop.f32.mrf.mxu0
    %2540 = vmatprep.mubr.bf16.mxu0 0
    %2541 = vmatmul.mubr.bf16.gmra.mxu0 %v511
    %v2542 = vpop.f32.mrf.mxu0
    %v2543 = vadd.f32 0.0, %v2542
    %v2544 = vpop.f32.mrf.mxu0
    %v2545 = vpop.f32.mrf.mxu0
    %v2546 = vadd.f32 0.0, %v2545
    %v2547 = vpop.f32.mrf.mxu0
    %2548 = vdwg.mxu0
    %2565 = vrot.lane.b32.xlu0 %v2487, 48
    %v2566 = vpop.permute.xlu0 %2565
    %2567 = vrot.lane.b32.xlu0 %v2490, 48
    %v2568 = vpop.permute.xlu0 %2567
    %2569 = vrot.lane.b32.xlu0 %v2495, 48
    %v2570 = vpop.permute.xlu0 %2569
    %2571 = vrot.lane.b32.xlu0 %v2498, 48
    %v2572 = vpop.permute.xlu0 %2571
    %2573 = vrot.lane.b32.xlu0 %v2503, 48
    %v2574 = vpop.permute.xlu0 %2573
    %2575 = vrot.lane.b32.xlu0 %v2506, 48
    %v2576 = vpop.permute.xlu0 %2575
    %2577 = vrot.lane.b32.xlu0 %v2511, 48
    %v2578 = vpop.permute.xlu0 %2577
    %2579 = vrot.lane.b32.xlu0 %v2514, 48
    %v2580 = vpop.permute.xlu0 %2579
    %2581 = vrot.lane.b32.xlu0 %v2519, 48
    %v2582 = vpop.permute.xlu0 %2581
    %2583 = vrot.lane.b32.xlu0 %v2522, 48
    %v2584 = vpop.permute.xlu0 %2583
    %2585 = vrot.lane.b32.xlu0 %v2527, 48
    %v2586 = vpop.permute.xlu0 %2585
    %2587 = vrot.lane.b32.xlu0 %v2530, 48
    %v2588 = vpop.permute.xlu0 %2587
    %2589 = vrot.lane.b32.xlu0 %v2535, 48
    %v2590 = vpop.permute.xlu0 %2589
    %2591 = vrot.lane.b32.xlu0 %v2538, 48
    %v2592 = vpop.permute.xlu0 %2591
    %2593 = vrot.lane.b32.xlu0 %v2543, 48
    %v2594 = vpop.permute.xlu0 %2593
    %2595 = vrot.lane.b32.xlu0 %v2546, 48
    %v2596 = vpop.permute.xlu0 %2595
    %v2613 = vadd.f32 %v323, %v2566
    %v2614 = vadd.f32 %v326, %v2568
    %v2615 = vadd.f32 %v331, %v2570
    %v2616 = vadd.f32 %v334, %v2572
    %v2617 = vadd.f32 %v339, %v2574
    %v2618 = vadd.f32 %v342, %v2576
    %v2619 = vadd.f32 %v347, %v2578
    %v2620 = vadd.f32 %v350, %v2580
    %v2621 = vadd.f32 %v355, %v2582
    %v2622 = vadd.f32 %v358, %v2584
    %v2623 = vadd.f32 %v363, %v2586
    %v2624 = vadd.f32 %v366, %v2588
    %v2625 = vadd.f32 %v371, %v2590
    %v2626 = vadd.f32 %v374, %v2592
    %v2627 = vadd.f32 %v379, %v2594
    %v2628 = vadd.f32 %v382, %v2596
    %v2629 = vxor.u32 %v2613, 2147483648
    %v2630 = vxor.u32 %v2614, 2147483648
    %v2631 = vxor.u32 %v2615, 2147483648
    %v2632 = vxor.u32 %v2616, 2147483648
    %v2633 = vxor.u32 %v2617, 2147483648
    %v2634 = vxor.u32 %v2618, 2147483648
    %v2635 = vxor.u32 %v2619, 2147483648
    %v2636 = vxor.u32 %v2620, 2147483648
    %v2637 = vmul.f32 %v2629, 1.442695
    %v2638 = vpow.pop %v2637
    %v2639 = vmul.f32 %v2630, 1.442695
    %v2640 = vpow.pop %v2639
    %v2641 = vmul.f32 %v2631, 1.442695
    %v2642 = vpow.pop %v2641
    %v2643 = vmul.f32 %v2632, 1.442695
    %v2644 = vpow.pop %v2643
    %v2645 = vmul.f32 %v2633, 1.442695
    %v2646 = vpow.pop %v2645
    %v2647 = vmul.f32 %v2634, 1.442695
    %v2648 = vpow.pop %v2647
    %v2649 = vmul.f32 %v2635, 1.442695
    %v2650 = vpow.pop %v2649
    %v2651 = vmul.f32 %v2636, 1.442695
    %v2652 = vpow.pop %v2651
    %v2653 = vadd.f32 %v2638, 1.0
    %v2654 = vadd.f32 %v2640, 1.0
    %v2655 = vadd.f32 %v2642, 1.0
    %v2656 = vadd.f32 %v2644, 1.0
    %v2657 = vadd.f32 %v2646, 1.0
    %v2658 = vadd.f32 %v2648, 1.0
    %v2659 = vadd.f32 %v2650, 1.0
    %v2660 = vadd.f32 %v2652, 1.0
    %v2661 = vrcp.pop %v2653
    %v2662 = vmul.f32 1.0, %v2661
    %v2663 = vrcp.pop %v2654
    %v2664 = vmul.f32 1.0, %v2663
    %v2665 = vrcp.pop %v2655
    %v2666 = vmul.f32 1.0, %v2665
    %v2667 = vrcp.pop %v2656
    %v2668 = vmul.f32 1.0, %v2667
    %v2669 = vrcp.pop %v2657
    %v2670 = vmul.f32 1.0, %v2669
    %v2671 = vrcp.pop %v2658
    %v2672 = vmul.f32 1.0, %v2671
    %v2673 = vrcp.pop %v2659
    %v2674 = vmul.f32 1.0, %v2673
    %v2675 = vrcp.pop %v2660
    %v2676 = vmul.f32 1.0, %v2675
    %v2677 = vtanh.pop %v2621
    %v2678 = vtanh.pop %v2622
    %v2679 = vtanh.pop %v2623
    %v2680 = vtanh.pop %v2624
    %v2681 = vxor.u32 %v2625, 2147483648
    %v2682 = vxor.u32 %v2626, 2147483648
    %v2683 = vxor.u32 %v2627, 2147483648
    %v2684 = vxor.u32 %v2628, 2147483648
    %v2685 = vmul.f32 %v2681, 1.442695
    %v2686 = vpow.pop %v2685
    %v2687 = vmul.f32 %v2682, 1.442695
    %v2688 = vpow.pop %v2687
    %v2689 = vmul.f32 %v2683, 1.442695
    %v2690 = vpow.pop %v2689
    %v2691 = vmul.f32 %v2684, 1.442695
    %v2692 = vpow.pop %v2691
    %v2693 = vadd.f32 %v2686, 1.0
    %v2694 = vadd.f32 %v2688, 1.0
    %v2695 = vadd.f32 %v2690, 1.0
    %v2696 = vadd.f32 %v2692, 1.0
    %v2697 = vrcp.pop %v2693
    %v2698 = vmul.f32 1.0, %v2697
    %v2699 = vrcp.pop %v2694
    %v2700 = vmul.f32 1.0, %v2699
    %v2701 = vrcp.pop %v2695
    %v2702 = vmul.f32 1.0, %v2701
    %v2703 = vrcp.pop %v2696
    %v2704 = vmul.f32 1.0, %v2703
    %2709 = vrot.lane.b32.xlu0 %v2122, 16
    %v2710 = vpop.permute.xlu0 %2709
    %2711 = vrot.lane.b32.xlu0 %v2123, 16
    %v2712 = vpop.permute.xlu0 %2711
    %2713 = vrot.lane.b32.xlu0 %v2124, 16
    %v2714 = vpop.permute.xlu0 %2713
    %2715 = vrot.lane.b32.xlu0 %v2125, 16
    %v2716 = vpop.permute.xlu0 %2715
    %v2721 = vmul.f32 %v2670, %v2710
    %v2722 = vmul.f32 %v2672, %v2712
    %v2723 = vmul.f32 %v2674, %v2714
    %v2724 = vmul.f32 %v2676, %v2716
    %v2725 = vmul.f32 %v2662, %v2677
    %v2726 = vmul.f32 %v2664, %v2678
    %v2727 = vmul.f32 %v2666, %v2679
    %v2728 = vmul.f32 %v2668, %v2680
    %v2729 = vadd.f32 %v2721, %v2725
    %v2730 = vadd.f32 %v2722, %v2726
    %v2731 = vadd.f32 %v2723, %v2727
    %v2732 = vadd.f32 %v2724, %v2728
    %v2733 = vtanh.pop %v2729
    %v2734 = vtanh.pop %v2730
    %v2735 = vtanh.pop %v2731
    %v2736 = vtanh.pop %v2732
    %v2737 = vmul.f32 %v2698, %v2733
    %v2738 = vmul.f32 %v2700, %v2734
    %v2739 = vmul.f32 %v2702, %v2735
    %v2740 = vmul.f32 %v2704, %v2736
    %v2741 = vpack.c.bf16 %v2738, %v2737
    %v2742 = vpack.c.bf16 %v2740, %v2739
    %v2743 = vpack.c.bf16 %v2449, %v2448
    %v2744 = vpack.c.bf16 %v2451, %v2450
    %2745 = vmatprep.subr.bf16.mxu0 0
    %2746 = vmatpush1.bf16.msra.mxu0 0
    %2747 = vmatprep.subr.bf16.mxu0 0
    %2748 = vmatpush1.bf16.msra.mxu0 0
    %2749 = vmatprep.subr.bf16.mxu0 0
    %2750 = vmatpush1.bf16.msra.mxu0 0
    %2751 = vmatprep.subr.bf16.mxu0 0
    %2752 = vmatpush1.bf16.msra.mxu0 0
    %2753 = vmatprep.subr.bf16.mxu0 0
    %2754 = vmatpush1.bf16.msra.mxu0 0
    %2755 = vmatprep.subr.bf16.mxu0 0
    %2756 = vmatpush1.bf16.msra.mxu0 0
    %2757 = vmatprep.subr.bf16.mxu0 0
    %2758 = vmatpush1.bf16.msra.mxu0 %v2744
    %2759 = vmatprep.subr.bf16.mxu0 0
    %2760 = vmatpush1.bf16.msra.mxu0 %v2743
    %2761 = vmatprep.subr.bf16.mxu0 0
    %2762 = vmatpush2.bf16.msra.mxu0 0
    %2763 = vmatprep.subr.bf16.mxu0 0
    %2764 = vmatpush2.bf16.msra.mxu0 0
    %2765 = vmatprep.subr.bf16.mxu0 0
    %2766 = vmatpush2.bf16.msra.mxu0 0
    %2767 = vmatprep.subr.bf16.mxu0 0
    %2768 = vmatpush2.bf16.msra.mxu0 0
    %2769 = vmatprep.subr.bf16.mxu0 0
    %2770 = vmatpush2.bf16.msra.mxu0 0
    %2771 = vmatprep.subr.bf16.mxu0 0
    %2772 = vmatpush2.bf16.msra.mxu0 0
    %2773 = vmatprep.subr.bf16.mxu0 0
    %2774 = vmatpush2.bf16.msra.mxu0 0
    %2775 = vmatprep.subr.bf16.mxu0 0
    %2776 = vmatpush2.bf16.msra.mxu0 0
    %2777 = vmatprep.mubr.bf16.mxu0 0
    %2778 = vmatmul.mubr.bf16.gmra.mxu0 %v765
    %v2779 = vpop.f32.mrf.mxu0
    %v2780 = vadd.f32 0.0, %v2779
    %v2781 = vpop.f32.mrf.mxu0
    %v2782 = vpop.f32.mrf.mxu0
    %v2783 = vadd.f32 0.0, %v2782
    %v2784 = vpop.f32.mrf.mxu0
    %2785 = vmatprep.mubr.bf16.mxu0 0
    %2786 = vmatmul.mubr.bf16.gmra.mxu0 %v768
    %v2787 = vpop.f32.mrf.mxu0
    %v2788 = vadd.f32 0.0, %v2787
    %v2789 = vpop.f32.mrf.mxu0
    %v2790 = vpop.f32.mrf.mxu0
    %v2791 = vadd.f32 0.0, %v2790
    %v2792 = vpop.f32.mrf.mxu0
    %2793 = vmatprep.mubr.bf16.mxu0 0
    %2794 = vmatmul.mubr.bf16.gmra.mxu0 %v771
    %v2795 = vpop.f32.mrf.mxu0
    %v2796 = vadd.f32 0.0, %v2795
    %v2797 = vpop.f32.mrf.mxu0
    %v2798 = vpop.f32.mrf.mxu0
    %v2799 = vadd.f32 0.0, %v2798
    %v2800 = vpop.f32.mrf.mxu0
    %2801 = vmatprep.mubr.bf16.mxu0 0
    %2802 = vmatmul.mubr.bf16.gmra.mxu0 %v774
    %v2803 = vpop.f32.mrf.mxu0
    %v2804 = vadd.f32 0.0, %v2803
    %v2805 = vpop.f32.mrf.mxu0
    %v2806 = vpop.f32.mrf.mxu0
    %v2807 = vadd.f32 0.0, %v2806
    %v2808 = vpop.f32.mrf.mxu0
    %2809 = vmatprep.mubr.bf16.mxu0 0
    %2810 = vmatmul.mubr.bf16.gmra.mxu0 %v777
    %v2811 = vpop.f32.mrf.mxu0
    %v2812 = vadd.f32 0.0, %v2811
    %v2813 = vpop.f32.mrf.mxu0
    %v2814 = vpop.f32.mrf.mxu0
    %v2815 = vadd.f32 0.0, %v2814
    %v2816 = vpop.f32.mrf.mxu0
    %2817 = vmatprep.mubr.bf16.mxu0 0
    %2818 = vmatmul.mubr.bf16.gmra.mxu0 %v780
    %v2819 = vpop.f32.mrf.mxu0
    %v2820 = vadd.f32 0.0, %v2819
    %v2821 = vpop.f32.mrf.mxu0
    %v2822 = vpop.f32.mrf.mxu0
    %v2823 = vadd.f32 0.0, %v2822
    %v2824 = vpop.f32.mrf.mxu0
    %2825 = vmatprep.mubr.bf16.mxu0 0
    %2826 = vmatmul.mubr.bf16.gmra.mxu0 %v783
    %v2827 = vpop.f32.mrf.mxu0
    %v2828 = vadd.f32 0.0, %v2827
    %v2829 = vpop.f32.mrf.mxu0
    %v2830 = vpop.f32.mrf.mxu0
    %v2831 = vadd.f32 0.0, %v2830
    %v2832 = vpop.f32.mrf.mxu0
    %2833 = vmatprep.mubr.bf16.mxu0 0
    %2834 = vmatmul.mubr.bf16.gmra.mxu0 %v786
    %v2835 = vpop.f32.mrf.mxu0
    %v2836 = vadd.f32 0.0, %v2835
    %v2837 = vpop.f32.mrf.mxu0
    %v2838 = vpop.f32.mrf.mxu0
    %v2839 = vadd.f32 0.0, %v2838
    %v2840 = vpop.f32.mrf.mxu0
    %2841 = vdwg.mxu0
    %2844 = vrot.lane.b32.xlu0 %v2741, 80
    %v2845 = vpop.permute.xlu0 %2844
    %2846 = vrot.lane.b32.xlu0 %v2742, 80
    %v2847 = vpop.permute.xlu0 %2846
    %2850 = vmatprep.subr.bf16.mxu0 0
    %2851 = vmatpush1.bf16.msra.mxu0 0
    %2852 = vmatprep.subr.bf16.mxu0 0
    %2853 = vmatpush1.bf16.msra.mxu0 0
    %2854 = vmatprep.subr.bf16.mxu0 0
    %2855 = vmatpush1.bf16.msra.mxu0 0
    %2856 = vmatprep.subr.bf16.mxu0 0
    %2857 = vmatpush1.bf16.msra.mxu0 0
    %2858 = vmatprep.subr.bf16.mxu0 0
    %2859 = vmatpush1.bf16.msra.mxu0 0
    %2860 = vmatprep.subr.bf16.mxu0 0
    %2861 = vmatpush1.bf16.msra.mxu0 0
    %2862 = vmatprep.subr.bf16.mxu0 0
    %2863 = vmatpush1.bf16.msra.mxu0 %v2847
    %2864 = vmatprep.subr.bf16.mxu0 0
    %2865 = vmatpush1.bf16.msra.mxu0 %v2845
    %2866 = vmatprep.subr.bf16.mxu0 0
    %2867 = vmatpush2.bf16.msra.mxu0 0
    %2868 = vmatprep.subr.bf16.mxu0 0
    %2869 = vmatpush2.bf16.msra.mxu0 0
    %2870 = vmatprep.subr.bf16.mxu0 0
    %2871 = vmatpush2.bf16.msra.mxu0 0
    %2872 = vmatprep.subr.bf16.mxu0 0
    %2873 = vmatpush2.bf16.msra.mxu0 0
    %2874 = vmatprep.subr.bf16.mxu0 0
    %2875 = vmatpush2.bf16.msra.mxu0 0
    %2876 = vmatprep.subr.bf16.mxu0 0
    %2877 = vmatpush2.bf16.msra.mxu0 0
    %2878 = vmatprep.subr.bf16.mxu0 0
    %2879 = vmatpush2.bf16.msra.mxu0 0
    %2880 = vmatprep.subr.bf16.mxu0 0
    %2881 = vmatpush2.bf16.msra.mxu0 0
    %2882 = vmatprep.mubr.bf16.mxu0 0
    %2883 = vmatmul.mubr.bf16.gmra.mxu0 %v926
    %v2884 = vpop.f32.mrf.mxu0
    %v2885 = vadd.f32 %v2780, %v2884
    %v2886 = vpop.f32.mrf.mxu0
    %v2887 = vpop.f32.mrf.mxu0
    %v2888 = vadd.f32 %v2783, %v2887
    %v2889 = vpop.f32.mrf.mxu0
    %2890 = vmatprep.mubr.bf16.mxu0 0
    %2891 = vmatmul.mubr.bf16.gmra.mxu0 %v929
    %v2892 = vpop.f32.mrf.mxu0
    %v2893 = vadd.f32 %v2788, %v2892
    %v2894 = vpop.f32.mrf.mxu0
    %v2895 = vpop.f32.mrf.mxu0
    %v2896 = vadd.f32 %v2791, %v2895
    %v2897 = vpop.f32.mrf.mxu0
    %2898 = vmatprep.mubr.bf16.mxu0 0
    %2899 = vmatmul.mubr.bf16.gmra.mxu0 %v932
    %v2900 = vpop.f32.mrf.mxu0
    %v2901 = vadd.f32 %v2796, %v2900
    %v2902 = vpop.f32.mrf.mxu0
    %v2903 = vpop.f32.mrf.mxu0
    %v2904 = vadd.f32 %v2799, %v2903
    %v2905 = vpop.f32.mrf.mxu0
    %2906 = vmatprep.mubr.bf16.mxu0 0
    %2907 = vmatmul.mubr.bf16.gmra.mxu0 %v935
    %v2908 = vpop.f32.mrf.mxu0
    %v2909 = vadd.f32 %v2804, %v2908
    %v2910 = vpop.f32.mrf.mxu0
    %v2911 = vpop.f32.mrf.mxu0
    %v2912 = vadd.f32 %v2807, %v2911
    %v2913 = vpop.f32.mrf.mxu0
    %2914 = vmatprep.mubr.bf16.mxu0 0
    %2915 = vmatmul.mubr.bf16.gmra.mxu0 %v938
    %v2916 = vpop.f32.mrf.mxu0
    %v2917 = vadd.f32 %v2812, %v2916
    %v2918 = vpop.f32.mrf.mxu0
    %v2919 = vpop.f32.mrf.mxu0
    %v2920 = vadd.f32 %v2815, %v2919
    %v2921 = vpop.f32.mrf.mxu0
    %2922 = vmatprep.mubr.bf16.mxu0 0
    %2923 = vmatmul.mubr.bf16.gmra.mxu0 %v941
    %v2924 = vpop.f32.mrf.mxu0
    %v2925 = vadd.f32 %v2820, %v2924
    %v2926 = vpop.f32.mrf.mxu0
    %v2927 = vpop.f32.mrf.mxu0
    %v2928 = vadd.f32 %v2823, %v2927
    %v2929 = vpop.f32.mrf.mxu0
    %2930 = vmatprep.mubr.bf16.mxu0 0
    %2931 = vmatmul.mubr.bf16.gmra.mxu0 %v944
    %v2932 = vpop.f32.mrf.mxu0
    %v2933 = vadd.f32 %v2828, %v2932
    %v2934 = vpop.f32.mrf.mxu0
    %v2935 = vpop.f32.mrf.mxu0
    %v2936 = vadd.f32 %v2831, %v2935
    %v2937 = vpop.f32.mrf.mxu0
    %2938 = vmatprep.mubr.bf16.mxu0 0
    %2939 = vmatmul.mubr.bf16.gmra.mxu0 %v947
    %v2940 = vpop.f32.mrf.mxu0
    %v2941 = vadd.f32 %v2836, %v2940
    %v2942 = vpop.f32.mrf.mxu0
    %v2943 = vpop.f32.mrf.mxu0
    %v2944 = vadd.f32 %v2839, %v2943
    %v2945 = vpop.f32.mrf.mxu0
    %2946 = vdwg.mxu0
    %v2947 = vadd.f32 %v2885, %v1049
    %v2948 = vadd.f32 %v2888, %v1054
    %v2949 = vadd.f32 %v2893, %v1059
    %v2950 = vadd.f32 %v2896, %v1064
    %v2951 = vadd.f32 %v2901, %v1069
    %v2952 = vadd.f32 %v2904, %v1074
    %v2953 = vadd.f32 %v2909, %v1079
    %v2954 = vadd.f32 %v2912, %v1084
    %v2955 = vadd.f32 %v2917, %v1089
    %v2956 = vadd.f32 %v2920, %v1094
    %v2957 = vadd.f32 %v2925, %v1099
    %v2958 = vadd.f32 %v2928, %v1104
    %v2959 = vadd.f32 %v2933, %v1109
    %v2960 = vadd.f32 %v2936, %v1114
    %v2961 = vadd.f32 %v2941, %v1119
    %v2962 = vadd.f32 %v2944, %v1124
    %v2963 = vxor.u32 %v2947, 2147483648
    %v2964 = vxor.u32 %v2948, 2147483648
    %v2965 = vxor.u32 %v2949, 2147483648
    %v2966 = vxor.u32 %v2950, 2147483648
    %v2967 = vxor.u32 %v2951, 2147483648
    %v2968 = vxor.u32 %v2952, 2147483648
    %v2969 = vxor.u32 %v2953, 2147483648
    %v2970 = vxor.u32 %v2954, 2147483648
    %v2971 = vmul.f32 %v2963, 1.442695
    %v2972 = vpow.pop %v2971
    %v2973 = vmul.f32 %v2964, 1.442695
    %v2974 = vpow.pop %v2973
    %v2975 = vmul.f32 %v2965, 1.442695
    %v2976 = vpow.pop %v2975
    %v2977 = vmul.f32 %v2966, 1.442695
    %v2978 = vpow.pop %v2977
    %v2979 = vmul.f32 %v2967, 1.442695
    %v2980 = vpow.pop %v2979
    %v2981 = vmul.f32 %v2968, 1.442695
    %v2982 = vpow.pop %v2981
    %v2983 = vmul.f32 %v2969, 1.442695
    %v2984 = vpow.pop %v2983
    %v2985 = vmul.f32 %v2970, 1.442695
    %v2986 = vpow.pop %v2985
    %v2987 = vadd.f32 %v2972, 1.0
    %v2988 = vadd.f32 %v2974, 1.0
    %v2989 = vadd.f32 %v2976, 1.0
    %v2990 = vadd.f32 %v2978, 1.0
    %v2991 = vadd.f32 %v2980, 1.0
    %v2992 = vadd.f32 %v2982, 1.0
    %v2993 = vadd.f32 %v2984, 1.0
    %v2994 = vadd.f32 %v2986, 1.0
    %v2995 = vrcp.pop %v2987
    %v2996 = vmul.f32 1.0, %v2995
    %v2997 = vrcp.pop %v2988
    %v2998 = vmul.f32 1.0, %v2997
    %v2999 = vrcp.pop %v2989
    %v3000 = vmul.f32 1.0, %v2999
    %v3001 = vrcp.pop %v2990
    %v3002 = vmul.f32 1.0, %v3001
    %v3003 = vrcp.pop %v2991
    %v3004 = vmul.f32 1.0, %v3003
    %v3005 = vrcp.pop %v2992
    %v3006 = vmul.f32 1.0, %v3005
    %v3007 = vrcp.pop %v2993
    %v3008 = vmul.f32 1.0, %v3007
    %v3009 = vrcp.pop %v2994
    %v3010 = vmul.f32 1.0, %v3009
    %v3011 = vtanh.pop %v2955
    %v3012 = vtanh.pop %v2956
    %v3013 = vtanh.pop %v2957
    %v3014 = vtanh.pop %v2958
    %v3015 = vxor.u32 %v2959, 2147483648
    %v3016 = vxor.u32 %v2960, 2147483648
    %v3017 = vxor.u32 %v2961, 2147483648
    %v3018 = vxor.u32 %v2962, 2147483648
    %v3019 = vmul.f32 %v3015, 1.442695
    %v3020 = vpow.pop %v3019
    %v3021 = vmul.f32 %v3016, 1.442695
    %v3022 = vpow.pop %v3021
    %v3023 = vmul.f32 %v3017, 1.442695
    %v3024 = vpow.pop %v3023
    %v3025 = vmul.f32 %v3018, 1.442695
    %v3026 = vpow.pop %v3025
    %v3027 = vadd.f32 %v3020, 1.0
    %v3028 = vadd.f32 %v3022, 1.0
    %v3029 = vadd.f32 %v3024, 1.0
    %v3030 = vadd.f32 %v3026, 1.0
    %v3031 = vrcp.pop %v3027
    %v3032 = vmul.f32 1.0, %v3031
    %v3033 = vrcp.pop %v3028
    %v3034 = vmul.f32 1.0, %v3033
    %v3035 = vrcp.pop %v3029
    %v3036 = vmul.f32 1.0, %v3035
    %v3037 = vrcp.pop %v3030
    %v3038 = vmul.f32 1.0, %v3037
    %v3039 = vmul.f32 %v3004, %v2440
    %v3040 = vmul.f32 %v3006, %v2441
    %v3041 = vmul.f32 %v3008, %v2442
    %v3042 = vmul.f32 %v3010, %v2443
    %v3043 = vmul.f32 %v2996, %v3011
    %v3044 = vmul.f32 %v2998, %v3012
    %v3045 = vmul.f32 %v3000, %v3013
    %v3046 = vmul.f32 %v3002, %v3014
    %v3047 = vadd.f32 %v3039, %v3043
    %v3048 = vadd.f32 %v3040, %v3044
    %v3049 = vadd.f32 %v3041, %v3045
    %v3050 = vadd.f32 %v3042, %v3046
    %v3051 = vtanh.pop %v3047
    %v3052 = vtanh.pop %v3048
    %v3053 = vtanh.pop %v3049
    %v3054 = vtanh.pop %v3050
    %v3055 = vmul.f32 %v3032, %v3051
    %v3056 = vmul.f32 %v3034, %v3052
    %v3057 = vmul.f32 %v3036, %v3053
    %v3058 = vmul.f32 %v3038, %v3054
    %3059 = vmatprep.subr.bf16.mxu0 0
    %3060 = vmatpush1.bf16.msra.mxu0 0
    %3061 = vmatprep.subr.bf16.mxu0 0
    %3062 = vmatpush1.bf16.msra.mxu0 0
    %3063 = vmatprep.subr.bf16.mxu0 0
    %3064 = vmatpush1.bf16.msra.mxu0 0
    %3065 = vmatprep.subr.bf16.mxu0 0
    %3066 = vmatpush1.bf16.msra.mxu0 0
    %3067 = vmatprep.subr.bf16.mxu0 0
    %3068 = vmatpush1.bf16.msra.mxu0 0
    %3069 = vmatprep.subr.bf16.mxu0 0
    %3070 = vmatpush1.bf16.msra.mxu0 0
    %3071 = vmatprep.subr.bf16.mxu0 0
    %3072 = vmatpush1.bf16.msra.mxu0 %v2847
    %3073 = vmatprep.subr.bf16.mxu0 0
    %3074 = vmatpush1.bf16.msra.mxu0 %v2845
    %3075 = vmatprep.subr.bf16.mxu0 0
    %3076 = vmatpush2.bf16.msra.mxu0 0
    %3077 = vmatprep.subr.bf16.mxu0 0
    %3078 = vmatpush2.bf16.msra.mxu0 0
    %3079 = vmatprep.subr.bf16.mxu0 0
    %3080 = vmatpush2.bf16.msra.mxu0 0
    %3081 = vmatprep.subr.bf16.mxu0 0
    %3082 = vmatpush2.bf16.msra.mxu0 0
    %3083 = vmatprep.subr.bf16.mxu0 0
    %3084 = vmatpush2.bf16.msra.mxu0 0
    %3085 = vmatprep.subr.bf16.mxu0 0
    %3086 = vmatpush2.bf16.msra.mxu0 0
    %3087 = vmatprep.subr.bf16.mxu0 0
    %3088 = vmatpush2.bf16.msra.mxu0 0
    %3089 = vmatprep.subr.bf16.mxu0 0
    %3090 = vmatpush2.bf16.msra.mxu0 0
    %3091 = vmatprep.mubr.bf16.mxu0 0
    %3092 = vmatmul.mubr.bf16.gmra.mxu0 %v490
    %v3093 = vpop.f32.mrf.mxu0
    %v3094 = vadd.f32 0.0, %v3093
    %v3095 = vpop.f32.mrf.mxu0
    %v3096 = vpop.f32.mrf.mxu0
    %v3097 = vadd.f32 0.0, %v3096
    %v3098 = vpop.f32.mrf.mxu0
    %3099 = vmatprep.mubr.bf16.mxu0 0
    %3100 = vmatmul.mubr.bf16.gmra.mxu0 %v493
    %v3101 = vpop.f32.mrf.mxu0
    %v3102 = vadd.f32 0.0, %v3101
    %v3103 = vpop.f32.mrf.mxu0
    %v3104 = vpop.f32.mrf.mxu0
    %v3105 = vadd.f32 0.0, %v3104
    %v3106 = vpop.f32.mrf.mxu0
    %3107 = vmatprep.mubr.bf16.mxu0 0
    %3108 = vmatmul.mubr.bf16.gmra.mxu0 %v496
    %v3109 = vpop.f32.mrf.mxu0
    %v3110 = vadd.f32 0.0, %v3109
    %v3111 = vpop.f32.mrf.mxu0
    %v3112 = vpop.f32.mrf.mxu0
    %v3113 = vadd.f32 0.0, %v3112
    %v3114 = vpop.f32.mrf.mxu0
    %3115 = vmatprep.mubr.bf16.mxu0 0
    %3116 = vmatmul.mubr.bf16.gmra.mxu0 %v499
    %v3117 = vpop.f32.mrf.mxu0
    %v3118 = vadd.f32 0.0, %v3117
    %v3119 = vpop.f32.mrf.mxu0
    %v3120 = vpop.f32.mrf.mxu0
    %v3121 = vadd.f32 0.0, %v3120
    %v3122 = vpop.f32.mrf.mxu0
    %3123 = vmatprep.mubr.bf16.mxu0 0
    %3124 = vmatmul.mubr.bf16.gmra.mxu0 %v502
    %v3125 = vpop.f32.mrf.mxu0
    %v3126 = vadd.f32 0.0, %v3125
    %v3127 = vpop.f32.mrf.mxu0
    %v3128 = vpop.f32.mrf.mxu0
    %v3129 = vadd.f32 0.0, %v3128
    %v3130 = vpop.f32.mrf.mxu0
    %3131 = vmatprep.mubr.bf16.mxu0 0
    %3132 = vmatmul.mubr.bf16.gmra.mxu0 %v505
    %v3133 = vpop.f32.mrf.mxu0
    %v3134 = vadd.f32 0.0, %v3133
    %v3135 = vpop.f32.mrf.mxu0
    %v3136 = vpop.f32.mrf.mxu0
    %v3137 = vadd.f32 0.0, %v3136
    %v3138 = vpop.f32.mrf.mxu0
    %3139 = vmatprep.mubr.bf16.mxu0 0
    %3140 = vmatmul.mubr.bf16.gmra.mxu0 %v508
    %v3141 = vpop.f32.mrf.mxu0
    %v3142 = vadd.f32 0.0, %v3141
    %v3143 = vpop.f32.mrf.mxu0
    %v3144 = vpop.f32.mrf.mxu0
    %v3145 = vadd.f32 0.0, %v3144
    %v3146 = vpop.f32.mrf.mxu0
    %3147 = vmatprep.mubr.bf16.mxu0 0
    %3148 = vmatmul.mubr.bf16.gmra.mxu0 %v511
    %v3149 = vpop.f32.mrf.mxu0
    %v3150 = vadd.f32 0.0, %v3149
    %v3151 = vpop.f32.mrf.mxu0
    %v3152 = vpop.f32.mrf.mxu0
    %v3153 = vadd.f32 0.0, %v3152
    %v3154 = vpop.f32.mrf.mxu0
    %3155 = vdwg.mxu0
    %3172 = vrot.lane.b32.xlu0 %v3094, 64
    %v3173 = vpop.permute.xlu0 %3172
    %3174 = vrot.lane.b32.xlu0 %v3097, 64
    %v3175 = vpop.permute.xlu0 %3174
    %3176 = vrot.lane.b32.xlu0 %v3102, 64
    %v3177 = vpop.permute.xlu0 %3176
    %3178 = vrot.lane.b32.xlu0 %v3105, 64
    %v3179 = vpop.permute.xlu0 %3178
    %3180 = vrot.lane.b32.xlu0 %v3110, 64
    %v3181 = vpop.permute.xlu0 %3180
    %3182 = vrot.lane.b32.xlu0 %v3113, 64
    %v3183 = vpop.permute.xlu0 %3182
    %3184 = vrot.lane.b32.xlu0 %v3118, 64
    %v3185 = vpop.permute.xlu0 %3184
    %3186 = vrot.lane.b32.xlu0 %v3121, 64
    %v3187 = vpop.permute.xlu0 %3186
    %3188 = vrot.lane.b32.xlu0 %v3126, 64
    %v3189 = vpop.permute.xlu0 %3188
    %3190 = vrot.lane.b32.xlu0 %v3129, 64
    %v3191 = vpop.permute.xlu0 %3190
    %3192 = vrot.lane.b32.xlu0 %v3134, 64
    %v3193 = vpop.permute.xlu0 %3192
    %3194 = vrot.lane.b32.xlu0 %v3137, 64
    %v3195 = vpop.permute.xlu0 %3194
    %3196 = vrot.lane.b32.xlu0 %v3142, 64
    %v3197 = vpop.permute.xlu0 %3196
    %3198 = vrot.lane.b32.xlu0 %v3145, 64
    %v3199 = vpop.permute.xlu0 %3198
    %3200 = vrot.lane.b32.xlu0 %v3150, 64
    %v3201 = vpop.permute.xlu0 %3200
    %3202 = vrot.lane.b32.xlu0 %v3153, 64
    %v3203 = vpop.permute.xlu0 %3202
    %v3220 = vadd.f32 %v323, %v3173
    %v3221 = vadd.f32 %v326, %v3175
    %v3222 = vadd.f32 %v331, %v3177
    %v3223 = vadd.f32 %v334, %v3179
    %v3224 = vadd.f32 %v339, %v3181
    %v3225 = vadd.f32 %v342, %v3183
    %v3226 = vadd.f32 %v347, %v3185
    %v3227 = vadd.f32 %v350, %v3187
    %v3228 = vadd.f32 %v355, %v3189
    %v3229 = vadd.f32 %v358, %v3191
    %v3230 = vadd.f32 %v363, %v3193
    %v3231 = vadd.f32 %v366, %v3195
    %v3232 = vadd.f32 %v371, %v3197
    %v3233 = vadd.f32 %v374, %v3199
    %v3234 = vadd.f32 %v379, %v3201
    %v3235 = vadd.f32 %v382, %v3203
    %v3236 = vxor.u32 %v3220, 2147483648
    %v3237 = vxor.u32 %v3221, 2147483648
    %v3238 = vxor.u32 %v3222, 2147483648
    %v3239 = vxor.u32 %v3223, 2147483648
    %v3240 = vxor.u32 %v3224, 2147483648
    %v3241 = vxor.u32 %v3225, 2147483648
    %v3242 = vxor.u32 %v3226, 2147483648
    %v3243 = vxor.u32 %v3227, 2147483648
    %v3244 = vmul.f32 %v3236, 1.442695
    %v3245 = vpow.pop %v3244
    %v3246 = vmul.f32 %v3237, 1.442695
    %v3247 = vpow.pop %v3246
    %v3248 = vmul.f32 %v3238, 1.442695
    %v3249 = vpow.pop %v3248
    %v3250 = vmul.f32 %v3239, 1.442695
    %v3251 = vpow.pop %v3250
    %v3252 = vmul.f32 %v3240, 1.442695
    %v3253 = vpow.pop %v3252
    %v3254 = vmul.f32 %v3241, 1.442695
    %v3255 = vpow.pop %v3254
    %v3256 = vmul.f32 %v3242, 1.442695
    %v3257 = vpow.pop %v3256
    %v3258 = vmul.f32 %v3243, 1.442695
    %v3259 = vpow.pop %v3258
    %v3260 = vadd.f32 %v3245, 1.0
    %v3261 = vadd.f32 %v3247, 1.0
    %v3262 = vadd.f32 %v3249, 1.0
    %v3263 = vadd.f32 %v3251, 1.0
    %v3264 = vadd.f32 %v3253, 1.0
    %v3265 = vadd.f32 %v3255, 1.0
    %v3266 = vadd.f32 %v3257, 1.0
    %v3267 = vadd.f32 %v3259, 1.0
    %v3268 = vrcp.pop %v3260
    %v3269 = vmul.f32 1.0, %v3268
    %v3270 = vrcp.pop %v3261
    %v3271 = vmul.f32 1.0, %v3270
    %v3272 = vrcp.pop %v3262
    %v3273 = vmul.f32 1.0, %v3272
    %v3274 = vrcp.pop %v3263
    %v3275 = vmul.f32 1.0, %v3274
    %v3276 = vrcp.pop %v3264
    %v3277 = vmul.f32 1.0, %v3276
    %v3278 = vrcp.pop %v3265
    %v3279 = vmul.f32 1.0, %v3278
    %v3280 = vrcp.pop %v3266
    %v3281 = vmul.f32 1.0, %v3280
    %v3282 = vrcp.pop %v3267
    %v3283 = vmul.f32 1.0, %v3282
    %v3284 = vtanh.pop %v3228
    %v3285 = vtanh.pop %v3229
    %v3286 = vtanh.pop %v3230
    %v3287 = vtanh.pop %v3231
    %v3288 = vxor.u32 %v3232, 2147483648
    %v3289 = vxor.u32 %v3233, 2147483648
    %v3290 = vxor.u32 %v3234, 2147483648
    %v3291 = vxor.u32 %v3235, 2147483648
    %v3292 = vmul.f32 %v3288, 1.442695
    %v3293 = vpow.pop %v3292
    %v3294 = vmul.f32 %v3289, 1.442695
    %v3295 = vpow.pop %v3294
    %v3296 = vmul.f32 %v3290, 1.442695
    %v3297 = vpow.pop %v3296
    %v3298 = vmul.f32 %v3291, 1.442695
    %v3299 = vpow.pop %v3298
    %v3300 = vadd.f32 %v3293, 1.0
    %v3301 = vadd.f32 %v3295, 1.0
    %v3302 = vadd.f32 %v3297, 1.0
    %v3303 = vadd.f32 %v3299, 1.0
    %v3304 = vrcp.pop %v3300
    %v3305 = vmul.f32 1.0, %v3304
    %v3306 = vrcp.pop %v3301
    %v3307 = vmul.f32 1.0, %v3306
    %v3308 = vrcp.pop %v3302
    %v3309 = vmul.f32 1.0, %v3308
    %v3310 = vrcp.pop %v3303
    %v3311 = vmul.f32 1.0, %v3310
    %3316 = vrot.lane.b32.xlu0 %v2729, 16
    %v3317 = vpop.permute.xlu0 %3316
    %3318 = vrot.lane.b32.xlu0 %v2730, 16
    %v3319 = vpop.permute.xlu0 %3318
    %3320 = vrot.lane.b32.xlu0 %v2731, 16
    %v3321 = vpop.permute.xlu0 %3320
    %3322 = vrot.lane.b32.xlu0 %v2732, 16
    %v3323 = vpop.permute.xlu0 %3322
    %v3328 = vmul.f32 %v3277, %v3317
    %v3329 = vmul.f32 %v3279, %v3319
    %v3330 = vmul.f32 %v3281, %v3321
    %v3331 = vmul.f32 %v3283, %v3323
    %v3332 = vmul.f32 %v3269, %v3284
    %v3333 = vmul.f32 %v3271, %v3285
    %v3334 = vmul.f32 %v3273, %v3286
    %v3335 = vmul.f32 %v3275, %v3287
    %v3336 = vadd.f32 %v3328, %v3332
    %v3337 = vadd.f32 %v3329, %v3333
    %v3338 = vadd.f32 %v3330, %v3334
    %v3339 = vadd.f32 %v3331, %v3335
    %v3340 = vtanh.pop %v3336
    %v3341 = vtanh.pop %v3337
    %v3342 = vtanh.pop %v3338
    %v3343 = vtanh.pop %v3339
    %v3344 = vmul.f32 %v3305, %v3340
    %v3345 = vmul.f32 %v3307, %v3341
    %v3346 = vmul.f32 %v3309, %v3342
    %v3347 = vmul.f32 %v3311, %v3343
    %v3348 = vpack.c.bf16 %v3345, %v3344
    %v3349 = vpack.c.bf16 %v3347, %v3346
    %v3350 = vpack.c.bf16 %v3056, %v3055
    %v3351 = vpack.c.bf16 %v3058, %v3057
    %3352 = vmatprep.subr.bf16.mxu0 0
    %3353 = vmatpush1.bf16.msra.mxu0 0
    %3354 = vmatprep.subr.bf16.mxu0 0
    %3355 = vmatpush1.bf16.msra.mxu0 0
    %3356 = vmatprep.subr.bf16.mxu0 0
    %3357 = vmatpush1.bf16.msra.mxu0 0
    %3358 = vmatprep.subr.bf16.mxu0 0
    %3359 = vmatpush1.bf16.msra.mxu0 0
    %3360 = vmatprep.subr.bf16.mxu0 0
    %3361 = vmatpush1.bf16.msra.mxu0 0
    %3362 = vmatprep.subr.bf16.mxu0 0
    %3363 = vmatpush1.bf16.msra.mxu0 0
    %3364 = vmatprep.subr.bf16.mxu0 0
    %3365 = vmatpush1.bf16.msra.mxu0 %v3351
    %3366 = vmatprep.subr.bf16.mxu0 0
    %3367 = vmatpush1.bf16.msra.mxu0 %v3350
    %3368 = vmatprep.subr.bf16.mxu0 0
    %3369 = vmatpush2.bf16.msra.mxu0 0
    %3370 = vmatprep.subr.bf16.mxu0 0
    %3371 = vmatpush2.bf16.msra.mxu0 0
    %3372 = vmatprep.subr.bf16.mxu0 0
    %3373 = vmatpush2.bf16.msra.mxu0 0
    %3374 = vmatprep.subr.bf16.mxu0 0
    %3375 = vmatpush2.bf16.msra.mxu0 0
    %3376 = vmatprep.subr.bf16.mxu0 0
    %3377 = vmatpush2.bf16.msra.mxu0 0
    %3378 = vmatprep.subr.bf16.mxu0 0
    %3379 = vmatpush2.bf16.msra.mxu0 0
    %3380 = vmatprep.subr.bf16.mxu0 0
    %3381 = vmatpush2.bf16.msra.mxu0 0
    %3382 = vmatprep.subr.bf16.mxu0 0
    %3383 = vmatpush2.bf16.msra.mxu0 0
    %3384 = vmatprep.mubr.bf16.mxu0 0
    %3385 = vmatmul.mubr.bf16.gmra.mxu0 %v765
    %v3386 = vpop.f32.mrf.mxu0
    %v3387 = vadd.f32 0.0, %v3386
    %v3388 = vpop.f32.mrf.mxu0
    %v3389 = vpop.f32.mrf.mxu0
    %v3390 = vadd.f32 0.0, %v3389
    %v3391 = vpop.f32.mrf.mxu0
    %3392 = vmatprep.mubr.bf16.mxu0 0
    %3393 = vmatmul.mubr.bf16.gmra.mxu0 %v768
    %v3394 = vpop.f32.mrf.mxu0
    %v3395 = vadd.f32 0.0, %v3394
    %v3396 = vpop.f32.mrf.mxu0
    %v3397 = vpop.f32.mrf.mxu0
    %v3398 = vadd.f32 0.0, %v3397
    %v3399 = vpop.f32.mrf.mxu0
    %3400 = vmatprep.mubr.bf16.mxu0 0
    %3401 = vmatmul.mubr.bf16.gmra.mxu0 %v771
    %v3402 = vpop.f32.mrf.mxu0
    %v3403 = vadd.f32 0.0, %v3402
    %v3404 = vpop.f32.mrf.mxu0
    %v3405 = vpop.f32.mrf.mxu0
    %v3406 = vadd.f32 0.0, %v3405
    %v3407 = vpop.f32.mrf.mxu0
    %3408 = vmatprep.mubr.bf16.mxu0 0
    %3409 = vmatmul.mubr.bf16.gmra.mxu0 %v774
    %v3410 = vpop.f32.mrf.mxu0
    %v3411 = vadd.f32 0.0, %v3410
    %v3412 = vpop.f32.mrf.mxu0
    %v3413 = vpop.f32.mrf.mxu0
    %v3414 = vadd.f32 0.0, %v3413
    %v3415 = vpop.f32.mrf.mxu0
    %3416 = vmatprep.mubr.bf16.mxu0 0
    %3417 = vmatmul.mubr.bf16.gmra.mxu0 %v777
    %v3418 = vpop.f32.mrf.mxu0
    %v3419 = vadd.f32 0.0, %v3418
    %v3420 = vpop.f32.mrf.mxu0
    %v3421 = vpop.f32.mrf.mxu0
    %v3422 = vadd.f32 0.0, %v3421
    %v3423 = vpop.f32.mrf.mxu0
    %3424 = vmatprep.mubr.bf16.mxu0 0
    %3425 = vmatmul.mubr.bf16.gmra.mxu0 %v780
    %v3426 = vpop.f32.mrf.mxu0
    %v3427 = vadd.f32 0.0, %v3426
    %v3428 = vpop.f32.mrf.mxu0
    %v3429 = vpop.f32.mrf.mxu0
    %v3430 = vadd.f32 0.0, %v3429
    %v3431 = vpop.f32.mrf.mxu0
    %3432 = vmatprep.mubr.bf16.mxu0 0
    %3433 = vmatmul.mubr.bf16.gmra.mxu0 %v783
    %v3434 = vpop.f32.mrf.mxu0
    %v3435 = vadd.f32 0.0, %v3434
    %v3436 = vpop.f32.mrf.mxu0
    %v3437 = vpop.f32.mrf.mxu0
    %v3438 = vadd.f32 0.0, %v3437
    %v3439 = vpop.f32.mrf.mxu0
    %3440 = vmatprep.mubr.bf16.mxu0 0
    %3441 = vmatmul.mubr.bf16.gmra.mxu0 %v786
    %v3442 = vpop.f32.mrf.mxu0
    %v3443 = vadd.f32 0.0, %v3442
    %v3444 = vpop.f32.mrf.mxu0
    %v3445 = vpop.f32.mrf.mxu0
    %v3446 = vadd.f32 0.0, %v3445
    %v3447 = vpop.f32.mrf.mxu0
    %3448 = vdwg.mxu0
    %3451 = vrot.lane.b32.xlu0 %v3348, 64
    %v3452 = vpop.permute.xlu0 %3451
    %3453 = vrot.lane.b32.xlu0 %v3349, 64
    %v3454 = vpop.permute.xlu0 %3453
    %3457 = vmatprep.subr.bf16.mxu0 0
    %3458 = vmatpush1.bf16.msra.mxu0 0
    %3459 = vmatprep.subr.bf16.mxu0 0
    %3460 = vmatpush1.bf16.msra.mxu0 0
    %3461 = vmatprep.subr.bf16.mxu0 0
    %3462 = vmatpush1.bf16.msra.mxu0 0
    %3463 = vmatprep.subr.bf16.mxu0 0
    %3464 = vmatpush1.bf16.msra.mxu0 0
    %3465 = vmatprep.subr.bf16.mxu0 0
    %3466 = vmatpush1.bf16.msra.mxu0 0
    %3467 = vmatprep.subr.bf16.mxu0 0
    %3468 = vmatpush1.bf16.msra.mxu0 0
    %3469 = vmatprep.subr.bf16.mxu0 0
    %3470 = vmatpush1.bf16.msra.mxu0 %v3454
    %3471 = vmatprep.subr.bf16.mxu0 0
    %3472 = vmatpush1.bf16.msra.mxu0 %v3452
    %3473 = vmatprep.subr.bf16.mxu0 0
    %3474 = vmatpush2.bf16.msra.mxu0 0
    %3475 = vmatprep.subr.bf16.mxu0 0
    %3476 = vmatpush2.bf16.msra.mxu0 0
    %3477 = vmatprep.subr.bf16.mxu0 0
    %3478 = vmatpush2.bf16.msra.mxu0 0
    %3479 = vmatprep.subr.bf16.mxu0 0
    %3480 = vmatpush2.bf16.msra.mxu0 0
    %3481 = vmatprep.subr.bf16.mxu0 0
    %3482 = vmatpush2.bf16.msra.mxu0 0
    %3483 = vmatprep.subr.bf16.mxu0 0
    %3484 = vmatpush2.bf16.msra.mxu0 0
    %3485 = vmatprep.subr.bf16.mxu0 0
    %3486 = vmatpush2.bf16.msra.mxu0 0
    %3487 = vmatprep.subr.bf16.mxu0 0
    %3488 = vmatpush2.bf16.msra.mxu0 0
    %3489 = vmatprep.mubr.bf16.mxu0 0
    %3490 = vmatmul.mubr.bf16.gmra.mxu0 %v926
    %v3491 = vpop.f32.mrf.mxu0
    %v3492 = vadd.f32 %v3387, %v3491
    %v3493 = vpop.f32.mrf.mxu0
    %v3494 = vpop.f32.mrf.mxu0
    %v3495 = vadd.f32 %v3390, %v3494
    %v3496 = vpop.f32.mrf.mxu0
    %3497 = vmatprep.mubr.bf16.mxu0 0
    %3498 = vmatmul.mubr.bf16.gmra.mxu0 %v929
    %v3499 = vpop.f32.mrf.mxu0
    %v3500 = vadd.f32 %v3395, %v3499
    %v3501 = vpop.f32.mrf.mxu0
    %v3502 = vpop.f32.mrf.mxu0
    %v3503 = vadd.f32 %v3398, %v3502
    %v3504 = vpop.f32.mrf.mxu0
    %3505 = vmatprep.mubr.bf16.mxu0 0
    %3506 = vmatmul.mubr.bf16.gmra.mxu0 %v932
    %v3507 = vpop.f32.mrf.mxu0
    %v3508 = vadd.f32 %v3403, %v3507
    %v3509 = vpop.f32.mrf.mxu0
    %v3510 = vpop.f32.mrf.mxu0
    %v3511 = vadd.f32 %v3406, %v3510
    %v3512 = vpop.f32.mrf.mxu0
    %3513 = vmatprep.mubr.bf16.mxu0 0
    %3514 = vmatmul.mubr.bf16.gmra.mxu0 %v935
    %v3515 = vpop.f32.mrf.mxu0
    %v3516 = vadd.f32 %v3411, %v3515
    %v3517 = vpop.f32.mrf.mxu0
    %v3518 = vpop.f32.mrf.mxu0
    %v3519 = vadd.f32 %v3414, %v3518
    %v3520 = vpop.f32.mrf.mxu0
    %3521 = vmatprep.mubr.bf16.mxu0 0
    %3522 = vmatmul.mubr.bf16.gmra.mxu0 %v938
    %v3523 = vpop.f32.mrf.mxu0
    %v3524 = vadd.f32 %v3419, %v3523
    %v3525 = vpop.f32.mrf.mxu0
    %v3526 = vpop.f32.mrf.mxu0
    %v3527 = vadd.f32 %v3422, %v3526
    %v3528 = vpop.f32.mrf.mxu0
    %3529 = vmatprep.mubr.bf16.mxu0 0
    %3530 = vmatmul.mubr.bf16.gmra.mxu0 %v941
    %v3531 = vpop.f32.mrf.mxu0
    %v3532 = vadd.f32 %v3427, %v3531
    %v3533 = vpop.f32.mrf.mxu0
    %v3534 = vpop.f32.mrf.mxu0
    %v3535 = vadd.f32 %v3430, %v3534
    %v3536 = vpop.f32.mrf.mxu0
    %3537 = vmatprep.mubr.bf16.mxu0 0
    %3538 = vmatmul.mubr.bf16.gmra.mxu0 %v944
    %v3539 = vpop.f32.mrf.mxu0
    %v3540 = vadd.f32 %v3435, %v3539
    %v3541 = vpop.f32.mrf.mxu0
    %v3542 = vpop.f32.mrf.mxu0
    %v3543 = vadd.f32 %v3438, %v3542
    %v3544 = vpop.f32.mrf.mxu0
    %3545 = vmatprep.mubr.bf16.mxu0 0
    %3546 = vmatmul.mubr.bf16.gmra.mxu0 %v947
    %v3547 = vpop.f32.mrf.mxu0
    %v3548 = vadd.f32 %v3443, %v3547
    %v3549 = vpop.f32.mrf.mxu0
    %v3550 = vpop.f32.mrf.mxu0
    %v3551 = vadd.f32 %v3446, %v3550
    %v3552 = vpop.f32.mrf.mxu0
    %3553 = vdwg.mxu0
    %v3554 = vadd.f32 %v3492, %v1049
    %v3555 = vadd.f32 %v3495, %v1054
    %v3556 = vadd.f32 %v3500, %v1059
    %v3557 = vadd.f32 %v3503, %v1064
    %v3558 = vadd.f32 %v3508, %v1069
    %v3559 = vadd.f32 %v3511, %v1074
    %v3560 = vadd.f32 %v3516, %v1079
    %v3561 = vadd.f32 %v3519, %v1084
    %v3562 = vadd.f32 %v3524, %v1089
    %v3563 = vadd.f32 %v3527, %v1094
    %v3564 = vadd.f32 %v3532, %v1099
    %v3565 = vadd.f32 %v3535, %v1104
    %v3566 = vadd.f32 %v3540, %v1109
    %v3567 = vadd.f32 %v3543, %v1114
    %v3568 = vadd.f32 %v3548, %v1119
    %v3569 = vadd.f32 %v3551, %v1124
    %v3570 = vxor.u32 %v3554, 2147483648
    %v3571 = vxor.u32 %v3555, 2147483648
    %v3572 = vxor.u32 %v3556, 2147483648
    %v3573 = vxor.u32 %v3557, 2147483648
    %v3574 = vxor.u32 %v3558, 2147483648
    %v3575 = vxor.u32 %v3559, 2147483648
    %v3576 = vxor.u32 %v3560, 2147483648
    %v3577 = vxor.u32 %v3561, 2147483648
    %v3578 = vmul.f32 %v3570, 1.442695
    %v3579 = vpow.pop %v3578
    %v3580 = vmul.f32 %v3571, 1.442695
    %v3581 = vpow.pop %v3580
    %v3582 = vmul.f32 %v3572, 1.442695
    %v3583 = vpow.pop %v3582
    %v3584 = vmul.f32 %v3573, 1.442695
    %v3585 = vpow.pop %v3584
    %v3586 = vmul.f32 %v3574, 1.442695
    %v3587 = vpow.pop %v3586
    %v3588 = vmul.f32 %v3575, 1.442695
    %v3589 = vpow.pop %v3588
    %v3590 = vmul.f32 %v3576, 1.442695
    %v3591 = vpow.pop %v3590
    %v3592 = vmul.f32 %v3577, 1.442695
    %v3593 = vpow.pop %v3592
    %v3594 = vadd.f32 %v3579, 1.0
    %v3595 = vadd.f32 %v3581, 1.0
    %v3596 = vadd.f32 %v3583, 1.0
    %v3597 = vadd.f32 %v3585, 1.0
    %v3598 = vadd.f32 %v3587, 1.0
    %v3599 = vadd.f32 %v3589, 1.0
    %v3600 = vadd.f32 %v3591, 1.0
    %v3601 = vadd.f32 %v3593, 1.0
    %v3602 = vrcp.pop %v3594
    %v3603 = vmul.f32 1.0, %v3602
    %v3604 = vrcp.pop %v3595
    %v3605 = vmul.f32 1.0, %v3604
    %v3606 = vrcp.pop %v3596
    %v3607 = vmul.f32 1.0, %v3606
    %v3608 = vrcp.pop %v3597
    %v3609 = vmul.f32 1.0, %v3608
    %v3610 = vrcp.pop %v3598
    %v3611 = vmul.f32 1.0, %v3610
    %v3612 = vrcp.pop %v3599
    %v3613 = vmul.f32 1.0, %v3612
    %v3614 = vrcp.pop %v3600
    %v3615 = vmul.f32 1.0, %v3614
    %v3616 = vrcp.pop %v3601
    %v3617 = vmul.f32 1.0, %v3616
    %v3618 = vtanh.pop %v3562
    %v3619 = vtanh.pop %v3563
    %v3620 = vtanh.pop %v3564
    %v3621 = vtanh.pop %v3565
    %v3622 = vxor.u32 %v3566, 2147483648
    %v3623 = vxor.u32 %v3567, 2147483648
    %v3624 = vxor.u32 %v3568, 2147483648
    %v3625 = vxor.u32 %v3569, 2147483648
    %v3626 = vmul.f32 %v3622, 1.442695
    %v3627 = vpow.pop %v3626
    %v3628 = vmul.f32 %v3623, 1.442695
    %v3629 = vpow.pop %v3628
    %v3630 = vmul.f32 %v3624, 1.442695
    %v3631 = vpow.pop %v3630
    %v3632 = vmul.f32 %v3625, 1.442695
    %v3633 = vpow.pop %v3632
    %v3634 = vadd.f32 %v3627, 1.0
    %v3635 = vadd.f32 %v3629, 1.0
    %v3636 = vadd.f32 %v3631, 1.0
    %v3637 = vadd.f32 %v3633, 1.0
    %v3638 = vrcp.pop %v3634
    %v3639 = vmul.f32 1.0, %v3638
    %v3640 = vrcp.pop %v3635
    %v3641 = vmul.f32 1.0, %v3640
    %v3642 = vrcp.pop %v3636
    %v3643 = vmul.f32 1.0, %v3642
    %v3644 = vrcp.pop %v3637
    %v3645 = vmul.f32 1.0, %v3644
    %v3646 = vmul.f32 %v3611, %v3047
    %v3647 = vmul.f32 %v3613, %v3048
    %v3648 = vmul.f32 %v3615, %v3049
    %v3649 = vmul.f32 %v3617, %v3050
    %v3650 = vmul.f32 %v3603, %v3618
    %v3651 = vmul.f32 %v3605, %v3619
    %v3652 = vmul.f32 %v3607, %v3620
    %v3653 = vmul.f32 %v3609, %v3621
    %v3654 = vadd.f32 %v3646, %v3650
    %v3655 = vadd.f32 %v3647, %v3651
    %v3656 = vadd.f32 %v3648, %v3652
    %v3657 = vadd.f32 %v3649, %v3653
    %v3658 = vtanh.pop %v3654
    %v3659 = vtanh.pop %v3655
    %v3660 = vtanh.pop %v3656
    %v3661 = vtanh.pop %v3657
    %v3662 = vmul.f32 %v3639, %v3658
    %v3663 = vmul.f32 %v3641, %v3659
    %v3664 = vmul.f32 %v3643, %v3660
    %v3665 = vmul.f32 %v3645, %v3661
    %3666 = vmatprep.subr.bf16.mxu0 0
    %3667 = vmatpush1.bf16.msra.mxu0 0
    %3668 = vmatprep.subr.bf16.mxu0 0
    %3669 = vmatpush1.bf16.msra.mxu0 0
    %3670 = vmatprep.subr.bf16.mxu0 0
    %3671 = vmatpush1.bf16.msra.mxu0 0
    %3672 = vmatprep.subr.bf16.mxu0 0
    %3673 = vmatpush1.bf16.msra.mxu0 0
    %3674 = vmatprep.subr.bf16.mxu0 0
    %3675 = vmatpush1.bf16.msra.mxu0 0
    %3676 = vmatprep.subr.bf16.mxu0 0
    %3677 = vmatpush1.bf16.msra.mxu0 0
    %3678 = vmatprep.subr.bf16.mxu0 0
    %3679 = vmatpush1.bf16.msra.mxu0 %v3454
    %3680 = vmatprep.subr.bf16.mxu0 0
    %3681 = vmatpush1.bf16.msra.mxu0 %v3452
    %3682 = vmatprep.subr.bf16.mxu0 0
    %3683 = vmatpush2.bf16.msra.mxu0 0
    %3684 = vmatprep.subr.bf16.mxu0 0
    %3685 = vmatpush2.bf16.msra.mxu0 0
    %3686 = vmatprep.subr.bf16.mxu0 0
    %3687 = vmatpush2.bf16.msra.mxu0 0
    %3688 = vmatprep.subr.bf16.mxu0 0
    %3689 = vmatpush2.bf16.msra.mxu0 0
    %3690 = vmatprep.subr.bf16.mxu0 0
    %3691 = vmatpush2.bf16.msra.mxu0 0
    %3692 = vmatprep.subr.bf16.mxu0 0
    %3693 = vmatpush2.bf16.msra.mxu0 0
    %3694 = vmatprep.subr.bf16.mxu0 0
    %3695 = vmatpush2.bf16.msra.mxu0 0
    %3696 = vmatprep.subr.bf16.mxu0 0
    %3697 = vmatpush2.bf16.msra.mxu0 0
    %3698 = vmatprep.mubr.bf16.mxu0 0
    %3699 = vmatmul.mubr.bf16.gmra.mxu0 %v490
    %v3700 = vpop.f32.mrf.mxu0
    %v3701 = vadd.f32 0.0, %v3700
    %v3702 = vpop.f32.mrf.mxu0
    %v3703 = vpop.f32.mrf.mxu0
    %v3704 = vadd.f32 0.0, %v3703
    %v3705 = vpop.f32.mrf.mxu0
    %3706 = vmatprep.mubr.bf16.mxu0 0
    %3707 = vmatmul.mubr.bf16.gmra.mxu0 %v493
    %v3708 = vpop.f32.mrf.mxu0
    %v3709 = vadd.f32 0.0, %v3708
    %v3710 = vpop.f32.mrf.mxu0
    %v3711 = vpop.f32.mrf.mxu0
    %v3712 = vadd.f32 0.0, %v3711
    %v3713 = vpop.f32.mrf.mxu0
    %3714 = vmatprep.mubr.bf16.mxu0 0
    %3715 = vmatmul.mubr.bf16.gmra.mxu0 %v496
    %v3716 = vpop.f32.mrf.mxu0
    %v3717 = vadd.f32 0.0, %v3716
    %v3718 = vpop.f32.mrf.mxu0
    %v3719 = vpop.f32.mrf.mxu0
    %v3720 = vadd.f32 0.0, %v3719
    %v3721 = vpop.f32.mrf.mxu0
    %3722 = vmatprep.mubr.bf16.mxu0 0
    %3723 = vmatmul.mubr.bf16.gmra.mxu0 %v499
    %v3724 = vpop.f32.mrf.mxu0
    %v3725 = vadd.f32 0.0, %v3724
    %v3726 = vpop.f32.mrf.mxu0
    %v3727 = vpop.f32.mrf.mxu0
    %v3728 = vadd.f32 0.0, %v3727
    %v3729 = vpop.f32.mrf.mxu0
    %3730 = vmatprep.mubr.bf16.mxu0 0
    %3731 = vmatmul.mubr.bf16.gmra.mxu0 %v502
    %v3732 = vpop.f32.mrf.mxu0
    %v3733 = vadd.f32 0.0, %v3732
    %v3734 = vpop.f32.mrf.mxu0
    %v3735 = vpop.f32.mrf.mxu0
    %v3736 = vadd.f32 0.0, %v3735
    %v3737 = vpop.f32.mrf.mxu0
    %3738 = vmatprep.mubr.bf16.mxu0 0
    %3739 = vmatmul.mubr.bf16.gmra.mxu0 %v505
    %v3740 = vpop.f32.mrf.mxu0
    %v3741 = vadd.f32 0.0, %v3740
    %v3742 = vpop.f32.mrf.mxu0
    %v3743 = vpop.f32.mrf.mxu0
    %v3744 = vadd.f32 0.0, %v3743
    %v3745 = vpop.f32.mrf.mxu0
    %3746 = vmatprep.mubr.bf16.mxu0 0
    %3747 = vmatmul.mubr.bf16.gmra.mxu0 %v508
    %v3748 = vpop.f32.mrf.mxu0
    %v3749 = vadd.f32 0.0, %v3748
    %v3750 = vpop.f32.mrf.mxu0
    %v3751 = vpop.f32.mrf.mxu0
    %v3752 = vadd.f32 0.0, %v3751
    %v3753 = vpop.f32.mrf.mxu0
    %3754 = vmatprep.mubr.bf16.mxu0 0
    %3755 = vmatmul.mubr.bf16.gmra.mxu0 %v511
    %v3756 = vpop.f32.mrf.mxu0
    %v3757 = vadd.f32 0.0, %v3756
    %v3758 = vpop.f32.mrf.mxu0
    %v3759 = vpop.f32.mrf.mxu0
    %v3760 = vadd.f32 0.0, %v3759
    %v3761 = vpop.f32.mrf.mxu0
    %3762 = vdwg.mxu0
    %3779 = vrot.lane.b32.xlu0 %v3701, 80
    %v3780 = vpop.permute.xlu0 %3779
    %3781 = vrot.lane.b32.xlu0 %v3704, 80
    %v3782 = vpop.permute.xlu0 %3781
    %3783 = vrot.lane.b32.xlu0 %v3709, 80
    %v3784 = vpop.permute.xlu0 %3783
    %3785 = vrot.lane.b32.xlu0 %v3712, 80
    %v3786 = vpop.permute.xlu0 %3785
    %3787 = vrot.lane.b32.xlu0 %v3717, 80
    %v3788 = vpop.permute.xlu0 %3787
    %3789 = vrot.lane.b32.xlu0 %v3720, 80
    %v3790 = vpop.permute.xlu0 %3789
    %3791 = vrot.lane.b32.xlu0 %v3725, 80
    %v3792 = vpop.permute.xlu0 %3791
    %3793 = vrot.lane.b32.xlu0 %v3728, 80
    %v3794 = vpop.permute.xlu0 %3793
    %3795 = vrot.lane.b32.xlu0 %v3733, 80
    %v3796 = vpop.permute.xlu0 %3795
    %3797 = vrot.lane.b32.xlu0 %v3736, 80
    %v3798 = vpop.permute.xlu0 %3797
    %3799 = vrot.lane.b32.xlu0 %v3741, 80
    %v3800 = vpop.permute.xlu0 %3799
    %3801 = vrot.lane.b32.xlu0 %v3744, 80
    %v3802 = vpop.permute.xlu0 %3801
    %3803 = vrot.lane.b32.xlu0 %v3749, 80
    %v3804 = vpop.permute.xlu0 %3803
    %3805 = vrot.lane.b32.xlu0 %v3752, 80
    %v3806 = vpop.permute.xlu0 %3805
    %3807 = vrot.lane.b32.xlu0 %v3757, 80
    %v3808 = vpop.permute.xlu0 %3807
    %3809 = vrot.lane.b32.xlu0 %v3760, 80
    %v3810 = vpop.permute.xlu0 %3809
    %v3827 = vadd.f32 %v323, %v3780
    %v3828 = vadd.f32 %v326, %v3782
    %v3829 = vadd.f32 %v331, %v3784
    %v3830 = vadd.f32 %v334, %v3786
    %v3831 = vadd.f32 %v339, %v3788
    %v3832 = vadd.f32 %v342, %v3790
    %v3833 = vadd.f32 %v347, %v3792
    %v3834 = vadd.f32 %v350, %v3794
    %v3835 = vadd.f32 %v355, %v3796
    %v3836 = vadd.f32 %v358, %v3798
    %v3837 = vadd.f32 %v363, %v3800
    %v3838 = vadd.f32 %v366, %v3802
    %v3839 = vadd.f32 %v371, %v3804
    %v3840 = vadd.f32 %v374, %v3806
    %v3841 = vadd.f32 %v379, %v3808
    %v3842 = vadd.f32 %v382, %v3810
    %v3843 = vxor.u32 %v3827, 2147483648
    %v3844 = vxor.u32 %v3828, 2147483648
    %v3845 = vxor.u32 %v3829, 2147483648
    %v3846 = vxor.u32 %v3830, 2147483648
    %v3847 = vxor.u32 %v3831, 2147483648
    %v3848 = vxor.u32 %v3832, 2147483648
    %v3849 = vxor.u32 %v3833, 2147483648
    %v3850 = vxor.u32 %v3834, 2147483648
    %v3851 = vmul.f32 %v3843, 1.442695
    %v3852 = vpow.pop %v3851
    %v3853 = vmul.f32 %v3844, 1.442695
    %v3854 = vpow.pop %v3853
    %v3855 = vmul.f32 %v3845, 1.442695
    %v3856 = vpow.pop %v3855
    %v3857 = vmul.f32 %v3846, 1.442695
    %v3858 = vpow.pop %v3857
    %v3859 = vmul.f32 %v3847, 1.442695
    %v3860 = vpow.pop %v3859
    %v3861 = vmul.f32 %v3848, 1.442695
    %v3862 = vpow.pop %v3861
    %v3863 = vmul.f32 %v3849, 1.442695
    %v3864 = vpow.pop %v3863
    %v3865 = vmul.f32 %v3850, 1.442695
    %v3866 = vpow.pop %v3865
    %v3867 = vadd.f32 %v3852, 1.0
    %v3868 = vadd.f32 %v3854, 1.0
    %v3869 = vadd.f32 %v3856, 1.0
    %v3870 = vadd.f32 %v3858, 1.0
    %v3871 = vadd.f32 %v3860, 1.0
    %v3872 = vadd.f32 %v3862, 1.0
    %v3873 = vadd.f32 %v3864, 1.0
    %v3874 = vadd.f32 %v3866, 1.0
    %v3875 = vrcp.pop %v3867
    %v3876 = vmul.f32 1.0, %v3875
    %v3877 = vrcp.pop %v3868
    %v3878 = vmul.f32 1.0, %v3877
    %v3879 = vrcp.pop %v3869
    %v3880 = vmul.f32 1.0, %v3879
    %v3881 = vrcp.pop %v3870
    %v3882 = vmul.f32 1.0, %v3881
    %v3883 = vrcp.pop %v3871
    %v3884 = vmul.f32 1.0, %v3883
    %v3885 = vrcp.pop %v3872
    %v3886 = vmul.f32 1.0, %v3885
    %v3887 = vrcp.pop %v3873
    %v3888 = vmul.f32 1.0, %v3887
    %v3889 = vrcp.pop %v3874
    %v3890 = vmul.f32 1.0, %v3889
    %v3891 = vtanh.pop %v3835
    %v3892 = vtanh.pop %v3836
    %v3893 = vtanh.pop %v3837
    %v3894 = vtanh.pop %v3838
    %v3895 = vxor.u32 %v3839, 2147483648
    %v3896 = vxor.u32 %v3840, 2147483648
    %v3897 = vxor.u32 %v3841, 2147483648
    %v3898 = vxor.u32 %v3842, 2147483648
    %v3899 = vmul.f32 %v3895, 1.442695
    %v3900 = vpow.pop %v3899
    %v3901 = vmul.f32 %v3896, 1.442695
    %v3902 = vpow.pop %v3901
    %v3903 = vmul.f32 %v3897, 1.442695
    %v3904 = vpow.pop %v3903
    %v3905 = vmul.f32 %v3898, 1.442695
    %v3906 = vpow.pop %v3905
    %v3907 = vadd.f32 %v3900, 1.0
    %v3908 = vadd.f32 %v3902, 1.0
    %v3909 = vadd.f32 %v3904, 1.0
    %v3910 = vadd.f32 %v3906, 1.0
    %v3911 = vrcp.pop %v3907
    %v3912 = vmul.f32 1.0, %v3911
    %v3913 = vrcp.pop %v3908
    %v3914 = vmul.f32 1.0, %v3913
    %v3915 = vrcp.pop %v3909
    %v3916 = vmul.f32 1.0, %v3915
    %v3917 = vrcp.pop %v3910
    %v3918 = vmul.f32 1.0, %v3917
    %3923 = vrot.lane.b32.xlu0 %v3336, 16
    %v3924 = vpop.permute.xlu0 %3923
    %3925 = vrot.lane.b32.xlu0 %v3337, 16
    %v3926 = vpop.permute.xlu0 %3925
    %3927 = vrot.lane.b32.xlu0 %v3338, 16
    %v3928 = vpop.permute.xlu0 %3927
    %3929 = vrot.lane.b32.xlu0 %v3339, 16
    %v3930 = vpop.permute.xlu0 %3929
    %v3935 = vmul.f32 %v3884, %v3924
    %v3936 = vmul.f32 %v3886, %v3926
    %v3937 = vmul.f32 %v3888, %v3928
    %v3938 = vmul.f32 %v3890, %v3930
    %v3939 = vmul.f32 %v3876, %v3891
    %v3940 = vmul.f32 %v3878, %v3892
    %v3941 = vmul.f32 %v3880, %v3893
    %v3942 = vmul.f32 %v3882, %v3894
    %v3943 = vadd.f32 %v3935, %v3939
    %v3944 = vadd.f32 %v3936, %v3940
    %v3945 = vadd.f32 %v3937, %v3941
    %v3946 = vadd.f32 %v3938, %v3942
    %v3947 = vtanh.pop %v3943
    %v3948 = vtanh.pop %v3944
    %v3949 = vtanh.pop %v3945
    %v3950 = vtanh.pop %v3946
    %v3951 = vmul.f32 %v3912, %v3947
    %v3952 = vmul.f32 %v3914, %v3948
    %v3953 = vmul.f32 %v3916, %v3949
    %v3954 = vmul.f32 %v3918, %v3950
    %v3955 = vpack.c.bf16 %v3952, %v3951
    %v3956 = vpack.c.bf16 %v3954, %v3953
    %v3957 = vpack.c.bf16 %v3663, %v3662
    %v3958 = vpack.c.bf16 %v3665, %v3664
    %3959 = vmatprep.subr.bf16.mxu0 0
    %3960 = vmatpush1.bf16.msra.mxu0 0
    %3961 = vmatprep.subr.bf16.mxu0 0
    %3962 = vmatpush1.bf16.msra.mxu0 0
    %3963 = vmatprep.subr.bf16.mxu0 0
    %3964 = vmatpush1.bf16.msra.mxu0 0
    %3965 = vmatprep.subr.bf16.mxu0 0
    %3966 = vmatpush1.bf16.msra.mxu0 0
    %3967 = vmatprep.subr.bf16.mxu0 0
    %3968 = vmatpush1.bf16.msra.mxu0 0
    %3969 = vmatprep.subr.bf16.mxu0 0
    %3970 = vmatpush1.bf16.msra.mxu0 0
    %3971 = vmatprep.subr.bf16.mxu0 0
    %3972 = vmatpush1.bf16.msra.mxu0 %v3958
    %3973 = vmatprep.subr.bf16.mxu0 0
    %3974 = vmatpush1.bf16.msra.mxu0 %v3957
    %3975 = vmatprep.subr.bf16.mxu0 0
    %3976 = vmatpush2.bf16.msra.mxu0 0
    %3977 = vmatprep.subr.bf16.mxu0 0
    %3978 = vmatpush2.bf16.msra.mxu0 0
    %3979 = vmatprep.subr.bf16.mxu0 0
    %3980 = vmatpush2.bf16.msra.mxu0 0
    %3981 = vmatprep.subr.bf16.mxu0 0
    %3982 = vmatpush2.bf16.msra.mxu0 0
    %3983 = vmatprep.subr.bf16.mxu0 0
    %3984 = vmatpush2.bf16.msra.mxu0 0
    %3985 = vmatprep.subr.bf16.mxu0 0
    %3986 = vmatpush2.bf16.msra.mxu0 0
    %3987 = vmatprep.subr.bf16.mxu0 0
    %3988 = vmatpush2.bf16.msra.mxu0 0
    %3989 = vmatprep.subr.bf16.mxu0 0
    %3990 = vmatpush2.bf16.msra.mxu0 0
    %3991 = vmatprep.mubr.bf16.mxu0 0
    %3992 = vmatmul.mubr.bf16.gmra.mxu0 %v765
    %v3993 = vpop.f32.mrf.mxu0
    %v3994 = vadd.f32 0.0, %v3993
    %v3995 = vpop.f32.mrf.mxu0
    %v3996 = vpop.f32.mrf.mxu0
    %v3997 = vadd.f32 0.0, %v3996
    %v3998 = vpop.f32.mrf.mxu0
    %3999 = vmatprep.mubr.bf16.mxu0 0
    %4000 = vmatmul.mubr.bf16.gmra.mxu0 %v768
    %v4001 = vpop.f32.mrf.mxu0
    %v4002 = vadd.f32 0.0, %v4001
    %v4003 = vpop.f32.mrf.mxu0
    %v4004 = vpop.f32.mrf.mxu0
    %v4005 = vadd.f32 0.0, %v4004
    %v4006 = vpop.f32.mrf.mxu0
    %4007 = vmatprep.mubr.bf16.mxu0 0
    %4008 = vmatmul.mubr.bf16.gmra.mxu0 %v771
    %v4009 = vpop.f32.mrf.mxu0
    %v4010 = vadd.f32 0.0, %v4009
    %v4011 = vpop.f32.mrf.mxu0
    %v4012 = vpop.f32.mrf.mxu0
    %v4013 = vadd.f32 0.0, %v4012
    %v4014 = vpop.f32.mrf.mxu0
    %4015 = vmatprep.mubr.bf16.mxu0 0
    %4016 = vmatmul.mubr.bf16.gmra.mxu0 %v774
    %v4017 = vpop.f32.mrf.mxu0
    %v4018 = vadd.f32 0.0, %v4017
    %v4019 = vpop.f32.mrf.mxu0
    %v4020 = vpop.f32.mrf.mxu0
    %v4021 = vadd.f32 0.0, %v4020
    %v4022 = vpop.f32.mrf.mxu0
    %4023 = vmatprep.mubr.bf16.mxu0 0
    %4024 = vmatmul.mubr.bf16.gmra.mxu0 %v777
    %v4025 = vpop.f32.mrf.mxu0
    %v4026 = vadd.f32 0.0, %v4025
    %v4027 = vpop.f32.mrf.mxu0
    %v4028 = vpop.f32.mrf.mxu0
    %v4029 = vadd.f32 0.0, %v4028
    %v4030 = vpop.f32.mrf.mxu0
    %4031 = vmatprep.mubr.bf16.mxu0 0
    %4032 = vmatmul.mubr.bf16.gmra.mxu0 %v780
    %v4033 = vpop.f32.mrf.mxu0
    %v4034 = vadd.f32 0.0, %v4033
    %v4035 = vpop.f32.mrf.mxu0
    %v4036 = vpop.f32.mrf.mxu0
    %v4037 = vadd.f32 0.0, %v4036
    %v4038 = vpop.f32.mrf.mxu0
    %4039 = vmatprep.mubr.bf16.mxu0 0
    %4040 = vmatmul.mubr.bf16.gmra.mxu0 %v783
    %v4041 = vpop.f32.mrf.mxu0
    %v4042 = vadd.f32 0.0, %v4041
    %v4043 = vpop.f32.mrf.mxu0
    %v4044 = vpop.f32.mrf.mxu0
    %v4045 = vadd.f32 0.0, %v4044
    %v4046 = vpop.f32.mrf.mxu0
    %4047 = vmatprep.mubr.bf16.mxu0 0
    %4048 = vmatmul.mubr.bf16.gmra.mxu0 %v786
    %v4049 = vpop.f32.mrf.mxu0
    %v4050 = vadd.f32 0.0, %v4049
    %v4051 = vpop.f32.mrf.mxu0
    %v4052 = vpop.f32.mrf.mxu0
    %v4053 = vadd.f32 0.0, %v4052
    %v4054 = vpop.f32.mrf.mxu0
    %4055 = vdwg.mxu0
    %4058 = vrot.lane.b32.xlu0 %v3955, 48
    %v4059 = vpop.permute.xlu0 %4058
    %4060 = vrot.lane.b32.xlu0 %v3956, 48
    %v4061 = vpop.permute.xlu0 %4060
    %4064 = vmatprep.subr.bf16.mxu0 0
    %4065 = vmatpush1.bf16.msra.mxu0 0
    %4066 = vmatprep.subr.bf16.mxu0 0
    %4067 = vmatpush1.bf16.msra.mxu0 0
    %4068 = vmatprep.subr.bf16.mxu0 0
    %4069 = vmatpush1.bf16.msra.mxu0 0
    %4070 = vmatprep.subr.bf16.mxu0 0
    %4071 = vmatpush1.bf16.msra.mxu0 0
    %4072 = vmatprep.subr.bf16.mxu0 0
    %4073 = vmatpush1.bf16.msra.mxu0 0
    %4074 = vmatprep.subr.bf16.mxu0 0
    %4075 = vmatpush1.bf16.msra.mxu0 0
    %4076 = vmatprep.subr.bf16.mxu0 0
    %4077 = vmatpush1.bf16.msra.mxu0 %v4061
    %4078 = vmatprep.subr.bf16.mxu0 0
    %4079 = vmatpush1.bf16.msra.mxu0 %v4059
    %4080 = vmatprep.subr.bf16.mxu0 0
    %4081 = vmatpush2.bf16.msra.mxu0 0
    %4082 = vmatprep.subr.bf16.mxu0 0
    %4083 = vmatpush2.bf16.msra.mxu0 0
    %4084 = vmatprep.subr.bf16.mxu0 0
    %4085 = vmatpush2.bf16.msra.mxu0 0
    %4086 = vmatprep.subr.bf16.mxu0 0
    %4087 = vmatpush2.bf16.msra.mxu0 0
    %4088 = vmatprep.subr.bf16.mxu0 0
    %4089 = vmatpush2.bf16.msra.mxu0 0
    %4090 = vmatprep.subr.bf16.mxu0 0
    %4091 = vmatpush2.bf16.msra.mxu0 0
    %4092 = vmatprep.subr.bf16.mxu0 0
    %4093 = vmatpush2.bf16.msra.mxu0 0
    %4094 = vmatprep.subr.bf16.mxu0 0
    %4095 = vmatpush2.bf16.msra.mxu0 0
    %4096 = vmatprep.mubr.bf16.mxu0 0
    %4097 = vmatmul.mubr.bf16.gmra.mxu0 %v926
    %v4098 = vpop.f32.mrf.mxu0
    %v4099 = vadd.f32 %v3994, %v4098
    %v4100 = vpop.f32.mrf.mxu0
    %v4101 = vpop.f32.mrf.mxu0
    %v4102 = vadd.f32 %v3997, %v4101
    %v4103 = vpop.f32.mrf.mxu0
    %4104 = vmatprep.mubr.bf16.mxu0 0
    %4105 = vmatmul.mubr.bf16.gmra.mxu0 %v929
    %v4106 = vpop.f32.mrf.mxu0
    %v4107 = vadd.f32 %v4002, %v4106
    %v4108 = vpop.f32.mrf.mxu0
    %v4109 = vpop.f32.mrf.mxu0
    %v4110 = vadd.f32 %v4005, %v4109
    %v4111 = vpop.f32.mrf.mxu0
    %4112 = vmatprep.mubr.bf16.mxu0 0
    %4113 = vmatmul.mubr.bf16.gmra.mxu0 %v932
    %v4114 = vpop.f32.mrf.mxu0
    %v4115 = vadd.f32 %v4010, %v4114
    %v4116 = vpop.f32.mrf.mxu0
    %v4117 = vpop.f32.mrf.mxu0
    %v4118 = vadd.f32 %v4013, %v4117
    %v4119 = vpop.f32.mrf.mxu0
    %4120 = vmatprep.mubr.bf16.mxu0 0
    %4121 = vmatmul.mubr.bf16.gmra.mxu0 %v935
    %v4122 = vpop.f32.mrf.mxu0
    %v4123 = vadd.f32 %v4018, %v4122
    %v4124 = vpop.f32.mrf.mxu0
    %v4125 = vpop.f32.mrf.mxu0
    %v4126 = vadd.f32 %v4021, %v4125
    %v4127 = vpop.f32.mrf.mxu0
    %4128 = vmatprep.mubr.bf16.mxu0 0
    %4129 = vmatmul.mubr.bf16.gmra.mxu0 %v938
    %v4130 = vpop.f32.mrf.mxu0
    %v4131 = vadd.f32 %v4026, %v4130
    %v4132 = vpop.f32.mrf.mxu0
    %v4133 = vpop.f32.mrf.mxu0
    %v4134 = vadd.f32 %v4029, %v4133
    %v4135 = vpop.f32.mrf.mxu0
    %4136 = vmatprep.mubr.bf16.mxu0 0
    %4137 = vmatmul.mubr.bf16.gmra.mxu0 %v941
    %v4138 = vpop.f32.mrf.mxu0
    %v4139 = vadd.f32 %v4034, %v4138
    %v4140 = vpop.f32.mrf.mxu0
    %v4141 = vpop.f32.mrf.mxu0
    %v4142 = vadd.f32 %v4037, %v4141
    %v4143 = vpop.f32.mrf.mxu0
    %4144 = vmatprep.mubr.bf16.mxu0 0
    %4145 = vmatmul.mubr.bf16.gmra.mxu0 %v944
    %v4146 = vpop.f32.mrf.mxu0
    %v4147 = vadd.f32 %v4042, %v4146
    %v4148 = vpop.f32.mrf.mxu0
    %v4149 = vpop.f32.mrf.mxu0
    %v4150 = vadd.f32 %v4045, %v4149
    %v4151 = vpop.f32.mrf.mxu0
    %4152 = vmatprep.mubr.bf16.mxu0 0
    %4153 = vmatmul.mubr.bf16.gmra.mxu0 %v947
    %v4154 = vpop.f32.mrf.mxu0
    %v4155 = vadd.f32 %v4050, %v4154
    %v4156 = vpop.f32.mrf.mxu0
    %v4157 = vpop.f32.mrf.mxu0
    %v4158 = vadd.f32 %v4053, %v4157
    %v4159 = vpop.f32.mrf.mxu0
    %4160 = vdwg.mxu0
    %v4161 = vadd.f32 %v4099, %v1049
    %v4162 = vadd.f32 %v4102, %v1054
    %v4163 = vadd.f32 %v4107, %v1059
    %v4164 = vadd.f32 %v4110, %v1064
    %v4165 = vadd.f32 %v4115, %v1069
    %v4166 = vadd.f32 %v4118, %v1074
    %v4167 = vadd.f32 %v4123, %v1079
    %v4168 = vadd.f32 %v4126, %v1084
    %v4169 = vadd.f32 %v4131, %v1089
    %v4170 = vadd.f32 %v4134, %v1094
    %v4171 = vadd.f32 %v4139, %v1099
    %v4172 = vadd.f32 %v4142, %v1104
    %v4173 = vadd.f32 %v4147, %v1109
    %v4174 = vadd.f32 %v4150, %v1114
    %v4175 = vadd.f32 %v4155, %v1119
    %v4176 = vadd.f32 %v4158, %v1124
    %v4177 = vxor.u32 %v4161, 2147483648
    %v4178 = vxor.u32 %v4162, 2147483648
    %v4179 = vxor.u32 %v4163, 2147483648
    %v4180 = vxor.u32 %v4164, 2147483648
    %v4181 = vxor.u32 %v4165, 2147483648
    %v4182 = vxor.u32 %v4166, 2147483648
    %v4183 = vxor.u32 %v4167, 2147483648
    %v4184 = vxor.u32 %v4168, 2147483648
    %v4185 = vmul.f32 %v4177, 1.442695
    %v4186 = vpow.pop %v4185
    %v4187 = vmul.f32 %v4178, 1.442695
    %v4188 = vpow.pop %v4187
    %v4189 = vmul.f32 %v4179, 1.442695
    %v4190 = vpow.pop %v4189
    %v4191 = vmul.f32 %v4180, 1.442695
    %v4192 = vpow.pop %v4191
    %v4193 = vmul.f32 %v4181, 1.442695
    %v4194 = vpow.pop %v4193
    %v4195 = vmul.f32 %v4182, 1.442695
    %v4196 = vpow.pop %v4195
    %v4197 = vmul.f32 %v4183, 1.442695
    %v4198 = vpow.pop %v4197
    %v4199 = vmul.f32 %v4184, 1.442695
    %v4200 = vpow.pop %v4199
    %v4201 = vadd.f32 %v4186, 1.0
    %v4202 = vadd.f32 %v4188, 1.0
    %v4203 = vadd.f32 %v4190, 1.0
    %v4204 = vadd.f32 %v4192, 1.0
    %v4205 = vadd.f32 %v4194, 1.0
    %v4206 = vadd.f32 %v4196, 1.0
    %v4207 = vadd.f32 %v4198, 1.0
    %v4208 = vadd.f32 %v4200, 1.0
    %v4209 = vrcp.pop %v4201
    %v4210 = vmul.f32 1.0, %v4209
    %v4211 = vrcp.pop %v4202
    %v4212 = vmul.f32 1.0, %v4211
    %v4213 = vrcp.pop %v4203
    %v4214 = vmul.f32 1.0, %v4213
    %v4215 = vrcp.pop %v4204
    %v4216 = vmul.f32 1.0, %v4215
    %v4217 = vrcp.pop %v4205
    %v4218 = vmul.f32 1.0, %v4217
    %v4219 = vrcp.pop %v4206
    %v4220 = vmul.f32 1.0, %v4219
    %v4221 = vrcp.pop %v4207
    %v4222 = vmul.f32 1.0, %v4221
    %v4223 = vrcp.pop %v4208
    %v4224 = vmul.f32 1.0, %v4223
    %v4225 = vtanh.pop %v4169
    %v4226 = vtanh.pop %v4170
    %v4227 = vtanh.pop %v4171
    %v4228 = vtanh.pop %v4172
    %v4229 = vxor.u32 %v4173, 2147483648
    %v4230 = vxor.u32 %v4174, 2147483648
    %v4231 = vxor.u32 %v4175, 2147483648
    %v4232 = vxor.u32 %v4176, 2147483648
    %v4233 = vmul.f32 %v4229, 1.442695
    %v4234 = vpow.pop %v4233
    %v4235 = vmul.f32 %v4230, 1.442695
    %v4236 = vpow.pop %v4235
    %v4237 = vmul.f32 %v4231, 1.442695
    %v4238 = vpow.pop %v4237
    %v4239 = vmul.f32 %v4232, 1.442695
    %v4240 = vpow.pop %v4239
    %v4241 = vadd.f32 %v4234, 1.0
    %v4242 = vadd.f32 %v4236, 1.0
    %v4243 = vadd.f32 %v4238, 1.0
    %v4244 = vadd.f32 %v4240, 1.0
    %v4245 = vrcp.pop %v4241
    %v4246 = vmul.f32 1.0, %v4245
    %v4247 = vrcp.pop %v4242
    %v4248 = vmul.f32 1.0, %v4247
    %v4249 = vrcp.pop %v4243
    %v4250 = vmul.f32 1.0, %v4249
    %v4251 = vrcp.pop %v4244
    %v4252 = vmul.f32 1.0, %v4251
    %v4253 = vmul.f32 %v4218, %v3654
    %v4254 = vmul.f32 %v4220, %v3655
    %v4255 = vmul.f32 %v4222, %v3656
    %v4256 = vmul.f32 %v4224, %v3657
    %v4257 = vmul.f32 %v4210, %v4225
    %v4258 = vmul.f32 %v4212, %v4226
    %v4259 = vmul.f32 %v4214, %v4227
    %v4260 = vmul.f32 %v4216, %v4228
    %v4261 = vadd.f32 %v4253, %v4257
    %v4262 = vadd.f32 %v4254, %v4258
    %v4263 = vadd.f32 %v4255, %v4259
    %v4264 = vadd.f32 %v4256, %v4260
    %v4265 = vtanh.pop %v4261
    %v4266 = vtanh.pop %v4262
    %v4267 = vtanh.pop %v4263
    %v4268 = vtanh.pop %v4264
    %v4269 = vmul.f32 %v4246, %v4265
    %v4270 = vmul.f32 %v4248, %v4266
    %v4271 = vmul.f32 %v4250, %v4267
    %v4272 = vmul.f32 %v4252, %v4268
    %4273 = vmatprep.subr.bf16.mxu0 0
    %4274 = vmatpush1.bf16.msra.mxu0 0
    %4275 = vmatprep.subr.bf16.mxu0 0
    %4276 = vmatpush1.bf16.msra.mxu0 0
    %4277 = vmatprep.subr.bf16.mxu0 0
    %4278 = vmatpush1.bf16.msra.mxu0 0
    %4279 = vmatprep.subr.bf16.mxu0 0
    %4280 = vmatpush1.bf16.msra.mxu0 0
    %4281 = vmatprep.subr.bf16.mxu0 0
    %4282 = vmatpush1.bf16.msra.mxu0 0
    %4283 = vmatprep.subr.bf16.mxu0 0
    %4284 = vmatpush1.bf16.msra.mxu0 0
    %4285 = vmatprep.subr.bf16.mxu0 0
    %4286 = vmatpush1.bf16.msra.mxu0 %v4061
    %4287 = vmatprep.subr.bf16.mxu0 0
    %4288 = vmatpush1.bf16.msra.mxu0 %v4059
    %4289 = vmatprep.subr.bf16.mxu0 0
    %4290 = vmatpush2.bf16.msra.mxu0 0
    %4291 = vmatprep.subr.bf16.mxu0 0
    %4292 = vmatpush2.bf16.msra.mxu0 0
    %4293 = vmatprep.subr.bf16.mxu0 0
    %4294 = vmatpush2.bf16.msra.mxu0 0
    %4295 = vmatprep.subr.bf16.mxu0 0
    %4296 = vmatpush2.bf16.msra.mxu0 0
    %4297 = vmatprep.subr.bf16.mxu0 0
    %4298 = vmatpush2.bf16.msra.mxu0 0
    %4299 = vmatprep.subr.bf16.mxu0 0
    %4300 = vmatpush2.bf16.msra.mxu0 0
    %4301 = vmatprep.subr.bf16.mxu0 0
    %4302 = vmatpush2.bf16.msra.mxu0 0
    %4303 = vmatprep.subr.bf16.mxu0 0
    %4304 = vmatpush2.bf16.msra.mxu0 0
    %4305 = vmatprep.mubr.bf16.mxu0 0
    %4306 = vmatmul.mubr.bf16.gmra.mxu0 %v490
    %v4307 = vpop.f32.mrf.mxu0
    %v4308 = vadd.f32 0.0, %v4307
    %v4309 = vpop.f32.mrf.mxu0
    %v4310 = vpop.f32.mrf.mxu0
    %v4311 = vadd.f32 0.0, %v4310
    %v4312 = vpop.f32.mrf.mxu0
    %4313 = vmatprep.mubr.bf16.mxu0 0
    %4314 = vmatmul.mubr.bf16.gmra.mxu0 %v493
    %v4315 = vpop.f32.mrf.mxu0
    %v4316 = vadd.f32 0.0, %v4315
    %v4317 = vpop.f32.mrf.mxu0
    %v4318 = vpop.f32.mrf.mxu0
    %v4319 = vadd.f32 0.0, %v4318
    %v4320 = vpop.f32.mrf.mxu0
    %4321 = vmatprep.mubr.bf16.mxu0 0
    %4322 = vmatmul.mubr.bf16.gmra.mxu0 %v496
    %v4323 = vpop.f32.mrf.mxu0
    %v4324 = vadd.f32 0.0, %v4323
    %v4325 = vpop.f32.mrf.mxu0
    %v4326 = vpop.f32.mrf.mxu0
    %v4327 = vadd.f32 0.0, %v4326
    %v4328 = vpop.f32.mrf.mxu0
    %4329 = vmatprep.mubr.bf16.mxu0 0
    %4330 = vmatmul.mubr.bf16.gmra.mxu0 %v499
    %v4331 = vpop.f32.mrf.mxu0
    %v4332 = vadd.f32 0.0, %v4331
    %v4333 = vpop.f32.mrf.mxu0
    %v4334 = vpop.f32.mrf.mxu0
    %v4335 = vadd.f32 0.0, %v4334
    %v4336 = vpop.f32.mrf.mxu0
    %4337 = vmatprep.mubr.bf16.mxu0 0
    %4338 = vmatmul.mubr.bf16.gmra.mxu0 %v502
    %v4339 = vpop.f32.mrf.mxu0
    %v4340 = vadd.f32 0.0, %v4339
    %v4341 = vpop.f32.mrf.mxu0
    %v4342 = vpop.f32.mrf.mxu0
    %v4343 = vadd.f32 0.0, %v4342
    %v4344 = vpop.f32.mrf.mxu0
    %4345 = vmatprep.mubr.bf16.mxu0 0
    %4346 = vmatmul.mubr.bf16.gmra.mxu0 %v505
    %v4347 = vpop.f32.mrf.mxu0
    %v4348 = vadd.f32 0.0, %v4347
    %v4349 = vpop.f32.mrf.mxu0
    %v4350 = vpop.f32.mrf.mxu0
    %v4351 = vadd.f32 0.0, %v4350
    %v4352 = vpop.f32.mrf.mxu0
    %4353 = vmatprep.mubr.bf16.mxu0 0
    %4354 = vmatmul.mubr.bf16.gmra.mxu0 %v508
    %v4355 = vpop.f32.mrf.mxu0
    %v4356 = vadd.f32 0.0, %v4355
    %v4357 = vpop.f32.mrf.mxu0
    %v4358 = vpop.f32.mrf.mxu0
    %v4359 = vadd.f32 0.0, %v4358
    %v4360 = vpop.f32.mrf.mxu0
    %4361 = vmatprep.mubr.bf16.mxu0 0
    %4362 = vmatmul.mubr.bf16.gmra.mxu0 %v511
    %v4363 = vpop.f32.mrf.mxu0
    %v4364 = vadd.f32 0.0, %v4363
    %v4365 = vpop.f32.mrf.mxu0
    %v4366 = vpop.f32.mrf.mxu0
    %v4367 = vadd.f32 0.0, %v4366
    %v4368 = vpop.f32.mrf.mxu0
    %4369 = vdwg.mxu0
    %4386 = vrot.lane.b32.xlu0 %v4308, 96
    %v4387 = vpop.permute.xlu0 %4386
    %4388 = vrot.lane.b32.xlu0 %v4311, 96
    %v4389 = vpop.permute.xlu0 %4388
    %4390 = vrot.lane.b32.xlu0 %v4316, 96
    %v4391 = vpop.permute.xlu0 %4390
    %4392 = vrot.lane.b32.xlu0 %v4319, 96
    %v4393 = vpop.permute.xlu0 %4392
    %4394 = vrot.lane.b32.xlu0 %v4324, 96
    %v4395 = vpop.permute.xlu0 %4394
    %4396 = vrot.lane.b32.xlu0 %v4327, 96
    %v4397 = vpop.permute.xlu0 %4396
    %4398 = vrot.lane.b32.xlu0 %v4332, 96
    %v4399 = vpop.permute.xlu0 %4398
    %4400 = vrot.lane.b32.xlu0 %v4335, 96
    %v4401 = vpop.permute.xlu0 %4400
    %4402 = vrot.lane.b32.xlu0 %v4340, 96
    %v4403 = vpop.permute.xlu0 %4402
    %4404 = vrot.lane.b32.xlu0 %v4343, 96
    %v4405 = vpop.permute.xlu0 %4404
    %4406 = vrot.lane.b32.xlu0 %v4348, 96
    %v4407 = vpop.permute.xlu0 %4406
    %4408 = vrot.lane.b32.xlu0 %v4351, 96
    %v4409 = vpop.permute.xlu0 %4408
    %4410 = vrot.lane.b32.xlu0 %v4356, 96
    %v4411 = vpop.permute.xlu0 %4410
    %4412 = vrot.lane.b32.xlu0 %v4359, 96
    %v4413 = vpop.permute.xlu0 %4412
    %4414 = vrot.lane.b32.xlu0 %v4364, 96
    %v4415 = vpop.permute.xlu0 %4414
    %4416 = vrot.lane.b32.xlu0 %v4367, 96
    %v4417 = vpop.permute.xlu0 %4416
    %v4434 = vadd.f32 %v323, %v4387
    %v4435 = vadd.f32 %v326, %v4389
    %v4436 = vadd.f32 %v331, %v4391
    %v4437 = vadd.f32 %v334, %v4393
    %v4438 = vadd.f32 %v339, %v4395
    %v4439 = vadd.f32 %v342, %v4397
    %v4440 = vadd.f32 %v347, %v4399
    %v4441 = vadd.f32 %v350, %v4401
    %v4442 = vadd.f32 %v355, %v4403
    %v4443 = vadd.f32 %v358, %v4405
    %v4444 = vadd.f32 %v363, %v4407
    %v4445 = vadd.f32 %v366, %v4409
    %v4446 = vadd.f32 %v371, %v4411
    %v4447 = vadd.f32 %v374, %v4413
    %v4448 = vadd.f32 %v379, %v4415
    %v4449 = vadd.f32 %v382, %v4417
    %v4450 = vxor.u32 %v4434, 2147483648
    %v4451 = vxor.u32 %v4435, 2147483648
    %v4452 = vxor.u32 %v4436, 2147483648
    %v4453 = vxor.u32 %v4437, 2147483648
    %v4454 = vxor.u32 %v4438, 2147483648
    %v4455 = vxor.u32 %v4439, 2147483648
    %v4456 = vxor.u32 %v4440, 2147483648
    %v4457 = vxor.u32 %v4441, 2147483648
    %v4458 = vmul.f32 %v4450, 1.442695
    %v4459 = vpow.pop %v4458
    %v4460 = vmul.f32 %v4451, 1.442695
    %v4461 = vpow.pop %v4460
    %v4462 = vmul.f32 %v4452, 1.442695
    %v4463 = vpow.pop %v4462
    %v4464 = vmul.f32 %v4453, 1.442695
    %v4465 = vpow.pop %v4464
    %v4466 = vmul.f32 %v4454, 1.442695
    %v4467 = vpow.pop %v4466
    %v4468 = vmul.f32 %v4455, 1.442695
    %v4469 = vpow.pop %v4468
    %v4470 = vmul.f32 %v4456, 1.442695
    %v4471 = vpow.pop %v4470
    %v4472 = vmul.f32 %v4457, 1.442695
    %v4473 = vpow.pop %v4472
    %v4474 = vadd.f32 %v4459, 1.0
    %v4475 = vadd.f32 %v4461, 1.0
    %v4476 = vadd.f32 %v4463, 1.0
    %v4477 = vadd.f32 %v4465, 1.0
    %v4478 = vadd.f32 %v4467, 1.0
    %v4479 = vadd.f32 %v4469, 1.0
    %v4480 = vadd.f32 %v4471, 1.0
    %v4481 = vadd.f32 %v4473, 1.0
    %v4482 = vrcp.pop %v4474
    %v4483 = vmul.f32 1.0, %v4482
    %v4484 = vrcp.pop %v4475
    %v4485 = vmul.f32 1.0, %v4484
    %v4486 = vrcp.pop %v4476
    %v4487 = vmul.f32 1.0, %v4486
    %v4488 = vrcp.pop %v4477
    %v4489 = vmul.f32 1.0, %v4488
    %v4490 = vrcp.pop %v4478
    %v4491 = vmul.f32 1.0, %v4490
    %v4492 = vrcp.pop %v4479
    %v4493 = vmul.f32 1.0, %v4492
    %v4494 = vrcp.pop %v4480
    %v4495 = vmul.f32 1.0, %v4494
    %v4496 = vrcp.pop %v4481
    %v4497 = vmul.f32 1.0, %v4496
    %v4498 = vtanh.pop %v4442
    %v4499 = vtanh.pop %v4443
    %v4500 = vtanh.pop %v4444
    %v4501 = vtanh.pop %v4445
    %v4502 = vxor.u32 %v4446, 2147483648
    %v4503 = vxor.u32 %v4447, 2147483648
    %v4504 = vxor.u32 %v4448, 2147483648
    %v4505 = vxor.u32 %v4449, 2147483648
    %v4506 = vmul.f32 %v4502, 1.442695
    %v4507 = vpow.pop %v4506
    %v4508 = vmul.f32 %v4503, 1.442695
    %v4509 = vpow.pop %v4508
    %v4510 = vmul.f32 %v4504, 1.442695
    %v4511 = vpow.pop %v4510
    %v4512 = vmul.f32 %v4505, 1.442695
    %v4513 = vpow.pop %v4512
    %v4514 = vadd.f32 %v4507, 1.0
    %v4515 = vadd.f32 %v4509, 1.0
    %v4516 = vadd.f32 %v4511, 1.0
    %v4517 = vadd.f32 %v4513, 1.0
    %v4518 = vrcp.pop %v4514
    %v4519 = vmul.f32 1.0, %v4518
    %v4520 = vrcp.pop %v4515
    %v4521 = vmul.f32 1.0, %v4520
    %v4522 = vrcp.pop %v4516
    %v4523 = vmul.f32 1.0, %v4522
    %v4524 = vrcp.pop %v4517
    %v4525 = vmul.f32 1.0, %v4524
    %4530 = vrot.lane.b32.xlu0 %v3943, 16
    %v4531 = vpop.permute.xlu0 %4530
    %4532 = vrot.lane.b32.xlu0 %v3944, 16
    %v4533 = vpop.permute.xlu0 %4532
    %4534 = vrot.lane.b32.xlu0 %v3945, 16
    %v4535 = vpop.permute.xlu0 %4534
    %4536 = vrot.lane.b32.xlu0 %v3946, 16
    %v4537 = vpop.permute.xlu0 %4536
    %v4542 = vmul.f32 %v4491, %v4531
    %v4543 = vmul.f32 %v4493, %v4533
    %v4544 = vmul.f32 %v4495, %v4535
    %v4545 = vmul.f32 %v4497, %v4537
    %v4546 = vmul.f32 %v4483, %v4498
    %v4547 = vmul.f32 %v4485, %v4499
    %v4548 = vmul.f32 %v4487, %v4500
    %v4549 = vmul.f32 %v4489, %v4501
    %v4550 = vadd.f32 %v4542, %v4546
    %v4551 = vadd.f32 %v4543, %v4547
    %v4552 = vadd.f32 %v4544, %v4548
    %v4553 = vadd.f32 %v4545, %v4549
    %v4554 = vtanh.pop %v4550
    %v4555 = vtanh.pop %v4551
    %v4556 = vtanh.pop %v4552
    %v4557 = vtanh.pop %v4553
    %v4558 = vmul.f32 %v4519, %v4554
    %v4559 = vmul.f32 %v4521, %v4555
    %v4560 = vmul.f32 %v4523, %v4556
    %v4561 = vmul.f32 %v4525, %v4557
    %v4562 = vpack.c.bf16 %v4559, %v4558
    %v4563 = vpack.c.bf16 %v4561, %v4560
    %v4564 = vpack.c.bf16 %v4270, %v4269
    %v4565 = vpack.c.bf16 %v4272, %v4271
    %4566 = vmatprep.subr.bf16.mxu0 0
    %4567 = vmatpush1.bf16.msra.mxu0 0
    %4568 = vmatprep.subr.bf16.mxu0 0
    %4569 = vmatpush1.bf16.msra.mxu0 0
    %4570 = vmatprep.subr.bf16.mxu0 0
    %4571 = vmatpush1.bf16.msra.mxu0 0
    %4572 = vmatprep.subr.bf16.mxu0 0
    %4573 = vmatpush1.bf16.msra.mxu0 0
    %4574 = vmatprep.subr.bf16.mxu0 0
    %4575 = vmatpush1.bf16.msra.mxu0 0
    %4576 = vmatprep.subr.bf16.mxu0 0
    %4577 = vmatpush1.bf16.msra.mxu0 0
    %4578 = vmatprep.subr.bf16.mxu0 0
    %4579 = vmatpush1.bf16.msra.mxu0 %v4565
    %4580 = vmatprep.subr.bf16.mxu0 0
    %4581 = vmatpush1.bf16.msra.mxu0 %v4564
    %4582 = vmatprep.subr.bf16.mxu0 0
    %4583 = vmatpush2.bf16.msra.mxu0 0
    %4584 = vmatprep.subr.bf16.mxu0 0
    %4585 = vmatpush2.bf16.msra.mxu0 0
    %4586 = vmatprep.subr.bf16.mxu0 0
    %4587 = vmatpush2.bf16.msra.mxu0 0
    %4588 = vmatprep.subr.bf16.mxu0 0
    %4589 = vmatpush2.bf16.msra.mxu0 0
    %4590 = vmatprep.subr.bf16.mxu0 0
    %4591 = vmatpush2.bf16.msra.mxu0 0
    %4592 = vmatprep.subr.bf16.mxu0 0
    %4593 = vmatpush2.bf16.msra.mxu0 0
    %4594 = vmatprep.subr.bf16.mxu0 0
    %4595 = vmatpush2.bf16.msra.mxu0 0
    %4596 = vmatprep.subr.bf16.mxu0 0
    %4597 = vmatpush2.bf16.msra.mxu0 0
    %4598 = vmatprep.mubr.bf16.mxu0 0
    %4599 = vmatmul.mubr.bf16.gmra.mxu0 %v765
    %v4600 = vpop.f32.mrf.mxu0
    %v4601 = vadd.f32 0.0, %v4600
    %v4602 = vpop.f32.mrf.mxu0
    %v4603 = vpop.f32.mrf.mxu0
    %v4604 = vadd.f32 0.0, %v4603
    %v4605 = vpop.f32.mrf.mxu0
    %4606 = vmatprep.mubr.bf16.mxu0 0
    %4607 = vmatmul.mubr.bf16.gmra.mxu0 %v768
    %v4608 = vpop.f32.mrf.mxu0
    %v4609 = vadd.f32 0.0, %v4608
    %v4610 = vpop.f32.mrf.mxu0
    %v4611 = vpop.f32.mrf.mxu0
    %v4612 = vadd.f32 0.0, %v4611
    %v4613 = vpop.f32.mrf.mxu0
    %4614 = vmatprep.mubr.bf16.mxu0 0
    %4615 = vmatmul.mubr.bf16.gmra.mxu0 %v771
    %v4616 = vpop.f32.mrf.mxu0
    %v4617 = vadd.f32 0.0, %v4616
    %v4618 = vpop.f32.mrf.mxu0
    %v4619 = vpop.f32.mrf.mxu0
    %v4620 = vadd.f32 0.0, %v4619
    %v4621 = vpop.f32.mrf.mxu0
    %4622 = vmatprep.mubr.bf16.mxu0 0
    %4623 = vmatmul.mubr.bf16.gmra.mxu0 %v774
    %v4624 = vpop.f32.mrf.mxu0
    %v4625 = vadd.f32 0.0, %v4624
    %v4626 = vpop.f32.mrf.mxu0
    %v4627 = vpop.f32.mrf.mxu0
    %v4628 = vadd.f32 0.0, %v4627
    %v4629 = vpop.f32.mrf.mxu0
    %4630 = vmatprep.mubr.bf16.mxu0 0
    %4631 = vmatmul.mubr.bf16.gmra.mxu0 %v777
    %v4632 = vpop.f32.mrf.mxu0
    %v4633 = vadd.f32 0.0, %v4632
    %v4634 = vpop.f32.mrf.mxu0
    %v4635 = vpop.f32.mrf.mxu0
    %v4636 = vadd.f32 0.0, %v4635
    %v4637 = vpop.f32.mrf.mxu0
    %4638 = vmatprep.mubr.bf16.mxu0 0
    %4639 = vmatmul.mubr.bf16.gmra.mxu0 %v780
    %v4640 = vpop.f32.mrf.mxu0
    %v4641 = vadd.f32 0.0, %v4640
    %v4642 = vpop.f32.mrf.mxu0
    %v4643 = vpop.f32.mrf.mxu0
    %v4644 = vadd.f32 0.0, %v4643
    %v4645 = vpop.f32.mrf.mxu0
    %4646 = vmatprep.mubr.bf16.mxu0 0
    %4647 = vmatmul.mubr.bf16.gmra.mxu0 %v783
    %v4648 = vpop.f32.mrf.mxu0
    %v4649 = vadd.f32 0.0, %v4648
    %v4650 = vpop.f32.mrf.mxu0
    %v4651 = vpop.f32.mrf.mxu0
    %v4652 = vadd.f32 0.0, %v4651
    %v4653 = vpop.f32.mrf.mxu0
    %4654 = vmatprep.mubr.bf16.mxu0 0
    %4655 = vmatmul.mubr.bf16.gmra.mxu0 %v786
    %v4656 = vpop.f32.mrf.mxu0
    %v4657 = vadd.f32 0.0, %v4656
    %v4658 = vpop.f32.mrf.mxu0
    %v4659 = vpop.f32.mrf.mxu0
    %v4660 = vadd.f32 0.0, %v4659
    %v4661 = vpop.f32.mrf.mxu0
    %4662 = vdwg.mxu0
    %4665 = vrot.lane.b32.xlu0 %v4562, 32
    %v4666 = vpop.permute.xlu0 %4665
    %4667 = vrot.lane.b32.xlu0 %v4563, 32
    %v4668 = vpop.permute.xlu0 %4667
    %4671 = vmatprep.subr.bf16.mxu0 0
    %4672 = vmatpush1.bf16.msra.mxu0 0
    %4673 = vmatprep.subr.bf16.mxu0 0
    %4674 = vmatpush1.bf16.msra.mxu0 0
    %4675 = vmatprep.subr.bf16.mxu0 0
    %4676 = vmatpush1.bf16.msra.mxu0 0
    %4677 = vmatprep.subr.bf16.mxu0 0
    %4678 = vmatpush1.bf16.msra.mxu0 0
    %4679 = vmatprep.subr.bf16.mxu0 0
    %4680 = vmatpush1.bf16.msra.mxu0 0
    %4681 = vmatprep.subr.bf16.mxu0 0
    %4682 = vmatpush1.bf16.msra.mxu0 0
    %4683 = vmatprep.subr.bf16.mxu0 0
    %4684 = vmatpush1.bf16.msra.mxu0 %v4668
    %4685 = vmatprep.subr.bf16.mxu0 0
    %4686 = vmatpush1.bf16.msra.mxu0 %v4666
    %4687 = vmatprep.subr.bf16.mxu0 0
    %4688 = vmatpush2.bf16.msra.mxu0 0
    %4689 = vmatprep.subr.bf16.mxu0 0
    %4690 = vmatpush2.bf16.msra.mxu0 0
    %4691 = vmatprep.subr.bf16.mxu0 0
    %4692 = vmatpush2.bf16.msra.mxu0 0
    %4693 = vmatprep.subr.bf16.mxu0 0
    %4694 = vmatpush2.bf16.msra.mxu0 0
    %4695 = vmatprep.subr.bf16.mxu0 0
    %4696 = vmatpush2.bf16.msra.mxu0 0
    %4697 = vmatprep.subr.bf16.mxu0 0
    %4698 = vmatpush2.bf16.msra.mxu0 0
    %4699 = vmatprep.subr.bf16.mxu0 0
    %4700 = vmatpush2.bf16.msra.mxu0 0
    %4701 = vmatprep.subr.bf16.mxu0 0
    %4702 = vmatpush2.bf16.msra.mxu0 0
    %4703 = vmatprep.mubr.bf16.mxu0 0
    %4704 = vmatmul.mubr.bf16.gmra.mxu0 %v926
    %v4705 = vpop.f32.mrf.mxu0
    %v4706 = vadd.f32 %v4601, %v4705
    %v4707 = vpop.f32.mrf.mxu0
    %v4708 = vpop.f32.mrf.mxu0
    %v4709 = vadd.f32 %v4604, %v4708
    %v4710 = vpop.f32.mrf.mxu0
    %4711 = vmatprep.mubr.bf16.mxu0 0
    %4712 = vmatmul.mubr.bf16.gmra.mxu0 %v929
    %v4713 = vpop.f32.mrf.mxu0
    %v4714 = vadd.f32 %v4609, %v4713
    %v4715 = vpop.f32.mrf.mxu0
    %v4716 = vpop.f32.mrf.mxu0
    %v4717 = vadd.f32 %v4612, %v4716
    %v4718 = vpop.f32.mrf.mxu0
    %4719 = vmatprep.mubr.bf16.mxu0 0
    %4720 = vmatmul.mubr.bf16.gmra.mxu0 %v932
    %v4721 = vpop.f32.mrf.mxu0
    %v4722 = vadd.f32 %v4617, %v4721
    %v4723 = vpop.f32.mrf.mxu0
    %v4724 = vpop.f32.mrf.mxu0
    %v4725 = vadd.f32 %v4620, %v4724
    %v4726 = vpop.f32.mrf.mxu0
    %4727 = vmatprep.mubr.bf16.mxu0 0
    %4728 = vmatmul.mubr.bf16.gmra.mxu0 %v935
    %v4729 = vpop.f32.mrf.mxu0
    %v4730 = vadd.f32 %v4625, %v4729
    %v4731 = vpop.f32.mrf.mxu0
    %v4732 = vpop.f32.mrf.mxu0
    %v4733 = vadd.f32 %v4628, %v4732
    %v4734 = vpop.f32.mrf.mxu0
    %4735 = vmatprep.mubr.bf16.mxu0 0
    %4736 = vmatmul.mubr.bf16.gmra.mxu0 %v938
    %v4737 = vpop.f32.mrf.mxu0
    %v4738 = vadd.f32 %v4633, %v4737
    %v4739 = vpop.f32.mrf.mxu0
    %v4740 = vpop.f32.mrf.mxu0
    %v4741 = vadd.f32 %v4636, %v4740
    %v4742 = vpop.f32.mrf.mxu0
    %4743 = vmatprep.mubr.bf16.mxu0 0
    %4744 = vmatmul.mubr.bf16.gmra.mxu0 %v941
    %v4745 = vpop.f32.mrf.mxu0
    %v4746 = vadd.f32 %v4641, %v4745
    %v4747 = vpop.f32.mrf.mxu0
    %v4748 = vpop.f32.mrf.mxu0
    %v4749 = vadd.f32 %v4644, %v4748
    %v4750 = vpop.f32.mrf.mxu0
    %4751 = vmatprep.mubr.bf16.mxu0 0
    %4752 = vmatmul.mubr.bf16.gmra.mxu0 %v944
    %v4753 = vpop.f32.mrf.mxu0
    %v4754 = vadd.f32 %v4649, %v4753
    %v4755 = vpop.f32.mrf.mxu0
    %v4756 = vpop.f32.mrf.mxu0
    %v4757 = vadd.f32 %v4652, %v4756
    %v4758 = vpop.f32.mrf.mxu0
    %4759 = vmatprep.mubr.bf16.mxu0 0
    %4760 = vmatmul.mubr.bf16.gmra.mxu0 %v947
    %v4761 = vpop.f32.mrf.mxu0
    %v4762 = vadd.f32 %v4657, %v4761
    %v4763 = vpop.f32.mrf.mxu0
    %v4764 = vpop.f32.mrf.mxu0
    %v4765 = vadd.f32 %v4660, %v4764
    %v4766 = vpop.f32.mrf.mxu0
    %4767 = vdwg.mxu0
    %v4768 = vadd.f32 %v4706, %v1049
    %v4769 = vadd.f32 %v4709, %v1054
    %v4770 = vadd.f32 %v4714, %v1059
    %v4771 = vadd.f32 %v4717, %v1064
    %v4772 = vadd.f32 %v4722, %v1069
    %v4773 = vadd.f32 %v4725, %v1074
    %v4774 = vadd.f32 %v4730, %v1079
    %v4775 = vadd.f32 %v4733, %v1084
    %v4776 = vadd.f32 %v4738, %v1089
    %v4777 = vadd.f32 %v4741, %v1094
    %v4778 = vadd.f32 %v4746, %v1099
    %v4779 = vadd.f32 %v4749, %v1104
    %v4780 = vadd.f32 %v4754, %v1109
    %v4781 = vadd.f32 %v4757, %v1114
    %v4782 = vadd.f32 %v4762, %v1119
    %v4783 = vadd.f32 %v4765, %v1124
    %v4784 = vxor.u32 %v4768, 2147483648
    %v4785 = vxor.u32 %v4769, 2147483648
    %v4786 = vxor.u32 %v4770, 2147483648
    %v4787 = vxor.u32 %v4771, 2147483648
    %v4788 = vxor.u32 %v4772, 2147483648
    %v4789 = vxor.u32 %v4773, 2147483648
    %v4790 = vxor.u32 %v4774, 2147483648
    %v4791 = vxor.u32 %v4775, 2147483648
    %v4792 = vmul.f32 %v4784, 1.442695
    %v4793 = vpow.pop %v4792
    %v4794 = vmul.f32 %v4785, 1.442695
    %v4795 = vpow.pop %v4794
    %v4796 = vmul.f32 %v4786, 1.442695
    %v4797 = vpow.pop %v4796
    %v4798 = vmul.f32 %v4787, 1.442695
    %v4799 = vpow.pop %v4798
    %v4800 = vmul.f32 %v4788, 1.442695
    %v4801 = vpow.pop %v4800
    %v4802 = vmul.f32 %v4789, 1.442695
    %v4803 = vpow.pop %v4802
    %v4804 = vmul.f32 %v4790, 1.442695
    %v4805 = vpow.pop %v4804
    %v4806 = vmul.f32 %v4791, 1.442695
    %v4807 = vpow.pop %v4806
    %v4808 = vadd.f32 %v4793, 1.0
    %v4809 = vadd.f32 %v4795, 1.0
    %v4810 = vadd.f32 %v4797, 1.0
    %v4811 = vadd.f32 %v4799, 1.0
    %v4812 = vadd.f32 %v4801, 1.0
    %v4813 = vadd.f32 %v4803, 1.0
    %v4814 = vadd.f32 %v4805, 1.0
    %v4815 = vadd.f32 %v4807, 1.0
    %v4816 = vrcp.pop %v4808
    %v4817 = vmul.f32 1.0, %v4816
    %v4818 = vrcp.pop %v4809
    %v4819 = vmul.f32 1.0, %v4818
    %v4820 = vrcp.pop %v4810
    %v4821 = vmul.f32 1.0, %v4820
    %v4822 = vrcp.pop %v4811
    %v4823 = vmul.f32 1.0, %v4822
    %v4824 = vrcp.pop %v4812
    %v4825 = vmul.f32 1.0, %v4824
    %v4826 = vrcp.pop %v4813
    %v4827 = vmul.f32 1.0, %v4826
    %v4828 = vrcp.pop %v4814
    %v4829 = vmul.f32 1.0, %v4828
    %v4830 = vrcp.pop %v4815
    %v4831 = vmul.f32 1.0, %v4830
    %v4832 = vtanh.pop %v4776
    %v4833 = vtanh.pop %v4777
    %v4834 = vtanh.pop %v4778
    %v4835 = vtanh.pop %v4779
    %v4836 = vxor.u32 %v4780, 2147483648
    %v4837 = vxor.u32 %v4781, 2147483648
    %v4838 = vxor.u32 %v4782, 2147483648
    %v4839 = vxor.u32 %v4783, 2147483648
    %v4840 = vmul.f32 %v4836, 1.442695
    %v4841 = vpow.pop %v4840
    %v4842 = vmul.f32 %v4837, 1.442695
    %v4843 = vpow.pop %v4842
    %v4844 = vmul.f32 %v4838, 1.442695
    %v4845 = vpow.pop %v4844
    %v4846 = vmul.f32 %v4839, 1.442695
    %v4847 = vpow.pop %v4846
    %v4848 = vadd.f32 %v4841, 1.0
    %v4849 = vadd.f32 %v4843, 1.0
    %v4850 = vadd.f32 %v4845, 1.0
    %v4851 = vadd.f32 %v4847, 1.0
    %v4852 = vrcp.pop %v4848
    %v4853 = vmul.f32 1.0, %v4852
    %v4854 = vrcp.pop %v4849
    %v4855 = vmul.f32 1.0, %v4854
    %v4856 = vrcp.pop %v4850
    %v4857 = vmul.f32 1.0, %v4856
    %v4858 = vrcp.pop %v4851
    %v4859 = vmul.f32 1.0, %v4858
    %v4860 = vmul.f32 %v4825, %v4261
    %v4861 = vmul.f32 %v4827, %v4262
    %v4862 = vmul.f32 %v4829, %v4263
    %v4863 = vmul.f32 %v4831, %v4264
    %v4864 = vmul.f32 %v4817, %v4832
    %v4865 = vmul.f32 %v4819, %v4833
    %v4866 = vmul.f32 %v4821, %v4834
    %v4867 = vmul.f32 %v4823, %v4835
    %v4868 = vadd.f32 %v4860, %v4864
    %v4869 = vadd.f32 %v4861, %v4865
    %v4870 = vadd.f32 %v4862, %v4866
    %v4871 = vadd.f32 %v4863, %v4867
    %v4872 = vtanh.pop %v4868
    %v4873 = vtanh.pop %v4869
    %v4874 = vtanh.pop %v4870
    %v4875 = vtanh.pop %v4871
    %v4876 = vmul.f32 %v4853, %v4872
    %v4877 = vmul.f32 %v4855, %v4873
    %v4878 = vmul.f32 %v4857, %v4874
    %v4879 = vmul.f32 %v4859, %v4875
    %4880 = vmatprep.subr.bf16.mxu0 0
    %4881 = vmatpush1.bf16.msra.mxu0 0
    %4882 = vmatprep.subr.bf16.mxu0 0
    %4883 = vmatpush1.bf16.msra.mxu0 0
    %4884 = vmatprep.subr.bf16.mxu0 0
    %4885 = vmatpush1.bf16.msra.mxu0 0
    %4886 = vmatprep.subr.bf16.mxu0 0
    %4887 = vmatpush1.bf16.msra.mxu0 0
    %4888 = vmatprep.subr.bf16.mxu0 0
    %4889 = vmatpush1.bf16.msra.mxu0 0
    %4890 = vmatprep.subr.bf16.mxu0 0
    %4891 = vmatpush1.bf16.msra.mxu0 0
    %4892 = vmatprep.subr.bf16.mxu0 0
    %4893 = vmatpush1.bf16.msra.mxu0 %v4668
    %4894 = vmatprep.subr.bf16.mxu0 0
    %4895 = vmatpush1.bf16.msra.mxu0 %v4666
    %4896 = vmatprep.subr.bf16.mxu0 0
    %4897 = vmatpush2.bf16.msra.mxu0 0
    %4898 = vmatprep.subr.bf16.mxu0 0
    %4899 = vmatpush2.bf16.msra.mxu0 0
    %4900 = vmatprep.subr.bf16.mxu0 0
    %4901 = vmatpush2.bf16.msra.mxu0 0
    %4902 = vmatprep.subr.bf16.mxu0 0
    %4903 = vmatpush2.bf16.msra.mxu0 0
    %4904 = vmatprep.subr.bf16.mxu0 0
    %4905 = vmatpush2.bf16.msra.mxu0 0
    %4906 = vmatprep.subr.bf16.mxu0 0
    %4907 = vmatpush2.bf16.msra.mxu0 0
    %4908 = vmatprep.subr.bf16.mxu0 0
    %4909 = vmatpush2.bf16.msra.mxu0 0
    %4910 = vmatprep.subr.bf16.mxu0 0
    %4911 = vmatpush2.bf16.msra.mxu0 0
    %4912 = vmatprep.mubr.bf16.mxu0 0
    %4913 = vmatmul.mubr.bf16.gmra.mxu0 %v490
    %v4914 = vpop.f32.mrf.mxu0
    %v4915 = vadd.f32 0.0, %v4914
    %v4916 = vpop.f32.mrf.mxu0
    %v4917 = vpop.f32.mrf.mxu0
    %v4918 = vadd.f32 0.0, %v4917
    %v4919 = vpop.f32.mrf.mxu0
    %4920 = vmatprep.mubr.bf16.mxu0 0
    %4921 = vmatmul.mubr.bf16.gmra.mxu0 %v493
    %v4922 = vpop.f32.mrf.mxu0
    %v4923 = vadd.f32 0.0, %v4922
    %v4924 = vpop.f32.mrf.mxu0
    %v4925 = vpop.f32.mrf.mxu0
    %v4926 = vadd.f32 0.0, %v4925
    %v4927 = vpop.f32.mrf.mxu0
    %4928 = vmatprep.mubr.bf16.mxu0 0
    %4929 = vmatmul.mubr.bf16.gmra.mxu0 %v496
    %v4930 = vpop.f32.mrf.mxu0
    %v4931 = vadd.f32 0.0, %v4930
    %v4932 = vpop.f32.mrf.mxu0
    %v4933 = vpop.f32.mrf.mxu0
    %v4934 = vadd.f32 0.0, %v4933
    %v4935 = vpop.f32.mrf.mxu0
    %4936 = vmatprep.mubr.bf16.mxu0 0
    %4937 = vmatmul.mubr.bf16.gmra.mxu0 %v499
    %v4938 = vpop.f32.mrf.mxu0
    %v4939 = vadd.f32 0.0, %v4938
    %v4940 = vpop.f32.mrf.mxu0
    %v4941 = vpop.f32.mrf.mxu0
    %v4942 = vadd.f32 0.0, %v4941
    %v4943 = vpop.f32.mrf.mxu0
    %4944 = vmatprep.mubr.bf16.mxu0 0
    %4945 = vmatmul.mubr.bf16.gmra.mxu0 %v502
    %v4946 = vpop.f32.mrf.mxu0
    %v4947 = vadd.f32 0.0, %v4946
    %v4948 = vpop.f32.mrf.mxu0
    %v4949 = vpop.f32.mrf.mxu0
    %v4950 = vadd.f32 0.0, %v4949
    %v4951 = vpop.f32.mrf.mxu0
    %4952 = vmatprep.mubr.bf16.mxu0 0
    %4953 = vmatmul.mubr.bf16.gmra.mxu0 %v505
    %v4954 = vpop.f32.mrf.mxu0
    %v4955 = vadd.f32 0.0, %v4954
    %v4956 = vpop.f32.mrf.mxu0
    %v4957 = vpop.f32.mrf.mxu0
    %v4958 = vadd.f32 0.0, %v4957
    %v4959 = vpop.f32.mrf.mxu0
    %4960 = vmatprep.mubr.bf16.mxu0 0
    %4961 = vmatmul.mubr.bf16.gmra.mxu0 %v508
    %v4962 = vpop.f32.mrf.mxu0
    %v4963 = vadd.f32 0.0, %v4962
    %v4964 = vpop.f32.mrf.mxu0
    %v4965 = vpop.f32.mrf.mxu0
    %v4966 = vadd.f32 0.0, %v4965
    %v4967 = vpop.f32.mrf.mxu0
    %4968 = vmatprep.mubr.bf16.mxu0 0
    %4969 = vmatmul.mubr.bf16.gmra.mxu0 %v511
    %v4970 = vpop.f32.mrf.mxu0
    %v4971 = vadd.f32 0.0, %v4970
    %v4972 = vpop.f32.mrf.mxu0
    %v4973 = vpop.f32.mrf.mxu0
    %v4974 = vadd.f32 0.0, %v4973
    %v4975 = vpop.f32.mrf.mxu0
    %4976 = vdwg.mxu0
    %4993 = vrot.lane.b32.xlu0 %v4915, 112
    %v4994 = vpop.permute.xlu0 %4993
    %4995 = vrot.lane.b32.xlu0 %v4918, 112
    %v4996 = vpop.permute.xlu0 %4995
    %4997 = vrot.lane.b32.xlu0 %v4923, 112
    %v4998 = vpop.permute.xlu0 %4997
    %4999 = vrot.lane.b32.xlu0 %v4926, 112
    %v5000 = vpop.permute.xlu0 %4999
    %5001 = vrot.lane.b32.xlu0 %v4931, 112
    %v5002 = vpop.permute.xlu0 %5001
    %5003 = vrot.lane.b32.xlu0 %v4934, 112
    %v5004 = vpop.permute.xlu0 %5003
    %5005 = vrot.lane.b32.xlu0 %v4939, 112
    %v5006 = vpop.permute.xlu0 %5005
    %5007 = vrot.lane.b32.xlu0 %v4942, 112
    %v5008 = vpop.permute.xlu0 %5007
    %5009 = vrot.lane.b32.xlu0 %v4947, 112
    %v5010 = vpop.permute.xlu0 %5009
    %5011 = vrot.lane.b32.xlu0 %v4950, 112
    %v5012 = vpop.permute.xlu0 %5011
    %5013 = vrot.lane.b32.xlu0 %v4955, 112
    %v5014 = vpop.permute.xlu0 %5013
    %5015 = vrot.lane.b32.xlu0 %v4958, 112
    %v5016 = vpop.permute.xlu0 %5015
    %5017 = vrot.lane.b32.xlu0 %v4963, 112
    %v5018 = vpop.permute.xlu0 %5017
    %5019 = vrot.lane.b32.xlu0 %v4966, 112
    %v5020 = vpop.permute.xlu0 %5019
    %5021 = vrot.lane.b32.xlu0 %v4971, 112
    %v5022 = vpop.permute.xlu0 %5021
    %5023 = vrot.lane.b32.xlu0 %v4974, 112
    %v5024 = vpop.permute.xlu0 %5023
    %v5041 = vadd.f32 %v323, %v4994
    %v5042 = vadd.f32 %v326, %v4996
    %v5043 = vadd.f32 %v331, %v4998
    %v5044 = vadd.f32 %v334, %v5000
    %v5045 = vadd.f32 %v339, %v5002
    %v5046 = vadd.f32 %v342, %v5004
    %v5047 = vadd.f32 %v347, %v5006
    %v5048 = vadd.f32 %v350, %v5008
    %v5049 = vadd.f32 %v355, %v5010
    %v5050 = vadd.f32 %v358, %v5012
    %v5051 = vadd.f32 %v363, %v5014
    %v5052 = vadd.f32 %v366, %v5016
    %v5053 = vadd.f32 %v371, %v5018
    %v5054 = vadd.f32 %v374, %v5020
    %v5055 = vadd.f32 %v379, %v5022
    %v5056 = vadd.f32 %v382, %v5024
    %v5057 = vxor.u32 %v5041, 2147483648
    %v5058 = vxor.u32 %v5042, 2147483648
    %v5059 = vxor.u32 %v5043, 2147483648
    %v5060 = vxor.u32 %v5044, 2147483648
    %v5061 = vxor.u32 %v5045, 2147483648
    %v5062 = vxor.u32 %v5046, 2147483648
    %v5063 = vxor.u32 %v5047, 2147483648
    %v5064 = vxor.u32 %v5048, 2147483648
    %v5065 = vmul.f32 %v5057, 1.442695
    %v5066 = vpow.pop %v5065
    %v5067 = vmul.f32 %v5058, 1.442695
    %v5068 = vpow.pop %v5067
    %v5069 = vmul.f32 %v5059, 1.442695
    %v5070 = vpow.pop %v5069
    %v5071 = vmul.f32 %v5060, 1.442695
    %v5072 = vpow.pop %v5071
    %v5073 = vmul.f32 %v5061, 1.442695
    %v5074 = vpow.pop %v5073
    %v5075 = vmul.f32 %v5062, 1.442695
    %v5076 = vpow.pop %v5075
    %v5077 = vmul.f32 %v5063, 1.442695
    %v5078 = vpow.pop %v5077
    %v5079 = vmul.f32 %v5064, 1.442695
    %v5080 = vpow.pop %v5079
    %v5081 = vadd.f32 %v5066, 1.0
    %v5082 = vadd.f32 %v5068, 1.0
    %v5083 = vadd.f32 %v5070, 1.0
    %v5084 = vadd.f32 %v5072, 1.0
    %v5085 = vadd.f32 %v5074, 1.0
    %v5086 = vadd.f32 %v5076, 1.0
    %v5087 = vadd.f32 %v5078, 1.0
    %v5088 = vadd.f32 %v5080, 1.0
    %v5089 = vrcp.pop %v5081
    %v5090 = vmul.f32 1.0, %v5089
    %v5091 = vrcp.pop %v5082
    %v5092 = vmul.f32 1.0, %v5091
    %v5093 = vrcp.pop %v5083
    %v5094 = vmul.f32 1.0, %v5093
    %v5095 = vrcp.pop %v5084
    %v5096 = vmul.f32 1.0, %v5095
    %v5097 = vrcp.pop %v5085
    %v5098 = vmul.f32 1.0, %v5097
    %v5099 = vrcp.pop %v5086
    %v5100 = vmul.f32 1.0, %v5099
    %v5101 = vrcp.pop %v5087
    %v5102 = vmul.f32 1.0, %v5101
    %v5103 = vrcp.pop %v5088
    %v5104 = vmul.f32 1.0, %v5103
    %v5105 = vtanh.pop %v5049
    %v5106 = vtanh.pop %v5050
    %v5107 = vtanh.pop %v5051
    %v5108 = vtanh.pop %v5052
    %v5109 = vxor.u32 %v5053, 2147483648
    %v5110 = vxor.u32 %v5054, 2147483648
    %v5111 = vxor.u32 %v5055, 2147483648
    %v5112 = vxor.u32 %v5056, 2147483648
    %v5113 = vmul.f32 %v5109, 1.442695
    %v5114 = vpow.pop %v5113
    %v5115 = vmul.f32 %v5110, 1.442695
    %v5116 = vpow.pop %v5115
    %v5117 = vmul.f32 %v5111, 1.442695
    %v5118 = vpow.pop %v5117
    %v5119 = vmul.f32 %v5112, 1.442695
    %v5120 = vpow.pop %v5119
    %v5121 = vadd.f32 %v5114, 1.0
    %v5122 = vadd.f32 %v5116, 1.0
    %v5123 = vadd.f32 %v5118, 1.0
    %v5124 = vadd.f32 %v5120, 1.0
    %v5125 = vrcp.pop %v5121
    %v5126 = vmul.f32 1.0, %v5125
    %v5127 = vrcp.pop %v5122
    %v5128 = vmul.f32 1.0, %v5127
    %v5129 = vrcp.pop %v5123
    %v5130 = vmul.f32 1.0, %v5129
    %v5131 = vrcp.pop %v5124
    %v5132 = vmul.f32 1.0, %v5131
    %5137 = vrot.lane.b32.xlu0 %v4550, 16
    %v5138 = vpop.permute.xlu0 %5137
    %5139 = vrot.lane.b32.xlu0 %v4551, 16
    %v5140 = vpop.permute.xlu0 %5139
    %5141 = vrot.lane.b32.xlu0 %v4552, 16
    %v5142 = vpop.permute.xlu0 %5141
    %5143 = vrot.lane.b32.xlu0 %v4553, 16
    %v5144 = vpop.permute.xlu0 %5143
    %v5149 = vmul.f32 %v5098, %v5138
    %v5150 = vmul.f32 %v5100, %v5140
    %v5151 = vmul.f32 %v5102, %v5142
    %v5152 = vmul.f32 %v5104, %v5144
    %v5153 = vmul.f32 %v5090, %v5105
    %v5154 = vmul.f32 %v5092, %v5106
    %v5155 = vmul.f32 %v5094, %v5107
    %v5156 = vmul.f32 %v5096, %v5108
    %v5157 = vadd.f32 %v5149, %v5153
    %v5158 = vadd.f32 %v5150, %v5154
    %v5159 = vadd.f32 %v5151, %v5155
    %v5160 = vadd.f32 %v5152, %v5156
    %v5161 = vtanh.pop %v5157
    %v5162 = vtanh.pop %v5158
    %v5163 = vtanh.pop %v5159
    %v5164 = vtanh.pop %v5160
    %v5165 = vmul.f32 %v5126, %v5161
    %v5166 = vmul.f32 %v5128, %v5162
    %v5167 = vmul.f32 %v5130, %v5163
    %v5168 = vmul.f32 %v5132, %v5164
    %v5169 = vpack.c.bf16 %v5166, %v5165
    %v5170 = vpack.c.bf16 %v5168, %v5167
    %v5171 = vpack.c.bf16 %v4877, %v4876
    %v5172 = vpack.c.bf16 %v4879, %v4878
    %5173 = vmatprep.subr.bf16.mxu0 0
    %5174 = vmatpush1.bf16.msra.mxu0 0
    %5175 = vmatprep.subr.bf16.mxu0 0
    %5176 = vmatpush1.bf16.msra.mxu0 0
    %5177 = vmatprep.subr.bf16.mxu0 0
    %5178 = vmatpush1.bf16.msra.mxu0 0
    %5179 = vmatprep.subr.bf16.mxu0 0
    %5180 = vmatpush1.bf16.msra.mxu0 0
    %5181 = vmatprep.subr.bf16.mxu0 0
    %5182 = vmatpush1.bf16.msra.mxu0 0
    %5183 = vmatprep.subr.bf16.mxu0 0
    %5184 = vmatpush1.bf16.msra.mxu0 0
    %5185 = vmatprep.subr.bf16.mxu0 0
    %5186 = vmatpush1.bf16.msra.mxu0 %v5172
    %5187 = vmatprep.subr.bf16.mxu0 0
    %5188 = vmatpush1.bf16.msra.mxu0 %v5171
    %5189 = vmatprep.subr.bf16.mxu0 0
    %5190 = vmatpush2.bf16.msra.mxu0 0
    %5191 = vmatprep.subr.bf16.mxu0 0
    %5192 = vmatpush2.bf16.msra.mxu0 0
    %5193 = vmatprep.subr.bf16.mxu0 0
    %5194 = vmatpush2.bf16.msra.mxu0 0
    %5195 = vmatprep.subr.bf16.mxu0 0
    %5196 = vmatpush2.bf16.msra.mxu0 0
    %5197 = vmatprep.subr.bf16.mxu0 0
    %5198 = vmatpush2.bf16.msra.mxu0 0
    %5199 = vmatprep.subr.bf16.mxu0 0
    %5200 = vmatpush2.bf16.msra.mxu0 0
    %5201 = vmatprep.subr.bf16.mxu0 0
    %5202 = vmatpush2.bf16.msra.mxu0 0
    %5203 = vmatprep.subr.bf16.mxu0 0
    %5204 = vmatpush2.bf16.msra.mxu0 0
    %5205 = vmatprep.mubr.bf16.mxu0 0
    %5206 = vmatmul.mubr.bf16.gmra.mxu0 %v765
    %v5207 = vpop.f32.mrf.mxu0
    %v5208 = vadd.f32 0.0, %v5207
    %v5209 = vpop.f32.mrf.mxu0
    %v5210 = vpop.f32.mrf.mxu0
    %v5211 = vadd.f32 0.0, %v5210
    %v5212 = vpop.f32.mrf.mxu0
    %5213 = vmatprep.mubr.bf16.mxu0 0
    %5214 = vmatmul.mubr.bf16.gmra.mxu0 %v768
    %v5215 = vpop.f32.mrf.mxu0
    %v5216 = vadd.f32 0.0, %v5215
    %v5217 = vpop.f32.mrf.mxu0
    %v5218 = vpop.f32.mrf.mxu0
    %v5219 = vadd.f32 0.0, %v5218
    %v5220 = vpop.f32.mrf.mxu0
    %5221 = vmatprep.mubr.bf16.mxu0 0
    %5222 = vmatmul.mubr.bf16.gmra.mxu0 %v771
    %v5223 = vpop.f32.mrf.mxu0
    %v5224 = vadd.f32 0.0, %v5223
    %v5225 = vpop.f32.mrf.mxu0
    %v5226 = vpop.f32.mrf.mxu0
    %v5227 = vadd.f32 0.0, %v5226
    %v5228 = vpop.f32.mrf.mxu0
    %5229 = vmatprep.mubr.bf16.mxu0 0
    %5230 = vmatmul.mubr.bf16.gmra.mxu0 %v774
    %v5231 = vpop.f32.mrf.mxu0
    %v5232 = vadd.f32 0.0, %v5231
    %v5233 = vpop.f32.mrf.mxu0
    %v5234 = vpop.f32.mrf.mxu0
    %v5235 = vadd.f32 0.0, %v5234
    %v5236 = vpop.f32.mrf.mxu0
    %5237 = vmatprep.mubr.bf16.mxu0 0
    %5238 = vmatmul.mubr.bf16.gmra.mxu0 %v777
    %v5239 = vpop.f32.mrf.mxu0
    %v5240 = vadd.f32 0.0, %v5239
    %v5241 = vpop.f32.mrf.mxu0
    %v5242 = vpop.f32.mrf.mxu0
    %v5243 = vadd.f32 0.0, %v5242
    %v5244 = vpop.f32.mrf.mxu0
    %5245 = vmatprep.mubr.bf16.mxu0 0
    %5246 = vmatmul.mubr.bf16.gmra.mxu0 %v780
    %v5247 = vpop.f32.mrf.mxu0
    %v5248 = vadd.f32 0.0, %v5247
    %v5249 = vpop.f32.mrf.mxu0
    %v5250 = vpop.f32.mrf.mxu0
    %v5251 = vadd.f32 0.0, %v5250
    %v5252 = vpop.f32.mrf.mxu0
    %5253 = vmatprep.mubr.bf16.mxu0 0
    %5254 = vmatmul.mubr.bf16.gmra.mxu0 %v783
    %v5255 = vpop.f32.mrf.mxu0
    %v5256 = vadd.f32 0.0, %v5255
    %v5257 = vpop.f32.mrf.mxu0
    %v5258 = vpop.f32.mrf.mxu0
    %v5259 = vadd.f32 0.0, %v5258
    %v5260 = vpop.f32.mrf.mxu0
    %5261 = vmatprep.mubr.bf16.mxu0 0
    %5262 = vmatmul.mubr.bf16.gmra.mxu0 %v786
    %v5263 = vpop.f32.mrf.mxu0
    %v5264 = vadd.f32 0.0, %v5263
    %v5265 = vpop.f32.mrf.mxu0
    %v5266 = vpop.f32.mrf.mxu0
    %v5267 = vadd.f32 0.0, %v5266
    %v5268 = vpop.f32.mrf.mxu0
    %5269 = vdwg.mxu0
    %5272 = vrot.lane.b32.xlu0 %v5169, 16
    %v5273 = vpop.permute.xlu0 %5272
    %5274 = vrot.lane.b32.xlu0 %v5170, 16
    %v5275 = vpop.permute.xlu0 %5274
    %5278 = vmatprep.subr.bf16.mxu0 0
    %5279 = vmatpush1.bf16.msra.mxu0 0
    %5280 = vmatprep.subr.bf16.mxu0 0
    %5281 = vmatpush1.bf16.msra.mxu0 0
    %5282 = vmatprep.subr.bf16.mxu0 0
    %5283 = vmatpush1.bf16.msra.mxu0 0
    %5284 = vmatprep.subr.bf16.mxu0 0
    %5285 = vmatpush1.bf16.msra.mxu0 0
    %5286 = vmatprep.subr.bf16.mxu0 0
    %5287 = vmatpush1.bf16.msra.mxu0 0
    %5288 = vmatprep.subr.bf16.mxu0 0
    %5289 = vmatpush1.bf16.msra.mxu0 0
    %5290 = vmatprep.subr.bf16.mxu0 0
    %5291 = vmatpush1.bf16.msra.mxu0 %v5275
    %5292 = vmatprep.subr.bf16.mxu0 0
    %5293 = vmatpush1.bf16.msra.mxu0 %v5273
    %5294 = vmatprep.subr.bf16.mxu0 0
    %5295 = vmatpush2.bf16.msra.mxu0 0
    %5296 = vmatprep.subr.bf16.mxu0 0
    %5297 = vmatpush2.bf16.msra.mxu0 0
    %5298 = vmatprep.subr.bf16.mxu0 0
    %5299 = vmatpush2.bf16.msra.mxu0 0
    %5300 = vmatprep.subr.bf16.mxu0 0
    %5301 = vmatpush2.bf16.msra.mxu0 0
    %5302 = vmatprep.subr.bf16.mxu0 0
    %5303 = vmatpush2.bf16.msra.mxu0 0
    %5304 = vmatprep.subr.bf16.mxu0 0
    %5305 = vmatpush2.bf16.msra.mxu0 0
    %5306 = vmatprep.subr.bf16.mxu0 0
    %5307 = vmatpush2.bf16.msra.mxu0 0
    %5308 = vmatprep.subr.bf16.mxu0 0
    %5309 = vmatpush2.bf16.msra.mxu0 0
    %5310 = vmatprep.mubr.bf16.mxu0 0
    %5311 = vmatmul.mubr.bf16.gmra.mxu0 %v926
    %v5312 = vpop.f32.mrf.mxu0
    %v5313 = vadd.f32 %v5208, %v5312
    %v5314 = vpop.f32.mrf.mxu0
    %v5315 = vpop.f32.mrf.mxu0
    %v5316 = vadd.f32 %v5211, %v5315
    %v5317 = vpop.f32.mrf.mxu0
    %5318 = vmatprep.mubr.bf16.mxu0 0
    %5319 = vmatmul.mubr.bf16.gmra.mxu0 %v929
    %v5320 = vpop.f32.mrf.mxu0
    %v5321 = vadd.f32 %v5216, %v5320
    %v5322 = vpop.f32.mrf.mxu0
    %v5323 = vpop.f32.mrf.mxu0
    %v5324 = vadd.f32 %v5219, %v5323
    %v5325 = vpop.f32.mrf.mxu0
    %5326 = vmatprep.mubr.bf16.mxu0 0
    %5327 = vmatmul.mubr.bf16.gmra.mxu0 %v932
    %v5328 = vpop.f32.mrf.mxu0
    %v5329 = vadd.f32 %v5224, %v5328
    %v5330 = vpop.f32.mrf.mxu0
    %v5331 = vpop.f32.mrf.mxu0
    %v5332 = vadd.f32 %v5227, %v5331
    %v5333 = vpop.f32.mrf.mxu0
    %5334 = vmatprep.mubr.bf16.mxu0 0
    %5335 = vmatmul.mubr.bf16.gmra.mxu0 %v935
    %v5336 = vpop.f32.mrf.mxu0
    %v5337 = vadd.f32 %v5232, %v5336
    %v5338 = vpop.f32.mrf.mxu0
    %v5339 = vpop.f32.mrf.mxu0
    %v5340 = vadd.f32 %v5235, %v5339
    %v5341 = vpop.f32.mrf.mxu0
    %5342 = vmatprep.mubr.bf16.mxu0 0
    %5343 = vmatmul.mubr.bf16.gmra.mxu0 %v938
    %v5344 = vpop.f32.mrf.mxu0
    %v5345 = vadd.f32 %v5240, %v5344
    %v5346 = vpop.f32.mrf.mxu0
    %v5347 = vpop.f32.mrf.mxu0
    %v5348 = vadd.f32 %v5243, %v5347
    %v5349 = vpop.f32.mrf.mxu0
    %5350 = vmatprep.mubr.bf16.mxu0 0
    %5351 = vmatmul.mubr.bf16.gmra.mxu0 %v941
    %v5352 = vpop.f32.mrf.mxu0
    %v5353 = vadd.f32 %v5248, %v5352
    %v5354 = vpop.f32.mrf.mxu0
    %v5355 = vpop.f32.mrf.mxu0
    %v5356 = vadd.f32 %v5251, %v5355
    %v5357 = vpop.f32.mrf.mxu0
    %5358 = vmatprep.mubr.bf16.mxu0 0
    %5359 = vmatmul.mubr.bf16.gmra.mxu0 %v944
    %v5360 = vpop.f32.mrf.mxu0
    %v5361 = vadd.f32 %v5256, %v5360
    %v5362 = vpop.f32.mrf.mxu0
    %v5363 = vpop.f32.mrf.mxu0
    %v5364 = vadd.f32 %v5259, %v5363
    %v5365 = vpop.f32.mrf.mxu0
    %5366 = vmatprep.mubr.bf16.mxu0 0
    %5367 = vmatmul.mubr.bf16.gmra.mxu0 %v947
    %v5368 = vpop.f32.mrf.mxu0
    %v5369 = vadd.f32 %v5264, %v5368
    %v5370 = vpop.f32.mrf.mxu0
    %v5371 = vpop.f32.mrf.mxu0
    %v5372 = vadd.f32 %v5267, %v5371
    %v5373 = vpop.f32.mrf.mxu0
    %5374 = vdwg.mxu0
    %v5375 = vadd.f32 %v5313, %v1049
    %v5376 = vadd.f32 %v5316, %v1054
    %v5377 = vadd.f32 %v5321, %v1059
    %v5378 = vadd.f32 %v5324, %v1064
    %v5379 = vadd.f32 %v5329, %v1069
    %v5380 = vadd.f32 %v5332, %v1074
    %v5381 = vadd.f32 %v5337, %v1079
    %v5382 = vadd.f32 %v5340, %v1084
    %v5383 = vadd.f32 %v5345, %v1089
    %v5384 = vadd.f32 %v5348, %v1094
    %v5385 = vadd.f32 %v5353, %v1099
    %v5386 = vadd.f32 %v5356, %v1104
    %v5387 = vadd.f32 %v5361, %v1109
    %v5388 = vadd.f32 %v5364, %v1114
    %v5389 = vadd.f32 %v5369, %v1119
    %v5390 = vadd.f32 %v5372, %v1124
    %v5391 = vxor.u32 %v5375, 2147483648
    %v5392 = vxor.u32 %v5376, 2147483648
    %v5393 = vxor.u32 %v5377, 2147483648
    %v5394 = vxor.u32 %v5378, 2147483648
    %v5395 = vxor.u32 %v5379, 2147483648
    %v5396 = vxor.u32 %v5380, 2147483648
    %v5397 = vxor.u32 %v5381, 2147483648
    %v5398 = vxor.u32 %v5382, 2147483648
    %v5399 = vmul.f32 %v5391, 1.442695
    %v5400 = vpow.pop %v5399
    %v5401 = vmul.f32 %v5392, 1.442695
    %v5402 = vpow.pop %v5401
    %v5403 = vmul.f32 %v5393, 1.442695
    %v5404 = vpow.pop %v5403
    %v5405 = vmul.f32 %v5394, 1.442695
    %v5406 = vpow.pop %v5405
    %v5407 = vmul.f32 %v5395, 1.442695
    %v5408 = vpow.pop %v5407
    %v5409 = vmul.f32 %v5396, 1.442695
    %v5410 = vpow.pop %v5409
    %v5411 = vmul.f32 %v5397, 1.442695
    %v5412 = vpow.pop %v5411
    %v5413 = vmul.f32 %v5398, 1.442695
    %v5414 = vpow.pop %v5413
    %v5415 = vadd.f32 %v5400, 1.0
    %v5416 = vadd.f32 %v5402, 1.0
    %v5417 = vadd.f32 %v5404, 1.0
    %v5418 = vadd.f32 %v5406, 1.0
    %v5419 = vadd.f32 %v5408, 1.0
    %v5420 = vadd.f32 %v5410, 1.0
    %v5421 = vadd.f32 %v5412, 1.0
    %v5422 = vadd.f32 %v5414, 1.0
    %v5423 = vrcp.pop %v5415
    %v5424 = vmul.f32 1.0, %v5423
    %v5425 = vrcp.pop %v5416
    %v5426 = vmul.f32 1.0, %v5425
    %v5427 = vrcp.pop %v5417
    %v5428 = vmul.f32 1.0, %v5427
    %v5429 = vrcp.pop %v5418
    %v5430 = vmul.f32 1.0, %v5429
    %v5431 = vrcp.pop %v5419
    %v5432 = vmul.f32 1.0, %v5431
    %v5433 = vrcp.pop %v5420
    %v5434 = vmul.f32 1.0, %v5433
    %v5435 = vrcp.pop %v5421
    %v5436 = vmul.f32 1.0, %v5435
    %v5437 = vrcp.pop %v5422
    %v5438 = vmul.f32 1.0, %v5437
    %v5439 = vtanh.pop %v5383
    %v5440 = vtanh.pop %v5384
    %v5441 = vtanh.pop %v5385
    %v5442 = vtanh.pop %v5386
    %v5443 = vxor.u32 %v5387, 2147483648
    %v5444 = vxor.u32 %v5388, 2147483648
    %v5445 = vxor.u32 %v5389, 2147483648
    %v5446 = vxor.u32 %v5390, 2147483648
    %v5447 = vmul.f32 %v5443, 1.442695
    %v5448 = vpow.pop %v5447
    %v5449 = vmul.f32 %v5444, 1.442695
    %v5450 = vpow.pop %v5449
    %v5451 = vmul.f32 %v5445, 1.442695
    %v5452 = vpow.pop %v5451
    %v5453 = vmul.f32 %v5446, 1.442695
    %v5454 = vpow.pop %v5453
    %v5455 = vadd.f32 %v5448, 1.0
    %v5456 = vadd.f32 %v5450, 1.0
    %v5457 = vadd.f32 %v5452, 1.0
    %v5458 = vadd.f32 %v5454, 1.0
    %v5459 = vrcp.pop %v5455
    %v5460 = vmul.f32 1.0, %v5459
    %v5461 = vrcp.pop %v5456
    %v5462 = vmul.f32 1.0, %v5461
    %v5463 = vrcp.pop %v5457
    %v5464 = vmul.f32 1.0, %v5463
    %v5465 = vrcp.pop %v5458
    %v5466 = vmul.f32 1.0, %v5465
    %v5467 = vmul.f32 %v5432, %v4868
    %v5468 = vmul.f32 %v5434, %v4869
    %v5469 = vmul.f32 %v5436, %v4870
    %v5470 = vmul.f32 %v5438, %v4871
    %v5471 = vmul.f32 %v5424, %v5439
    %v5472 = vmul.f32 %v5426, %v5440
    %v5473 = vmul.f32 %v5428, %v5441
    %v5474 = vmul.f32 %v5430, %v5442
    %v5475 = vadd.f32 %v5467, %v5471
    %v5476 = vadd.f32 %v5468, %v5472
    %v5477 = vadd.f32 %v5469, %v5473
    %v5478 = vadd.f32 %v5470, %v5474
    %v5479 = vtanh.pop %v5475
    %v5480 = vtanh.pop %v5476
    %v5481 = vtanh.pop %v5477
    %v5482 = vtanh.pop %v5478
    %v5483 = vmul.f32 %v5460, %v5479
    %v5484 = vmul.f32 %v5462, %v5480
    %v5485 = vmul.f32 %v5464, %v5481
    %v5486 = vmul.f32 %v5466, %v5482
    %5491 = vrot.lane.b32.xlu0 %v5483, 112
    %v5492 = vpop.permute.xlu0 %5491
    %5493 = vrot.lane.b32.xlu0 %v5484, 112
    %v5494 = vpop.permute.xlu0 %5493
    %5495 = vrot.lane.b32.xlu0 %v5485, 112
    %v5496 = vpop.permute.xlu0 %5495
    %5497 = vrot.lane.b32.xlu0 %v5486, 112
    %v5498 = vpop.permute.xlu0 %5497
    %v5503 = vld [vmem:[%s9] sm:$0xff]
    %v5504 = vld [vmem:[%s9 + $0x8] sm:$0xff]
    %v5505 = vld [vmem:[%s9 + $0x10] sm:$0xff]
    %v5506 = vld [vmem:[%s9 + $0x18] sm:$0xff]
    %v5507 = vld [vmem:[%s9 + $0x20] sm:$0xff]
    %v5508 = vld [vmem:[%s9 + $0x28] sm:$0xff]
    %v5509 = vld [vmem:[%s9 + $0x30] sm:$0xff]
    %v5510 = vld [vmem:[%s9 + $0x38] sm:$0xff]
    %5512 = vset.pattern.permute.xlu0 0
    %5513 = vperm.xlu0 %5512, %v5503
    %v5514 = vpop.permute.xlu0 %5513
    %5517 = vset.pattern.permute.xlu0 0
    %5518 = vperm.xlu0 %5517, %v5504
    %v5519 = vpop.permute.xlu0 %5518
    %5522 = vset.pattern.permute.xlu0 0
    %5523 = vperm.xlu0 %5522, %v5505
    %v5524 = vpop.permute.xlu0 %5523
    %5527 = vset.pattern.permute.xlu0 0
    %5528 = vperm.xlu0 %5527, %v5506
    %v5529 = vpop.permute.xlu0 %5528
    %5532 = vset.pattern.permute.xlu0 0
    %5533 = vperm.xlu0 %5532, %v5507
    %v5534 = vpop.permute.xlu0 %5533
    %5537 = vset.pattern.permute.xlu0 0
    %5538 = vperm.xlu0 %5537, %v5508
    %v5539 = vpop.permute.xlu0 %5538
    %5542 = vset.pattern.permute.xlu0 0
    %5543 = vperm.xlu0 %5542, %v5509
    %v5544 = vpop.permute.xlu0 %5543
    %5547 = vset.pattern.permute.xlu0 0
    %5548 = vperm.xlu0 %5547, %v5510
    %v5549 = vpop.permute.xlu0 %5548
    %v5551 = vmul.f32 %v5165, %v5514
    %v5552 = vmul.f32 %v5166, %v5519
    %v5553 = vmul.f32 %v5167, %v5524
    %v5554 = vmul.f32 %v5168, %v5529
    %v5555 = vmul.f32 %v5492, %v5534
    %v5556 = vmul.f32 %v5494, %v5539
    %v5557 = vmul.f32 %v5496, %v5544
    %v5558 = vmul.f32 %v5498, %v5549
    %vm5559 = vcmask 1048448
    %v5560 = vsel %vm5559, %v5551, 0.0
    %v5561 = vsel %vm5559, %v5552, 0.0
    %v5562 = vadd.f32 %v5560, %v5561
    %v5563 = vsel %vm5559, %v5553, 0.0
    %v5564 = vadd.f32 %v5562, %v5563
    %v5565 = vsel %vm5559, %v5554, 0.0
    %v5566 = vadd.f32 %v5564, %v5565
    %v5567 = vsel %vm5559, %v5555, 0.0
    %v5568 = vadd.f32 %v5566, %v5567
    %v5569 = vsel %vm5559, %v5556, 0.0
    %v5570 = vadd.f32 %v5568, %v5569
    %v5571 = vsel %vm5559, %v5557, 0.0
    %v5572 = vadd.f32 %v5570, %v5571
    %v5573 = vsel %vm5559, %v5558, 0.0
    %v5574 = vadd.f32 %v5572, %v5573
    %v5575 = vrot.slane %v5574, 4
    %v5576 = vadd.f32 %v5574, %v5575
    %v5577 = vrot.slane %v5576, 2
    %v5578 = vadd.f32 %v5576, %v5577
    %v5579 = vrot.slane %v5578, 1
    %v5580 = vadd.f32 %v5578, %v5579
    %v5581 = vld [vmem:[#allocation2] sm:$0x1]
    %5583 = vset.pattern.permute.xlu0 0
    %5584 = vperm.xlu0 %5583, %v5581
    %v5585 = vpop.permute.xlu0 %5584
    %v5587 = vlaneseq
    %v5588 = vshrl.u32 %v5587, 7
    %v5589 = vsub.s32 0, %v5588
    %v5590 = vrot.slane %v5585, %v5589
    %v5591 = vadd.f32 %v5580, %v5590
    %5593 = vrot.lane.b32.xlu0 %v5591, 16
    %v5594 = vpop.permute.xlu0 %5593
    %vm5596 = vcmask 122880
    %5597 = vst.msk [vmem:[#allocation3] sm:$0x1] %vm5596, %v5594
    // Predicated region
    $region46: #{_lstm_forward_impl.1} parent=1 // pred_check
      _
    $region47: #{_lstm_forward_impl.1} parent=1 // pred_check_branch
      %5599 = sbr.rel (0) target = $region49
    $region48: #{_lstm_forward_impl.1} parent=1 // pred_region
      %s5601 = ssub.s32 16, 16
      %5602 = vsyncadd [#allocation4], %s5601
      %s5604 = sshll.u32 [#allocation3], 4
      %s5605 = int_to_ptr.vmem [resolvable:$true] %s5604
      %5607 = dma.vmem_to_hbm [thread:$0]  %s5605, 16, %s11, [#allocation4]
    $region49: #{_lstm_forward_impl.1} parent=1 // pred_fallthru
      _
    // Predicated region
    $region50: #{_lstm_forward_impl.1} parent=1 // pred_check
      _
    $region51: #{_lstm_forward_impl.1} parent=1 // pred_check_branch
      %5609 = sbr.rel (0) target = $region53
    $region52: #{_lstm_forward_impl.1} parent=1 // pred_region
      %5610 = dma.done [#allocation4], 16
    $region53: #{_lstm_forward_impl.1} parent=1 // pred_fallthru
      _
    %5611 = vsyncpa [#allocation4], 1

</llo_original>
